<compile_context>
chip_gen: v7x
topology: tpu7x:2x2x1
jax: 0.10.0
libtpu: 0.0.40
codegen_flags: <defaults>
</compile_context>

<pallas_src>
import functools

import jax
import jax.numpy as jnp
from jax.experimental import pallas as pl
from jax.experimental.pallas import tpu as pltpu

LEAKY_SLOPE = 0.2
BN_EPS = 1e-5


def _round_up(a, b):
    return -(-a // b) * b


def _m_tiles(m):
    """Row tile size (multiple of 16, <=512) and padded row count."""
    if m <= 512:
        tm = _round_up(m, 16)
    else:
        tm = 256
    return tm, _round_up(m, tm)


# ----------------------------------------------------------------------------
# Pallas kernels
# ----------------------------------------------------------------------------
def _conv_gemm_kernel(x_ref, w_ref, *rest, apply_leaky, compute_stats,
                      has_bias, m_valid, tm):
    """y = x @ w [+ b] (bf16 in, f32 accumulate) [+ LeakyReLU] [+ BN stats]."""
    idx = 0
    if has_bias:
        b_ref = rest[idx]
        idx += 1
    y_ref = rest[idx]
    idx += 1
    stat_refs = rest[idx:]

    acc = jnp.dot(x_ref[...], w_ref[...], preferred_element_type=jnp.float32)
    if has_bias:
        acc = acc + b_ref[...]                  # (1, 128) broadcast over rows
    if apply_leaky:
        acc = jnp.where(acc > 0, acc, LEAKY_SLOPE * acc)
    y_ref[...] = acc.astype(y_ref.dtype)

    if compute_stats:
        sum_ref, ssq_ref = stat_refs
        i = pl.program_id(1)                    # M-tile index (inner axis)

        @pl.when(i == 0)
        def _():
            sum_ref[...] = jnp.zeros_like(sum_ref)
            ssq_ref[...] = jnp.zeros_like(ssq_ref)

        # Mask zero-padded rows so they do not contaminate the batch stats.
        rows = jax.lax.broadcasted_iota(jnp.int32, acc.shape, 0) + i * tm
        masked = jnp.where(rows < m_valid, acc, 0.0)
        sum_ref[...] += jnp.sum(masked, axis=0, keepdims=True)
        ssq_ref[...] += jnp.sum(masked * masked, axis=0, keepdims=True)


def _conv_bn_leaky_kernel(x_ref, w_ref, g_ref, bt_ref, y_ref, *, m_valid):
    """Fully fused Conv GEMM + training-mode BatchNorm + LeakyReLU(0.2).

    Valid only when all GEMM rows live in this single M tile (statistics are
    a local sublane reduction; per-channel rsqrt runs on the EUP).
    """
    acc = jnp.dot(x_ref[...], w_ref[...], preferred_element_type=jnp.float32)
    rows = jax.lax.broadcasted_iota(jnp.int32, acc.shape, 0)
    masked = jnp.where(rows < m_valid, acc, 0.0)
    inv_m = 1.0 / m_valid
    mean = jnp.sum(masked, axis=0, keepdims=True) * inv_m
    var = jnp.maximum(
        jnp.sum(masked * masked, axis=0, keepdims=True) * inv_m - mean * mean,
        0.0)                                     # biased variance, clamped
    inv = jax.lax.rsqrt(var + BN_EPS)
    scale = g_ref[...] * inv
    shift = bt_ref[...] - mean * scale
    z = acc * scale + shift
    y_ref[...] = jnp.where(z > 0, z, LEAKY_SLOPE * z).astype(y_ref.dtype)


def _affine_leaky_kernel(y_ref, scale_ref, shift_ref, o_ref):
    """o = LeakyReLU(y * scale + shift) — BN apply, per-channel affine."""
    y = y_ref[...] * scale_ref[...] + shift_ref[...]
    o_ref[...] = jnp.where(y > 0, y, LEAKY_SLOPE * y).astype(o_ref.dtype)


def _linear_kernel(x_ref, w_ref, b_ref, o_ref):
    """Row-wise dot with a single weight row: VPU multiply + lane reduction."""
    x = x_ref[...].astype(jnp.float32)
    prod = x * w_ref[...]                        # (tm, K) * (1, K)
    o_ref[...] = (jnp.sum(prod, axis=1, keepdims=True)
                  + b_ref[...]).astype(o_ref.dtype)


# ----------------------------------------------------------------------------
# Pallas wrappers
# ----------------------------------------------------------------------------
def _pad_gemm_operands(patches, w, c_pad, m_pad):
    M = patches.shape[0]
    C_out = w.shape[1]
    x = patches.astype(jnp.bfloat16)
    if m_pad != M:
        x = jnp.pad(x, ((0, m_pad - M), (0, 0)))
    wb = w.astype(jnp.bfloat16)
    if c_pad != C_out:
        wb = jnp.pad(wb, ((0, 0), (0, c_pad - C_out)))
    return x, wb


def _conv_gemm(patches, w, b, *, apply_leaky, compute_stats, out_dtype):
    """Tiled GEMM on the MXU; bf16 operands, f32 accumulation, fused epilogue.

    Returns (y_padded, sum, ssq) where y_padded is (M_pad, C_pad) and the
    stats (if requested) are (1, C_pad) f32 sums over the valid rows.
    """
    M, K = patches.shape
    _, C_out = w.shape
    C_pad = _round_up(C_out, 128)
    tm, M_pad = _m_tiles(M)
    grid = (C_pad // 128, M_pad // tm)          # (N blocks [parallel], M tiles)

    x, wb = _pad_gemm_operands(patches, w, C_pad, M_pad)

    has_bias = b is not None
    operands = [x, wb]
    in_specs = [
        pl.BlockSpec((tm, K), lambda j, i: (i, 0)),
        pl.BlockSpec((K, 128), lambda j, i: (0, j)),
    ]
    if has_bias:
        bb = jnp.pad(b.astype(jnp.float32), (0, C_pad - C_out)).reshape(1, C_pad)
        operands.append(bb)
        in_specs.append(pl.BlockSpec((1, 128), lambda j, i: (0, j)))

    kern = functools.partial(_conv_gemm_kernel, apply_leaky=apply_leaky,
                             compute_stats=compute_stats, has_bias=has_bias,
                             m_valid=M, tm=tm)

    y_shape = jax.ShapeDtypeStruct((M_pad, C_pad), out_dtype)
    y_spec = pl.BlockSpec((tm, 128), lambda j, i: (i, j))

    if compute_stats:
        out_shape = (y_shape,
                     jax.ShapeDtypeStruct((1, C_pad), jnp.float32),
                     jax.ShapeDtypeStruct((1, C_pad), jnp.float32))
        out_specs = (y_spec,
                     pl.BlockSpec((1, 128), lambda j, i: (0, j)),
                     pl.BlockSpec((1, 128), lambda j, i: (0, j)))
        y, s, ss = pl.pallas_call(
            kern, out_shape=out_shape, grid=grid,
            in_specs=in_specs, out_specs=out_specs,
            compiler_params=pltpu.CompilerParams(
                dimension_semantics=("parallel", "arbitrary")),
        )(*operands)
        return y, s, ss

    y = pl.pallas_call(
        kern, out_shape=y_shape, grid=grid,
        in_specs=in_specs, out_specs=y_spec,
        compiler_params=pltpu.CompilerParams(
            dimension_semantics=("parallel", "parallel")),
    )(*operands)
    return y, None, None


def _conv_bn_leaky_fused(patches, w, gamma, beta):
    """Single-pass Conv GEMM + BN + LeakyReLU (all rows in one M tile)."""
    M, K = patches.shape
    _, C_out = w.shape
    C_pad = _round_up(C_out, 128)
    tm, M_pad = _m_tiles(M)
    assert M_pad == tm, "fused path requires a single M tile"

    x, wb = _pad_gemm_operands(patches, w, C_pad, M_pad)
    g = jnp.pad(gamma.astype(jnp.float32), (0, C_pad - C_out)).reshape(1, C_pad)
    bt = jnp.pad(beta.astype(jnp.float32), (0, C_pad - C_out)).reshape(1, C_pad)

    kern = functools.partial(_conv_bn_leaky_kernel, m_valid=M)
    return pl.pallas_call(
        kern,
        out_shape=jax.ShapeDtypeStruct((M_pad, C_pad), jnp.bfloat16),
        grid=(C_pad // 128,),
        in_specs=[
            pl.BlockSpec((tm, K), lambda j: (0, 0)),
            pl.BlockSpec((K, 128), lambda j: (0, j)),
            pl.BlockSpec((1, 128), lambda j: (0, j)),
            pl.BlockSpec((1, 128), lambda j: (0, j)),
        ],
        out_specs=pl.BlockSpec((tm, 128), lambda j: (0, j)),
        compiler_params=pltpu.CompilerParams(
            dimension_semantics=("parallel",)),
    )(x, wb, g, bt)


def _affine_leaky(y, scale, shift):
    """Per-channel affine + LeakyReLU, tiled ('parallel') over rows."""
    M_pad, C = y.shape
    tm, _ = _m_tiles(M_pad)
    return pl.pallas_call(
        _affine_leaky_kernel,
        out_shape=jax.ShapeDtypeStruct((M_pad, C), jnp.bfloat16),
        grid=(M_pad // tm,),
        in_specs=[
            pl.BlockSpec((tm, C), lambda i: (i, 0)),
            pl.BlockSpec((1, C), lambda i: (0, 0)),
            pl.BlockSpec((1, C), lambda i: (0, 0)),
        ],
        out_specs=pl.BlockSpec((tm, C), lambda i: (i, 0)),
        compiler_params=pltpu.CompilerParams(
            dimension_semantics=("parallel",)),
    )(y, scale, shift)


def _linear(flat, wl_row, bl):
    """Final Linear (out_features=1) via VPU multiply + lane reduction."""
    M, K = flat.shape
    tm = _round_up(M, 8) if M <= 512 else 256
    M_pad = _round_up(M, tm)
    x = flat
    if M_pad != M:
        x = jnp.pad(x, ((0, M_pad - M), (0, 0)))
    w = wl_row.astype(jnp.float32).reshape(1, K)
    b = bl.astype(jnp.float32).reshape(1, 1)
    out = pl.pallas_call(
        _linear_kernel,
        out_shape=jax.ShapeDtypeStruct((M_pad, 1), jnp.float32),
        grid=(M_pad // tm,),
        in_specs=[
            pl.BlockSpec((tm, K), lambda i: (i, 0)),
            pl.BlockSpec((1, K), lambda i: (0, 0)),
            pl.BlockSpec((1, 1), lambda i: (0, 0)),
        ],
        out_specs=pl.BlockSpec((tm, 1), lambda i: (i, 0)),
        compiler_params=pltpu.CompilerParams(
            dimension_semantics=("parallel",)),
    )(x, w, b)
    return out[:M]


# ----------------------------------------------------------------------------
# Layout glue (trace-time weight reorders + NHWC im2col)
# ----------------------------------------------------------------------------
def _reorder_conv_weight(w):
    """torch (C_out, C_in, kH, kW) -> (kH*kW*C_in, C_out), matching NHWC patches."""
    c_out, c_in, kh, kw = w.shape
    return jnp.transpose(w, (2, 3, 1, 0)).reshape(kh * kw * c_in, c_out)


# TODO(synk): the im2col patch matrix is still materialized in HBM (16x read
# amplification); fusing the gather into the GEMM needs a manual DMA gather
# (memory_space=pl.ANY) and is left for a follow-up.
def im2col_nhwc(x, k=4, stride=2, pad=1):
    """NHWC im2col; row feature order is (kh, kw, c)."""
    N, H, W, C = x.shape
    Ho = (H + 2 * pad - k) // stride + 1
    Wo = (W + 2 * pad - k) // stride + 1
    xp = jnp.pad(x, ((0, 0), (pad, pad), (pad, pad), (0, 0)))
    cols = []
    for kh in range(k):
        for kw in range(k):
            cols.append(
                xp[:, kh:kh + stride * Ho:stride, kw:kw + stride * Wo:stride, :])
    patches = jnp.stack(cols, axis=3)            # (N, Ho, Wo, k*k, C)
    patches = patches.reshape(N * Ho * Wo, k * k * C)
    return patches, Ho, Wo


def conv_leaky_block(x_nhwc, w, b):
    """Conv(k=4,s=2,p=1) + LeakyReLU(0.2), NHWC in / NHWC out (bf16)."""
    N = x_nhwc.shape[0]
    c_out = w.shape[0]
    patches, Ho, Wo = im2col_nhwc(x_nhwc)
    M = patches.shape[0]
    y, _, _ = _conv_gemm(patches, _reorder_conv_weight(w), b,
                         apply_leaky=True, compute_stats=False,
                         out_dtype=jnp.bfloat16)
    return y[:M, :c_out].reshape(N, Ho, Wo, c_out)


def conv_bn_leaky_block(x_nhwc, w, gamma, beta):
    """Conv + training-mode BatchNorm2d + LeakyReLU(0.2), NHWC in/out (bf16).

    The conv bias is omitted on purpose: training-mode BN subtracts the
    per-channel batch mean, so any constant per-channel shift cancels exactly
    and the output is unchanged.
    """
    N = x_nhwc.shape[0]
    c_out = w.shape[0]
    patches, Ho, Wo = im2col_nhwc(x_nhwc)
    M = patches.shape[0]
    wr = _reorder_conv_weight(w)
    tm, M_pad = _m_tiles(M)

    if M_pad == tm:
        # All rows fit one tile: single fused Conv+BN+LeakyReLU kernel.
        z = _conv_bn_leaky_fused(patches, wr, gamma, beta)
    else:
        # Two-pass: GEMM with fused per-channel sum / sum-of-squares, then an
        # M-tiled affine + LeakyReLU kernel.
        y, s, ss = _conv_gemm(patches, wr, None, apply_leaky=False,
                              compute_stats=True, out_dtype=jnp.float32)
        c_pad = y.shape[1]
        mean = s / M
        var = jnp.maximum(ss / M - mean * mean, 0.0)   # biased variance
        inv = jax.lax.rsqrt(var + BN_EPS)
        gamma_p = jnp.pad(gamma.astype(jnp.float32),
                          (0, c_pad - c_out)).reshape(1, c_pad)
        beta_p = jnp.pad(beta.astype(jnp.float32),
                         (0, c_pad - c_out)).reshape(1, c_pad)
        scale = gamma_p * inv
        shift = beta_p - mean * scale
        z = _affine_leaky(y, scale, shift)             # (M_pad, C_pad) bf16

    return z[:M, :c_out].reshape(N, Ho, Wo, c_out)


# ----------------------------------------------------------------------------
# Full forward pass
# ----------------------------------------------------------------------------
def discriminator_wgan_forward(img, params):
    N = img.shape[0]
    # Single layout change: NCHW -> NHWC, cast operands to bf16 for the MXU.
    x = jnp.transpose(img, (0, 2, 3, 1)).astype(jnp.bfloat16)

    # Block 1: Conv(img_channels -> 64) + LeakyReLU(0.2)
    x = conv_leaky_block(x, params["w1"], params["b1"])

    # Block 2: Conv(64 -> 128) + BatchNorm2d(128) + LeakyReLU(0.2)
    # (b2 is unused: absorbed / removed by training-mode BN.)
    x = conv_bn_leaky_block(x, params["w2"], params["g2"], params["be2"])

    # Block 3: Conv(128 -> 256) + BatchNorm2d(256) + LeakyReLU(0.2)
    x = conv_bn_leaky_block(x, params["w3"], params["g3"], params["be3"])

    # Flatten + Linear(lin_in -> 1).  Activations are NHWC, PyTorch flattens
    # NCHW, so reorder the (tiny) Linear weight columns at trace time instead
    # of transposing the activation.
    _, H3, W3, C3 = x.shape
    flat = x.reshape(N, H3 * W3 * C3)
    wl = params["wl"].reshape(1, C3, H3, W3).transpose(0, 2, 3, 1).reshape(1, -1)
    return _linear(flat, wl, params["bl"])            # (N, 1) f32


def init_params(key, img_channels, tile_size):
    ks = jax.random.split(key, 8)
    lin_in = (tile_size // 8) * (tile_size // 8) * 256

    def conv_w(k, cout, cin):
        fan_in = cin * 4 * 4
        return jax.random.normal(k, (cout, cin, 4, 4), jnp.float32) / jnp.sqrt(fan_in)

    return {
        "w1": conv_w(ks[0], 64, img_channels),
        "b1": jnp.zeros((64,), jnp.float32),
        "w2": conv_w(ks[1], 128, 64),
        "b2": jnp.zeros((128,), jnp.float32),
        "g2": jnp.ones((128,), jnp.float32),
        "be2": jnp.zeros((128,), jnp.float32),
        "w3": conv_w(ks[2], 256, 128),
        "b3": jnp.zeros((256,), jnp.float32),
        "g3": jnp.ones((256,), jnp.float32),
        "be3": jnp.zeros((256,), jnp.float32),
        "wl": jax.random.normal(ks[3], (1, lin_in), jnp.float32) / jnp.sqrt(lin_in),
        "bl": jnp.zeros((1,), jnp.float32),
    }


if __name__ == "__main__":
    IMG_CHANNELS = 4
    TILE_SIZE = 16
    BATCH = 2

    key = jax.random.PRNGKey(0)
    k_img, k_par = jax.random.split(key)
    img = jax.random.normal(
        k_img, (BATCH, IMG_CHANNELS, TILE_SIZE, TILE_SIZE), jnp.float32)
    params = init_params(k_par, IMG_CHANNELS, TILE_SIZE)

    fwd = jax.jit(discriminator_wgan_forward)
    out = fwd(img, params)
    jax.block_until_ready(out)

    assert out.shape == (BATCH, 1) and out.dtype == jnp.float32
    print("KERNEL_OK")
</pallas_src>

<mosaic_0001>
module attributes {stable_mosaic.version = 11 : i64} {
  func.func @_conv_gemm_kernel(%arg0: i32, %arg1: i32, %arg2: memref<128x64xbf16, #tpu.memory_space<vmem>>, %arg3: memref<64x128xbf16, #tpu.memory_space<vmem>>, %arg4: memref<1x128xf32, #tpu.memory_space<vmem>>, %arg5: memref<128x128xbf16, #tpu.memory_space<vmem>>) attributes {dimension_semantics = [#tpu.dimension_semantics<parallel>, #tpu.dimension_semantics<parallel>], iteration_bounds = array<i64: 1, 1>, scalar_prefetch = 0 : i64, scratch_operands = 0 : i64, tpu.core_type = #tpu.core_type<tc>, window_params = [{transform_indices = @transform_0, window_bounds = array<i64: 128, 64>}, {transform_indices = @transform_1, window_bounds = array<i64: 64, 128>}, {transform_indices = @transform_2, window_bounds = array<i64: 1, 128>}, {transform_indices = @transform_3, window_bounds = array<i64: 128, 128>}]} {
    %c0 = arith.constant 0 : index
    %c0_0 = arith.constant 0 : index
    %0 = vector.load %arg2[%c0, %c0_0] : memref<128x64xbf16, #tpu.memory_space<vmem>>, vector<128x64xbf16>
    %c0_1 = arith.constant 0 : index
    %c0_2 = arith.constant 0 : index
    %1 = vector.load %arg3[%c0_1, %c0_2] : memref<64x128xbf16, #tpu.memory_space<vmem>>, vector<64x128xbf16>
    %cst = arith.constant dense<0.000000e+00> : vector<128x128xf32>
    %2 = tpu.matmul %0, %1, %cst {dimension_numbers = #tpu.dot_dimension_numbers<[1], [0], [0], [1], [0, 0, 1, 1], [], []>} : vector<128x64xbf16>, vector<64x128xbf16>, vector<128x128xf32> -> vector<128x128xf32>
    %c0_3 = arith.constant 0 : index
    %c0_4 = arith.constant 0 : index
    %3 = vector.load %arg4[%c0_3, %c0_4] : memref<1x128xf32, #tpu.memory_space<vmem>>, vector<1x128xf32>
    %4 = vector.broadcast %3 : vector<1x128xf32> to vector<128x128xf32>
    %5 = arith.addf %2, %4 : vector<128x128xf32>
    %cst_5 = arith.constant 0.000000e+00 : f32
    %6 = vector.broadcast %cst_5 : f32 to vector<128x128xf32>
    %7 = arith.cmpf ogt, %5, %6 : vector<128x128xf32>
    %cst_6 = arith.constant 2.000000e-01 : f32
    %8 = vector.broadcast %cst_6 : f32 to vector<128x128xf32>
    %9 = arith.mulf %8, %5 : vector<128x128xf32>
    %10 = arith.select %7, %5, %9 : vector<128x128xi1>, vector<128x128xf32>
    %11 = arith.truncf %10 : vector<128x128xf32> to vector<128x128xbf16>
    %c0_7 = arith.constant 0 : index
    %c0_8 = arith.constant 0 : index
    %12 = vector.load %arg5[%c0_7, %c0_8] : memref<128x128xbf16, #tpu.memory_space<vmem>>, vector<128x128xbf16>
    tpu.vector_store %arg5[%c0_7, %c0_8], %11 {strides = array<i32>} : memref<128x128xbf16, #tpu.memory_space<vmem>>, vector<128x128xbf16>,
    return
  }
  func.func @transform_0(%arg0: i32, %arg1: i32) -> (i32, i32) {
    %c0_i32 = arith.constant 0 : i32
    %c0_i32_0 = arith.constant 0 : i32
    return %arg1, %c0_i32 : i32, i32
  }
  func.func @transform_1(%arg0: i32, %arg1: i32) -> (i32, i32) {
    %c0_i32 = arith.constant 0 : i32
    %c0_i32_0 = arith.constant 0 : i32
    return %c0_i32, %arg0 : i32, i32
  }
  func.func @transform_2(%arg0: i32, %arg1: i32) -> (i32, i32) {
    %c0_i32 = arith.constant 0 : i32
    %c0_i32_0 = arith.constant 0 : i32
    return %c0_i32, %arg0 : i32, i32
  }
  func.func @transform_3(%arg0: i32, %arg1: i32) -> (i32, i32) {
    %c0_i32 = arith.constant 0 : i32
    return %arg1, %arg0 : i32, i32
  }
}

module attributes {stable_mosaic.version = 11 : i64} {
  func.func @_conv_bn_leaky_kernel(%arg0: i32, %arg1: memref<32x1024xbf16, #tpu.memory_space<vmem>>, %arg2: memref<1024x128xbf16, #tpu.memory_space<vmem>>, %arg3: memref<1x128xf32, #tpu.memory_space<vmem>>, %arg4: memref<1x128xf32, #tpu.memory_space<vmem>>, %arg5: memref<32x128xbf16, #tpu.memory_space<vmem>>) attributes {dimension_semantics = [#tpu.dimension_semantics<parallel>], iteration_bounds = array<i64: 1>, scalar_prefetch = 0 : i64, scratch_operands = 0 : i64, tpu.core_type = #tpu.core_type<tc>, window_params = [{pipeline_mode = #tpu.pipeline_mode<synchronous>, transform_indices = @transform_0, window_bounds = array<i64: 32, 1024>}, {transform_indices = @transform_1, window_bounds = array<i64: 1024, 128>}, {transform_indices = @transform_2, window_bounds = array<i64: 1, 128>}, {transform_indices = @transform_3, window_bounds = array<i64: 1, 128>}, {transform_indices = @transform_4, window_bounds = array<i64: 32, 128>}]} {
    %c0 = arith.constant 0 : index
    %c0_0 = arith.constant 0 : index
    %0 = vector.load %arg1[%c0, %c0_0] : memref<32x1024xbf16, #tpu.memory_space<vmem>>, vector<32x1024xbf16>
    %c0_1 = arith.constant 0 : index
    %c0_2 = arith.constant 0 : index
    %1 = vector.load %arg2[%c0_1, %c0_2] : memref<1024x128xbf16, #tpu.memory_space<vmem>>, vector<1024x128xbf16>
    %cst = arith.constant dense<0.000000e+00> : vector<32x128xf32>
    %2 = tpu.matmul %0, %1, %cst {dimension_numbers = #tpu.dot_dimension_numbers<[1], [0], [0], [1], [0, 0, 1, 1], [], []>} : vector<32x1024xbf16>, vector<1024x128xbf16>, vector<32x128xf32> -> vector<32x128xf32>
    %3 = tpu.iota {dimensions = array<i32: 0>} : vector<32x128xi32>
    %c32_i32 = arith.constant 32 : i32
    %4 = vector.broadcast %c32_i32 : i32 to vector<32x128xi32>
    %5 = arith.cmpi slt, %3, %4 : vector<32x128xi32>
    %cst_3 = arith.constant 0.000000e+00 : f32
    %6 = vector.broadcast %cst_3 : f32 to vector<32x128xf32>
    %7 = arith.select %5, %2, %6 : vector<32x128xi1>, vector<32x128xf32>
    %cst_4 = arith.constant dense<0.000000e+00> : vector<128xf32>
    %8 = vector.multi_reduction <add>, %7, %cst_4 [0] : vector<32x128xf32> to vector<128xf32>
    %9 = vector.shape_cast %8 : vector<128xf32> to vector<1x128xf32>
    %cst_5 = arith.constant 3.125000e-02 : f32
    %10 = vector.broadcast %cst_5 : f32 to vector<1x128xf32>
    %11 = arith.mulf %9, %10 : vector<1x128xf32>
    %12 = arith.mulf %7, %7 : vector<32x128xf32>
    %cst_6 = arith.constant dense<0.000000e+00> : vector<128xf32>
    %13 = vector.multi_reduction <add>, %12, %cst_6 [0] : vector<32x128xf32> to vector<128xf32>
    %14 = vector.shape_cast %13 : vector<128xf32> to vector<1x128xf32>
    %cst_7 = arith.constant 3.125000e-02 : f32
    %15 = vector.broadcast %cst_7 : f32 to vector<1x128xf32>
    %16 = arith.mulf %14, %15 : vector<1x128xf32>
    %17 = arith.mulf %11, %11 : vector<1x128xf32>
    %18 = arith.subf %16, %17 : vector<1x128xf32>
    %cst_8 = arith.constant 0.000000e+00 : f32
    %19 = vector.broadcast %cst_8 : f32 to vector<1x128xf32>
    %20 = arith.maximumf %18, %19 : vector<1x128xf32>
    %cst_9 = arith.constant 9.99999974E-6 : f32
    %21 = vector.broadcast %cst_9 : f32 to vector<1x128xf32>
    %22 = arith.addf %20, %21 : vector<1x128xf32>
    %23 = math.rsqrt %22 : vector<1x128xf32>
    %c0_10 = arith.constant 0 : index
    %c0_11 = arith.constant 0 : index
    %24 = vector.load %arg3[%c0_10, %c0_11] : memref<1x128xf32, #tpu.memory_space<vmem>>, vector<1x128xf32>
    %25 = arith.mulf %24, %23 : vector<1x128xf32>
    %c0_12 = arith.constant 0 : index
    %c0_13 = arith.constant 0 : index
    %26 = vector.load %arg4[%c0_12, %c0_13] : memref<1x128xf32, #tpu.memory_space<vmem>>, vector<1x128xf32>
    %27 = arith.mulf %11, %25 : vector<1x128xf32>
    %28 = arith.subf %26, %27 : vector<1x128xf32>
    %29 = vector.broadcast %25 : vector<1x128xf32> to vector<32x128xf32>
    %30 = arith.mulf %2, %29 : vector<32x128xf32>
    %31 = vector.broadcast %28 : vector<1x128xf32> to vector<32x128xf32>
    %32 = arith.addf %30, %31 : vector<32x128xf32>
    %cst_14 = arith.constant 0.000000e+00 : f32
    %33 = vector.broadcast %cst_14 : f32 to vector<32x128xf32>
    %34 = arith.cmpf ogt, %32, %33 : vector<32x128xf32>
    %cst_15 = arith.constant 2.000000e-01 : f32
    %35 = vector.broadcast %cst_15 : f32 to vector<32x128xf32>
    %36 = arith.mulf %35, %32 : vector<32x128xf32>
    %37 = arith.select %34, %32, %36 : vector<32x128xi1>, vector<32x128xf32>
    %38 = arith.truncf %37 : vector<32x128xf32> to vector<32x128xbf16>
    %c0_16 = arith.constant 0 : index
    %c0_17 = arith.constant 0 : index
    %39 = vector.load %arg5[%c0_16, %c0_17] : memref<32x128xbf16, #tpu.memory_space<vmem>>, vector<32x128xbf16>
    tpu.vector_store %arg5[%c0_16, %c0_17], %38 {strides = array<i32>} : memref<32x128xbf16, #tpu.memory_space<vmem>>, vector<32x128xbf16>,
    return
  }
  func.func @transform_0(%arg0: i32) -> (i32, i32) {
    %c0_i32 = arith.constant 0 : i32
    %c0_i32_0 = arith.constant 0 : i32
    %c0_i32_1 = arith.constant 0 : i32
    return %c0_i32, %c0_i32_0 : i32, i32
  }
  func.func @transform_1(%arg0: i32) -> (i32, i32) {
    %c0_i32 = arith.constant 0 : i32
    %c0_i32_0 = arith.constant 0 : i32
    return %c0_i32, %arg0 : i32, i32
  }
  func.func @transform_2(%arg0: i32) -> (i32, i32) {
    %c0_i32 = arith.constant 0 : i32
    %c0_i32_0 = arith.constant 0 : i32
    return %c0_i32, %arg0 : i32, i32
  }
  func.func @transform_3(%arg0: i32) -> (i32, i32) {
    %c0_i32 = arith.constant 0 : i32
    %c0_i32_0 = arith.constant 0 : i32
    return %c0_i32, %arg0 : i32, i32
  }
  func.func @transform_4(%arg0: i32) -> (i32, i32) {
    %c0_i32 = arith.constant 0 : i32
    %c0_i32_0 = arith.constant 0 : i32
    return %c0_i32, %arg0 : i32, i32
  }
}

module attributes {stable_mosaic.version = 11 : i64} {
  func.func @_conv_bn_leaky_kernel(%arg0: i32, %arg1: memref<16x2048xbf16, #tpu.memory_space<vmem>>, %arg2: memref<2048x128xbf16, #tpu.memory_space<vmem>>, %arg3: memref<1x128xf32, #tpu.memory_space<vmem>>, %arg4: memref<1x128xf32, #tpu.memory_space<vmem>>, %arg5: memref<16x128xbf16, #tpu.memory_space<vmem>>) attributes {dimension_semantics = [#tpu.dimension_semantics<parallel>], iteration_bounds = array<i64: 2>, scalar_prefetch = 0 : i64, scratch_operands = 0 : i64, tpu.core_type = #tpu.core_type<tc>, window_params = [{pipeline_mode = #tpu.pipeline_mode<synchronous>, transform_indices = @transform_0, window_bounds = array<i64: 16, 2048>}, {transform_indices = @transform_1, window_bounds = array<i64: 2048, 128>}, {transform_indices = @transform_2, window_bounds = array<i64: 1, 128>}, {transform_indices = @transform_3, window_bounds = array<i64: 1, 128>}, {transform_indices = @transform_4, window_bounds = array<i64: 16, 128>}]} {
    %c0 = arith.constant 0 : index
    %c0_0 = arith.constant 0 : index
    %0 = vector.load %arg1[%c0, %c0_0] : memref<16x2048xbf16, #tpu.memory_space<vmem>>, vector<16x2048xbf16>
    %c0_1 = arith.constant 0 : index
    %c0_2 = arith.constant 0 : index
    %1 = vector.load %arg2[%c0_1, %c0_2] : memref<2048x128xbf16, #tpu.memory_space<vmem>>, vector<2048x128xbf16>
    %cst = arith.constant dense<0.000000e+00> : vector<16x128xf32>
    %2 = tpu.matmul %0, %1, %cst {dimension_numbers = #tpu.dot_dimension_numbers<[1], [0], [0], [1], [0, 0, 1, 1], [], []>} : vector<16x2048xbf16>, vector<2048x128xbf16>, vector<16x128xf32> -> vector<16x128xf32>
    %3 = tpu.iota {dimensions = array<i32: 0>} : vector<16x128xi32>
    %c8_i32 = arith.constant 8 : i32
    %4 = vector.broadcast %c8_i32 : i32 to vector<16x128xi32>
    %5 = arith.cmpi slt, %3, %4 : vector<16x128xi32>
    %cst_3 = arith.constant 0.000000e+00 : f32
    %6 = vector.broadcast %cst_3 : f32 to vector<16x128xf32>
    %7 = arith.select %5, %2, %6 : vector<16x128xi1>, vector<16x128xf32>
    %cst_4 = arith.constant dense<0.000000e+00> : vector<128xf32>
    %8 = vector.multi_reduction <add>, %7, %cst_4 [0] : vector<16x128xf32> to vector<128xf32>
    %9 = vector.shape_cast %8 : vector<128xf32> to vector<1x128xf32>
    %cst_5 = arith.constant 1.250000e-01 : f32
    %10 = vector.broadcast %cst_5 : f32 to vector<1x128xf32>
    %11 = arith.mulf %9, %10 : vector<1x128xf32>
    %12 = arith.mulf %7, %7 : vector<16x128xf32>
    %cst_6 = arith.constant dense<0.000000e+00> : vector<128xf32>
    %13 = vector.multi_reduction <add>, %12, %cst_6 [0] : vector<16x128xf32> to vector<128xf32>
    %14 = vector.shape_cast %13 : vector<128xf32> to vector<1x128xf32>
    %cst_7 = arith.constant 1.250000e-01 : f32
    %15 = vector.broadcast %cst_7 : f32 to vector<1x128xf32>
    %16 = arith.mulf %14, %15 : vector<1x128xf32>
    %17 = arith.mulf %11, %11 : vector<1x128xf32>
    %18 = arith.subf %16, %17 : vector<1x128xf32>
    %cst_8 = arith.constant 0.000000e+00 : f32
    %19 = vector.broadcast %cst_8 : f32 to vector<1x128xf32>
    %20 = arith.maximumf %18, %19 : vector<1x128xf32>
    %cst_9 = arith.constant 9.99999974E-6 : f32
    %21 = vector.broadcast %cst_9 : f32 to vector<1x128xf32>
    %22 = arith.addf %20, %21 : vector<1x128xf32>
    %23 = math.rsqrt %22 : vector<1x128xf32>
    %c0_10 = arith.constant 0 : index
    %c0_11 = arith.constant 0 : index
    %24 = vector.load %arg3[%c0_10, %c0_11] : memref<1x128xf32, #tpu.memory_space<vmem>>, vector<1x128xf32>
    %25 = arith.mulf %24, %23 : vector<1x128xf32>
    %c0_12 = arith.constant 0 : index
    %c0_13 = arith.constant 0 : index
    %26 = vector.load %arg4[%c0_12, %c0_13] : memref<1x128xf32, #tpu.memory_space<vmem>>, vector<1x128xf32>
    %27 = arith.mulf %11, %25 : vector<1x128xf32>
    %28 = arith.subf %26, %27 : vector<1x128xf32>
    %29 = vector.broadcast %25 : vector<1x128xf32> to vector<16x128xf32>
    %30 = arith.mulf %2, %29 : vector<16x128xf32>
    %31 = vector.broadcast %28 : vector<1x128xf32> to vector<16x128xf32>
    %32 = arith.addf %30, %31 : vector<16x128xf32>
    %cst_14 = arith.constant 0.000000e+00 : f32
    %33 = vector.broadcast %cst_14 : f32 to vector<16x128xf32>
    %34 = arith.cmpf ogt, %32, %33 : vector<16x128xf32>
    %cst_15 = arith.constant 2.000000e-01 : f32
    %35 = vector.broadcast %cst_15 : f32 to vector<16x128xf32>
    %36 = arith.mulf %35, %32 : vector<16x128xf32>
    %37 = arith.select %34, %32, %36 : vector<16x128xi1>, vector<16x128xf32>
    %38 = arith.truncf %37 : vector<16x128xf32> to vector<16x128xbf16>
    %c0_16 = arith.constant 0 : index
    %c0_17 = arith.constant 0 : index
    %39 = vector.load %arg5[%c0_16, %c0_17] : memref<16x128xbf16, #tpu.memory_space<vmem>>, vector<16x128xbf16>
    tpu.vector_store %arg5[%c0_16, %c0_17], %38 {strides = array<i32>} : memref<16x128xbf16, #tpu.memory_space<vmem>>, vector<16x128xbf16>,
    return
  }
  func.func @transform_0(%arg0: i32) -> (i32, i32) {
    %c0_i32 = arith.constant 0 : i32
    %c0_i32_0 = arith.constant 0 : i32
    %c0_i32_1 = arith.constant 0 : i32
    return %c0_i32, %c0_i32_0 : i32, i32
  }
  func.func @transform_1(%arg0: i32) -> (i32, i32) {
    %c0_i32 = arith.constant 0 : i32
    %c0_i32_0 = arith.constant 0 : i32
    return %c0_i32, %arg0 : i32, i32
  }
  func.func @transform_2(%arg0: i32) -> (i32, i32) {
    %c0_i32 = arith.constant 0 : i32
    %c0_i32_0 = arith.constant 0 : i32
    return %c0_i32, %arg0 : i32, i32
  }
  func.func @transform_3(%arg0: i32) -> (i32, i32) {
    %c0_i32 = arith.constant 0 : i32
    %c0_i32_0 = arith.constant 0 : i32
    return %c0_i32, %arg0 : i32, i32
  }
  func.func @transform_4(%arg0: i32) -> (i32, i32) {
    %c0_i32 = arith.constant 0 : i32
    %c0_i32_0 = arith.constant 0 : i32
    return %c0_i32, %arg0 : i32, i32
  }
}

module attributes {stable_mosaic.version = 11 : i64} {
  func.func @_linear_kernel(%arg0: i32, %arg1: memref<8x1024xbf16, #tpu.memory_space<vmem>>, %arg2: memref<1x1024xf32, #tpu.memory_space<vmem>>, %arg3: memref<1x1xf32, #tpu.memory_space<vmem>>, %arg4: memref<8x1xf32, #tpu.memory_space<vmem>>) attributes {dimension_semantics = [#tpu.dimension_semantics<parallel>], iteration_bounds = array<i64: 1>, scalar_prefetch = 0 : i64, scratch_operands = 0 : i64, tpu.core_type = #tpu.core_type<tc>, window_params = [{transform_indices = @transform_0, window_bounds = array<i64: 8, 1024>}, {pipeline_mode = #tpu.pipeline_mode<synchronous>, transform_indices = @transform_1, window_bounds = array<i64: 1, 1024>}, {pipeline_mode = #tpu.pipeline_mode<synchronous>, transform_indices = @transform_2, window_bounds = array<i64: 1, 1>}, {transform_indices = @transform_3, window_bounds = array<i64: 8, 1>}]} {
    %c0 = arith.constant 0 : index
    %c0_0 = arith.constant 0 : index
    %0 = vector.load %arg1[%c0, %c0_0] : memref<8x1024xbf16, #tpu.memory_space<vmem>>, vector<8x1024xbf16>
    %1 = arith.extf %0 : vector<8x1024xbf16> to vector<8x1024xf32>
    %c0_1 = arith.constant 0 : index
    %c0_2 = arith.constant 0 : index
    %2 = vector.load %arg2[%c0_1, %c0_2] : memref<1x1024xf32, #tpu.memory_space<vmem>>, vector<1x1024xf32>
    %3 = vector.broadcast %2 : vector<1x1024xf32> to vector<8x1024xf32>
    %4 = arith.mulf %1, %3 : vector<8x1024xf32>
    %cst = arith.constant dense<0.000000e+00> : vector<8xf32>
    %5 = vector.multi_reduction <add>, %4, %cst [1] : vector<8x1024xf32> to vector<8xf32>
    %6 = vector.shape_cast %5 : vector<8xf32> to vector<8x1xf32>
    %c0_3 = arith.constant 0 : index
    %c0_4 = arith.constant 0 : index
    %7 = vector.load %arg3[%c0_3, %c0_4] : memref<1x1xf32, #tpu.memory_space<vmem>>, vector<1x1xf32>
    %8 = vector.broadcast %7 : vector<1x1xf32> to vector<8x1xf32>
    %9 = arith.addf %6, %8 : vector<8x1xf32>
    %c0_5 = arith.constant 0 : index
    %c0_6 = arith.constant 0 : index
    %10 = vector.load %arg4[%c0_5, %c0_6] : memref<8x1xf32, #tpu.memory_space<vmem>>, vector<8x1xf32>
    tpu.vector_store %arg4[%c0_5, %c0_6], %9 {strides = array<i32>} : memref<8x1xf32, #tpu.memory_space<vmem>>, vector<8x1xf32>,
    return
  }
  func.func @transform_0(%arg0: i32) -> (i32, i32) {
    %c0_i32 = arith.constant 0 : i32
    %c0_i32_0 = arith.constant 0 : i32
    return %arg0, %c0_i32 : i32, i32
  }
  func.func @transform_1(%arg0: i32) -> (i32, i32) {
    %c0_i32 = arith.constant 0 : i32
    %c0_i32_0 = arith.constant 0 : i32
    %c0_i32_1 = arith.constant 0 : i32
    return %c0_i32, %c0_i32_0 : i32, i32
  }
  func.func @transform_2(%arg0: i32) -> (i32, i32) {
    %c0_i32 = arith.constant 0 : i32
    %c0_i32_0 = arith.constant 0 : i32
    %c0_i32_1 = arith.constant 0 : i32
    return %c0_i32, %c0_i32_0 : i32, i32
  }
  func.func @transform_3(%arg0: i32) -> (i32, i32) {
    %c0_i32 = arith.constant 0 : i32
    %c0_i32_0 = arith.constant 0 : i32
    return %arg0, %c0_i32 : i32, i32
  }
}

</mosaic_0001>

<llo_original>
// kernel: discriminator_wgan_forward.4
$region0: #{discriminator_wgan_forward.4}
  #allocation0 [shape = 'u32[]', space=smem, size = 0x4, offset = 0x4, fixed_abs, tag = 'smem constant byte address 0x4 - core index']
  #allocation1 [shape = 'u32[144,128]{1,0:T(1,128)}', space=vmem, size = 0x12000, scoped, tag = 'internal scratch']
  %s0 = inlined_call_operand.vmem [shape: bf16[128,64], index: 0, kind: input, shape index: {}]
  %s1 = inlined_call_operand.vmem [shape: bf16[64,128], index: 1, kind: input, shape index: {}]
  %s2 = inlined_call_operand.vmem [shape: f32[1,128], index: 2, kind: input, shape index: {}]
  %s3 = inlined_call_operand.vmem [shape: bf16[128,128], index: 3, kind: output, shape index: {}]
  %s4 = sld [smem:[#allocation0]]
  $region22: #{discriminator_wgan_forward.4} parent=0
    _
  %s6 = ssub.s32 1, %s4
  %s7 = scalar_select 0, %s6, %s4
  // Predicated region
  $region2: #{discriminator_wgan_forward.4} parent=0 // pred_check
    _
  $region3: #{discriminator_wgan_forward.4} parent=0 // pred_check_branch
    %9 = sbr.rel (0) target = $region5
  $region4: #{discriminator_wgan_forward.4} parent=0 // pred_region
    _
  $region5: #{discriminator_wgan_forward.4} parent=0 // pred_fallthru
    _
  // Predicated region
  $region6: #{discriminator_wgan_forward.4} parent=0 // pred_check
    _
  $region7: #{discriminator_wgan_forward.4} parent=0 // pred_check_branch
    %11 = sbr.rel (0) target = $region9
  $region8: #{discriminator_wgan_forward.4} parent=0 // pred_region
    _
  $region9: #{discriminator_wgan_forward.4} parent=0 // pred_fallthru
    _
  // Predicated region
  $region10: #{discriminator_wgan_forward.4} parent=0 // pred_check
    _
  $region11: #{discriminator_wgan_forward.4} parent=0 // pred_check_branch
    %13 = sbr.rel (0) target = $region13
  $region12: #{discriminator_wgan_forward.4} parent=0 // pred_region
    _
  $region13: #{discriminator_wgan_forward.4} parent=0 // pred_fallthru
    _
  %v15 = vld [vmem:[%s0] sm:$0xf]
  %v16 = vld [vmem:[%s0 + $0x4] sm:$0xf]
  %v17 = vld [vmem:[%s0 + $0x8] sm:$0xf]
  %v18 = vld [vmem:[%s0 + $0xc] sm:$0xf]
  %v19 = vld [vmem:[%s0 + $0x10] sm:$0xf]
  %v20 = vld [vmem:[%s0 + $0x14] sm:$0xf]
  %v21 = vld [vmem:[%s0 + $0x18] sm:$0xf]
  %v22 = vld [vmem:[%s0 + $0x1c] sm:$0xf]
  %v23 = vld [vmem:[%s0 + $0x20] sm:$0xf]
  %v24 = vld [vmem:[%s0 + $0x24] sm:$0xf]
  %v25 = vld [vmem:[%s0 + $0x28] sm:$0xf]
  %v26 = vld [vmem:[%s0 + $0x2c] sm:$0xf]
  %v27 = vld [vmem:[%s0 + $0x30] sm:$0xf]
  %v28 = vld [vmem:[%s0 + $0x34] sm:$0xf]
  %v29 = vld [vmem:[%s0 + $0x38] sm:$0xf]
  %v30 = vld [vmem:[%s0 + $0x3c] sm:$0xf]
  %v31 = vld [vmem:[%s1] sm:$0xf]
  %v32 = vld [vmem:[%s1 + $0x4] sm:$0xf]
  %v33 = vld [vmem:[%s1 + $0x8] sm:$0xf]
  %v34 = vld [vmem:[%s1 + $0xc] sm:$0xf]
  %v35 = vld [vmem:[%s1 + $0x10] sm:$0xf]
  %v36 = vld [vmem:[%s1 + $0x14] sm:$0xf]
  %v37 = vld [vmem:[%s1 + $0x18] sm:$0xf]
  %v38 = vld [vmem:[%s1 + $0x1c] sm:$0xf]
  %v39 = vld [vmem:[%s2] sm:$0x1]
  %v41 = vlaneseq
  %v42 = vshrl.u32 %v41, 7
  %v43 = vsub.s32 0, %v42
  %v44 = vrot.slane %v39, %v43
  %v62 = vunpack.c.l.b16 %v15
  %v63 = vunpack.c.l.b16 %v16
  %v64 = vunpack.c.l.b16 %v17
  %v65 = vunpack.c.l.b16 %v18
  %v66 = vunpack.c.l.b16 %v19
  %v67 = vunpack.c.l.b16 %v20
  %v68 = vunpack.c.l.b16 %v21
  %v69 = vunpack.c.l.b16 %v22
  %v70 = vunpack.c.l.b16 %v23
  %v71 = vunpack.c.l.b16 %v24
  %v72 = vunpack.c.l.b16 %v25
  %v73 = vunpack.c.l.b16 %v26
  %v74 = vunpack.c.l.b16 %v27
  %v75 = vunpack.c.l.b16 %v28
  %v76 = vunpack.c.l.b16 %v29
  %v77 = vunpack.c.l.b16 %v30
  %v78 = vpack.c.b16 %v63, %v62
  %v79 = vpack.c.b16 %v65, %v64
  %v80 = vpack.c.b16 %v67, %v66
  %v81 = vpack.c.b16 %v69, %v68
  %v82 = vpack.c.b16 %v71, %v70
  %v83 = vpack.c.b16 %v73, %v72
  %v84 = vpack.c.b16 %v75, %v74
  %v85 = vpack.c.b16 %v77, %v76
  %v94 = vunpack.c.l.b16 %v31
  %v95 = vunpack.c.l.b16 %v32
  %v96 = vunpack.c.l.b16 %v33
  %v97 = vunpack.c.l.b16 %v34
  %v98 = vunpack.c.l.b16 %v35
  %v99 = vunpack.c.l.b16 %v36
  %v100 = vunpack.c.l.b16 %v37
  %v101 = vunpack.c.l.b16 %v38
  %v102 = vpack.c.b16 %v95, %v94
  %v103 = vpack.c.b16 %v97, %v96
  %v104 = vpack.c.b16 %v99, %v98
  %v105 = vpack.c.b16 %v101, %v100
  %vm110 = vcmask 523264
  %v112 = vsel %vm110, %v78, 0
  %v115 = vsel %vm110, %v79, 0
  %v118 = vsel %vm110, %v80, 0
  %v121 = vsel %vm110, %v81, 0
  %v124 = vsel %vm110, %v82, 0
  %v127 = vsel %vm110, %v83, 0
  %v130 = vsel %vm110, %v84, 0
  %v133 = vsel %vm110, %v85, 0
  %135 = vmatprep.subr.bf16.mxu0 0
  %136 = vmatpush1.bf16.msra.mxu0 %v102
  %137 = vmatprep.subr.bf16.mxu0 0
  %138 = vmatpush1.bf16.msra.mxu0 %v103
  %139 = vmatprep.subr.bf16.mxu0 0
  %140 = vmatpush1.bf16.msra.mxu0 %v104
  %141 = vmatprep.subr.bf16.mxu0 0
  %142 = vmatpush1.bf16.msra.mxu0 %v105
  %143 = vmatprep.subr.bf16.mxu0 0
  %144 = vmatpush1.bf16.msra.mxu0 0
  %145 = vmatprep.subr.bf16.mxu0 0
  %146 = vmatpush1.bf16.msra.mxu0 0
  %147 = vmatprep.subr.bf16.mxu0 0
  %148 = vmatpush1.bf16.msra.mxu0 0
  %149 = vmatprep.subr.bf16.mxu0 0
  %150 = vmatpush1.bf16.msra.mxu0 0
  %151 = vmatprep.subr.bf16.mxu0 0
  %152 = vmatpush1.bf16.msra.mxu0 0
  %153 = vmatprep.subr.bf16.mxu0 0
  %154 = vmatpush1.bf16.msra.mxu0 0
  %155 = vmatprep.subr.bf16.mxu0 0
  %156 = vmatpush1.bf16.msra.mxu0 0
  %157 = vmatprep.subr.bf16.mxu0 0
  %158 = vmatpush1.bf16.msra.mxu0 0
  %159 = vmatprep.subr.bf16.mxu0 0
  %160 = vmatpush1.bf16.msra.mxu0 0
  %161 = vmatprep.subr.bf16.mxu0 0
  %162 = vmatpush1.bf16.msra.mxu0 0
  %163 = vmatprep.subr.bf16.mxu0 0
  %164 = vmatpush1.bf16.msra.mxu0 0
  %165 = vmatprep.subr.bf16.mxu0 0
  %166 = vmatpush1.bf16.msra.mxu0 0
  %167 = vmatprep.mubr.bf16.mxu0 0
  %168 = vmatmul.mubr.bf16.gmra.mrb[0].mxu0 %v112
  %v169 = vpop.f32.mrb[0].mxu0
  %v170 = vadd.f32 %v44, %v169
  %v171 = vpop.f32.mrb[0].mxu0
  %v172 = vpop.f32.mrb[0].mxu0
  %v173 = vadd.f32 %v44, %v172
  %v174 = vpop.f32.mrb[0].mxu0
  %175 = vmatprep.mubr.bf16.mxu0 0
  %176 = vmatmul.mubr.bf16.gmra.mrb[0].mxu0 %v115
  %v177 = vpop.f32.mrb[0].mxu0
  %v178 = vadd.f32 %v44, %v177
  %v179 = vpop.f32.mrb[0].mxu0
  %v180 = vpop.f32.mrb[0].mxu0
  %v181 = vadd.f32 %v44, %v180
  %v182 = vpop.f32.mrb[0].mxu0
  %183 = vmatprep.mubr.bf16.mxu0 0
  %184 = vmatmul.mubr.bf16.gmra.mrb[0].mxu0 %v118
  %v185 = vpop.f32.mrb[0].mxu0
  %v186 = vadd.f32 %v44, %v185
  %v187 = vpop.f32.mrb[0].mxu0
  %v188 = vpop.f32.mrb[0].mxu0
  %v189 = vadd.f32 %v44, %v188
  %v190 = vpop.f32.mrb[0].mxu0
  %191 = vmatprep.mubr.bf16.mxu0 0
  %192 = vmatmul.mubr.bf16.gmra.mrb[0].mxu0 %v121
  %v193 = vpop.f32.mrb[0].mxu0
  %v194 = vadd.f32 %v44, %v193
  %v195 = vpop.f32.mrb[0].mxu0
  %v196 = vpop.f32.mrb[0].mxu0
  %v197 = vadd.f32 %v44, %v196
  %v198 = vpop.f32.mrb[0].mxu0
  %199 = vmatprep.mubr.bf16.mxu0 0
  %200 = vmatmul.mubr.bf16.gmra.mrb[0].mxu0 %v124
  %v201 = vpop.f32.mrb[0].mxu0
  %v202 = vadd.f32 %v44, %v201
  %v203 = vpop.f32.mrb[0].mxu0
  %v204 = vpop.f32.mrb[0].mxu0
  %v205 = vadd.f32 %v44, %v204
  %v206 = vpop.f32.mrb[0].mxu0
  %207 = vmatprep.mubr.bf16.mxu0 0
  %208 = vmatmul.mubr.bf16.gmra.mrb[0].mxu0 %v127
  %v209 = vpop.f32.mrb[0].mxu0
  %v210 = vadd.f32 %v44, %v209
  %v211 = vpop.f32.mrb[0].mxu0
  %v212 = vpop.f32.mrb[0].mxu0
  %v213 = vadd.f32 %v44, %v212
  %v214 = vpop.f32.mrb[0].mxu0
  %215 = vmatprep.mubr.bf16.mxu0 0
  %216 = vmatmul.mubr.bf16.gmra.mrb[0].mxu0 %v130
  %v217 = vpop.f32.mrb[0].mxu0
  %v218 = vadd.f32 %v44, %v217
  %v219 = vpop.f32.mrb[0].mxu0
  %v220 = vpop.f32.mrb[0].mxu0
  %v221 = vadd.f32 %v44, %v220
  %v222 = vpop.f32.mrb[0].mxu0
  %223 = vmatprep.mubr.bf16.mxu0 0
  %224 = vmatmul.mubr.bf16.gmra.mrb[0].mxu0 %v133
  %v225 = vpop.f32.mrb[0].mxu0
  %v226 = vadd.f32 %v44, %v225
  %v227 = vpop.f32.mrb[0].mxu0
  %v228 = vpop.f32.mrb[0].mxu0
  %v229 = vadd.f32 %v44, %v228
  %v230 = vpop.f32.mrb[0].mxu0
  %231 = vdwg.mxu0
  %vm232 = vcmp.gt.f32.partialorder %v170, 0.0
  %vm233 = vcmp.gt.f32.partialorder %v173, 0.0
  %vm234 = vcmp.gt.f32.partialorder %v178, 0.0
  %vm235 = vcmp.gt.f32.partialorder %v181, 0.0
  %vm236 = vcmp.gt.f32.partialorder %v186, 0.0
  %vm237 = vcmp.gt.f32.partialorder %v189, 0.0
  %vm238 = vcmp.gt.f32.partialorder %v194, 0.0
  %vm239 = vcmp.gt.f32.partialorder %v197, 0.0
  %vm240 = vcmp.gt.f32.partialorder %v202, 0.0
  %vm241 = vcmp.gt.f32.partialorder %v205, 0.0
  %vm242 = vcmp.gt.f32.partialorder %v210, 0.0
  %vm243 = vcmp.gt.f32.partialorder %v213, 0.0
  %vm244 = vcmp.gt.f32.partialorder %v218, 0.0
  %vm245 = vcmp.gt.f32.partialorder %v221, 0.0
  %vm246 = vcmp.gt.f32.partialorder %v226, 0.0
  %vm247 = vcmp.gt.f32.partialorder %v229, 0.0
  %v248 = vmul.f32 %v170, 0.2
  %v249 = vmul.f32 %v173, 0.2
  %v250 = vmul.f32 %v178, 0.2
  %v251 = vmul.f32 %v181, 0.2
  %v252 = vmul.f32 %v186, 0.2
  %v253 = vmul.f32 %v189, 0.2
  %v254 = vmul.f32 %v194, 0.2
  %v255 = vmul.f32 %v197, 0.2
  %v256 = vmul.f32 %v202, 0.2
  %v257 = vmul.f32 %v205, 0.2
  %v258 = vmul.f32 %v210, 0.2
  %v259 = vmul.f32 %v213, 0.2
  %v260 = vmul.f32 %v218, 0.2
  %v261 = vmul.f32 %v221, 0.2
  %v262 = vmul.f32 %v226, 0.2
  %v263 = vmul.f32 %v229, 0.2
  %v264 = vsel %vm232, %v170, %v248
  %v265 = vsel %vm233, %v173, %v249
  %v266 = vsel %vm234, %v178, %v250
  %v267 = vsel %vm235, %v181, %v251
  %v268 = vsel %vm236, %v186, %v252
  %v269 = vsel %vm237, %v189, %v253
  %v270 = vsel %vm238, %v194, %v254
  %v271 = vsel %vm239, %v197, %v255
  %v272 = vsel %vm240, %v202, %v256
  %v273 = vsel %vm241, %v205, %v257
  %v274 = vsel %vm242, %v210, %v258
  %v275 = vsel %vm243, %v213, %v259
  %v276 = vsel %vm244, %v218, %v260
  %v277 = vsel %vm245, %v221, %v261
  %v278 = vsel %vm246, %v226, %v262
  %v279 = vsel %vm247, %v229, %v263
  %v280 = vpack.c.bf16 %v265, %v264
  %v281 = vpack.c.bf16 %v267, %v266
  %v282 = vpack.c.bf16 %v269, %v268
  %v283 = vpack.c.bf16 %v271, %v270
  %v284 = vpack.c.bf16 %v273, %v272
  %v285 = vpack.c.bf16 %v275, %v274
  %v286 = vpack.c.bf16 %v277, %v276
  %v287 = vpack.c.bf16 %v279, %v278
  %v296 = vunpack.c.l.b16 %v280
  %v297 = vunpack.c.h.b16 %v280
  %v298 = vunpack.c.l.b16 %v281
  %v299 = vunpack.c.h.b16 %v281
  %v300 = vunpack.c.l.b16 %v282
  %v301 = vunpack.c.h.b16 %v282
  %v302 = vunpack.c.l.b16 %v283
  %v303 = vunpack.c.h.b16 %v283
  %v304 = vunpack.c.l.b16 %v284
  %v305 = vunpack.c.h.b16 %v284
  %v306 = vunpack.c.l.b16 %v285
  %v307 = vunpack.c.h.b16 %v285
  %v308 = vunpack.c.l.b16 %v286
  %v309 = vunpack.c.h.b16 %v286
  %v310 = vunpack.c.l.b16 %v287
  %v311 = vunpack.c.h.b16 %v287
  %v312 = vpack.c.b16 %v296, %v296
  %v313 = vpack.c.b16 %v297, %v297
  %v314 = vpack.c.b16 %v298, %v298
  %v315 = vpack.c.b16 %v299, %v299
  %v316 = vpack.c.b16 %v300, %v300
  %v317 = vpack.c.b16 %v301, %v301
  %v318 = vpack.c.b16 %v302, %v302
  %v319 = vpack.c.b16 %v303, %v303
  %v320 = vpack.c.b16 %v304, %v304
  %v321 = vpack.c.b16 %v305, %v305
  %v322 = vpack.c.b16 %v306, %v306
  %v323 = vpack.c.b16 %v307, %v307
  %v324 = vpack.c.b16 %v308, %v308
  %v325 = vpack.c.b16 %v309, %v309
  %v326 = vpack.c.b16 %v310, %v310
  %v327 = vpack.c.b16 %v311, %v311
  %344 = vst [vmem:[%s3] sm:$0xf] %v312
  %345 = vst [vmem:[%s3 + $0x4] sm:$0xf] %v313
  %346 = vst [vmem:[%s3 + $0x8] sm:$0xf] %v314
  %347 = vst [vmem:[%s3 + $0xc] sm:$0xf] %v315
  %348 = vst [vmem:[%s3 + $0x10] sm:$0xf] %v316
  %349 = vst [vmem:[%s3 + $0x14] sm:$0xf] %v317
  %350 = vst [vmem:[%s3 + $0x18] sm:$0xf] %v318
  %351 = vst [vmem:[%s3 + $0x1c] sm:$0xf] %v319
  %352 = vst [vmem:[%s3 + $0x20] sm:$0xf] %v320
  %353 = vst [vmem:[%s3 + $0x24] sm:$0xf] %v321
  %354 = vst [vmem:[%s3 + $0x28] sm:$0xf] %v322
  %355 = vst [vmem:[%s3 + $0x2c] sm:$0xf] %v323
  %356 = vst [vmem:[%s3 + $0x30] sm:$0xf] %v324
  %357 = vst [vmem:[%s3 + $0x34] sm:$0xf] %v325
  %358 = vst [vmem:[%s3 + $0x38] sm:$0xf] %v326
  %359 = vst [vmem:[%s3 + $0x3c] sm:$0xf] %v327
  // Predicated region
  $region14: #{discriminator_wgan_forward.4} parent=0 // pred_check
    _
  $region15: #{discriminator_wgan_forward.4} parent=0 // pred_check_branch
    %361 = sbr.rel (0) target = $region17
  $region16: #{discriminator_wgan_forward.4} parent=0 // pred_region
    _
  $region17: #{discriminator_wgan_forward.4} parent=0 // pred_fallthru
    _
  // Predicated region
  $region18: #{discriminator_wgan_forward.4} parent=0 // pred_check
    _
  $region19: #{discriminator_wgan_forward.4} parent=0 // pred_check_branch
    %363 = sbr.rel (0) target = $region21
  $region20: #{discriminator_wgan_forward.4} parent=0 // pred_region
    _
  $region21: #{discriminator_wgan_forward.4} parent=0 // pred_fallthru
    _

// kernel: discriminator_wgan_forward.5
$region0: #{discriminator_wgan_forward.5}
  #allocation0 [shape = 'u32[]', space=smem, size = 0x4, offset = 0x4, fixed_abs, tag = 'smem constant byte address 0x4 - core index']
  #allocation1 [shape = 'u32[144,128]{1,0:T(1,128)}', space=vmem, size = 0x12000, scoped, tag = 'internal scratch']
  %s0 = inlined_call_operand.vmem [shape: bf16[32,1024], index: 0, kind: input, shape index: {}]
  %s1 = inlined_call_operand.vmem [shape: bf16[1024,128], index: 1, kind: input, shape index: {}]
  %s2 = inlined_call_operand.vmem [shape: f32[1,128], index: 2, kind: input, shape index: {}]
  %s3 = inlined_call_operand.vmem [shape: f32[1,128], index: 3, kind: input, shape index: {}]
  %s4 = inlined_call_operand.vmem [shape: bf16[32,128], index: 4, kind: output, shape index: {}]
  %s5 = sld [smem:[#allocation0]]
  $region26: #{discriminator_wgan_forward.5} parent=0
    _
  %s7 = ssub.s32 1, %s5
  %s8 = scalar_select 0, %s7, %s5
  // Predicated region
  $region2: #{discriminator_wgan_forward.5} parent=0 // pred_check
    _
  $region3: #{discriminator_wgan_forward.5} parent=0 // pred_check_branch
    %10 = sbr.rel (0) target = $region5
  $region4: #{discriminator_wgan_forward.5} parent=0 // pred_region
    _
  $region5: #{discriminator_wgan_forward.5} parent=0 // pred_fallthru
    _
  // Predicated region
  $region6: #{discriminator_wgan_forward.5} parent=0 // pred_check
    _
  $region7: #{discriminator_wgan_forward.5} parent=0 // pred_check_branch
    %12 = sbr.rel (0) target = $region9
  $region8: #{discriminator_wgan_forward.5} parent=0 // pred_region
    _
  $region9: #{discriminator_wgan_forward.5} parent=0 // pred_fallthru
    _
  // Predicated region
  $region10: #{discriminator_wgan_forward.5} parent=0 // pred_check
    _
  $region11: #{discriminator_wgan_forward.5} parent=0 // pred_check_branch
    %14 = sbr.rel (0) target = $region13
  $region12: #{discriminator_wgan_forward.5} parent=0 // pred_region
    _
  $region13: #{discriminator_wgan_forward.5} parent=0 // pred_fallthru
    _
  // Predicated region
  $region14: #{discriminator_wgan_forward.5} parent=0 // pred_check
    _
  $region15: #{discriminator_wgan_forward.5} parent=0 // pred_check_branch
    %16 = sbr.rel (0) target = $region17
  $region16: #{discriminator_wgan_forward.5} parent=0 // pred_region
    _
  $region17: #{discriminator_wgan_forward.5} parent=0 // pred_fallthru
    _
  %v18 = vld [vmem:[%s0] sm:$0xff]
  %v19 = vld [vmem:[%s0 + $0x8] sm:$0xff]
  %v20 = vld [vmem:[%s0 + $0x10] sm:$0xff]
  %v21 = vld [vmem:[%s0 + $0x18] sm:$0xff]
  %v22 = vld [vmem:[%s0 + $0x20] sm:$0xff]
  %v23 = vld [vmem:[%s0 + $0x28] sm:$0xff]
  %v24 = vld [vmem:[%s0 + $0x30] sm:$0xff]
  %v25 = vld [vmem:[%s0 + $0x38] sm:$0xff]
  %v26 = vld [vmem:[%s0 + $0x40] sm:$0xff]
  %v27 = vld [vmem:[%s0 + $0x48] sm:$0xff]
  %v28 = vld [vmem:[%s0 + $0x50] sm:$0xff]
  %v29 = vld [vmem:[%s0 + $0x58] sm:$0xff]
  %v30 = vld [vmem:[%s0 + $0x60] sm:$0xff]
  %v31 = vld [vmem:[%s0 + $0x68] sm:$0xff]
  %v32 = vld [vmem:[%s0 + $0x70] sm:$0xff]
  %v33 = vld [vmem:[%s0 + $0x78] sm:$0xff]
  %v34 = vld [vmem:[%s1] sm:$0xf]
  %v35 = vld [vmem:[%s1 + $0x4] sm:$0xf]
  %v36 = vld [vmem:[%s1 + $0x8] sm:$0xf]
  %v37 = vld [vmem:[%s1 + $0xc] sm:$0xf]
  %v38 = vld [vmem:[%s1 + $0x10] sm:$0xf]
  %v39 = vld [vmem:[%s1 + $0x14] sm:$0xf]
  %v40 = vld [vmem:[%s1 + $0x18] sm:$0xf]
  %v41 = vld [vmem:[%s1 + $0x1c] sm:$0xf]
  %v42 = vld [vmem:[%s1 + $0x20] sm:$0xf]
  %v43 = vld [vmem:[%s1 + $0x24] sm:$0xf]
  %v44 = vld [vmem:[%s1 + $0x28] sm:$0xf]
  %v45 = vld [vmem:[%s1 + $0x2c] sm:$0xf]
  %v46 = vld [vmem:[%s1 + $0x30] sm:$0xf]
  %v47 = vld [vmem:[%s1 + $0x34] sm:$0xf]
  %v48 = vld [vmem:[%s1 + $0x38] sm:$0xf]
  %v49 = vld [vmem:[%s1 + $0x3c] sm:$0xf]
  %v50 = vld [vmem:[%s1 + $0x40] sm:$0xf]
  %v51 = vld [vmem:[%s1 + $0x44] sm:$0xf]
  %v52 = vld [vmem:[%s1 + $0x48] sm:$0xf]
  %v53 = vld [vmem:[%s1 + $0x4c] sm:$0xf]
  %v54 = vld [vmem:[%s1 + $0x50] sm:$0xf]
  %v55 = vld [vmem:[%s1 + $0x54] sm:$0xf]
  %v56 = vld [vmem:[%s1 + $0x58] sm:$0xf]
  %v57 = vld [vmem:[%s1 + $0x5c] sm:$0xf]
  %v58 = vld [vmem:[%s1 + $0x60] sm:$0xf]
  %v59 = vld [vmem:[%s1 + $0x64] sm:$0xf]
  %v60 = vld [vmem:[%s1 + $0x68] sm:$0xf]
  %v61 = vld [vmem:[%s1 + $0x6c] sm:$0xf]
  %v62 = vld [vmem:[%s1 + $0x70] sm:$0xf]
  %v63 = vld [vmem:[%s1 + $0x74] sm:$0xf]
  %v64 = vld [vmem:[%s1 + $0x78] sm:$0xf]
  %v65 = vld [vmem:[%s1 + $0x7c] sm:$0xf]
  %v66 = vld [vmem:[%s1 + $0x80] sm:$0xf]
  %v67 = vld [vmem:[%s1 + $0x84] sm:$0xf]
  %v68 = vld [vmem:[%s1 + $0x88] sm:$0xf]
  %v69 = vld [vmem:[%s1 + $0x8c] sm:$0xf]
  %v70 = vld [vmem:[%s1 + $0x90] sm:$0xf]
  %v71 = vld [vmem:[%s1 + $0x94] sm:$0xf]
  %v72 = vld [vmem:[%s1 + $0x98] sm:$0xf]
  %v73 = vld [vmem:[%s1 + $0x9c] sm:$0xf]
  %v74 = vld [vmem:[%s1 + $0xa0] sm:$0xf]
  %v75 = vld [vmem:[%s1 + $0xa4] sm:$0xf]
  %v76 = vld [vmem:[%s1 + $0xa8] sm:$0xf]
  %v77 = vld [vmem:[%s1 + $0xac] sm:$0xf]
  %v78 = vld [vmem:[%s1 + $0xb0] sm:$0xf]
  %v79 = vld [vmem:[%s1 + $0xb4] sm:$0xf]
  %v80 = vld [vmem:[%s1 + $0xb8] sm:$0xf]
  %v81 = vld [vmem:[%s1 + $0xbc] sm:$0xf]
  %v82 = vld [vmem:[%s1 + $0xc0] sm:$0xf]
  %v83 = vld [vmem:[%s1 + $0xc4] sm:$0xf]
  %v84 = vld [vmem:[%s1 + $0xc8] sm:$0xf]
  %v85 = vld [vmem:[%s1 + $0xcc] sm:$0xf]
  %v86 = vld [vmem:[%s1 + $0xd0] sm:$0xf]
  %v87 = vld [vmem:[%s1 + $0xd4] sm:$0xf]
  %v88 = vld [vmem:[%s1 + $0xd8] sm:$0xf]
  %v89 = vld [vmem:[%s1 + $0xdc] sm:$0xf]
  %v90 = vld [vmem:[%s1 + $0xe0] sm:$0xf]
  %v91 = vld [vmem:[%s1 + $0xe4] sm:$0xf]
  %v92 = vld [vmem:[%s1 + $0xe8] sm:$0xf]
  %v93 = vld [vmem:[%s1 + $0xec] sm:$0xf]
  %v94 = vld [vmem:[%s1 + $0xf0] sm:$0xf]
  %v95 = vld [vmem:[%s1 + $0xf4] sm:$0xf]
  %v96 = vld [vmem:[%s1 + $0xf8] sm:$0xf]
  %v97 = vld [vmem:[%s1 + $0xfc] sm:$0xf]
  %v98 = vld [vmem:[%s1 + $0x100] sm:$0xf]
  %v99 = vld [vmem:[%s1 + $0x104] sm:$0xf]
  %v100 = vld [vmem:[%s1 + $0x108] sm:$0xf]
  %v101 = vld [vmem:[%s1 + $0x10c] sm:$0xf]
  %v102 = vld [vmem:[%s1 + $0x110] sm:$0xf]
  %v103 = vld [vmem:[%s1 + $0x114] sm:$0xf]
  %v104 = vld [vmem:[%s1 + $0x118] sm:$0xf]
  %v105 = vld [vmem:[%s1 + $0x11c] sm:$0xf]
  %v106 = vld [vmem:[%s1 + $0x120] sm:$0xf]
  %v107 = vld [vmem:[%s1 + $0x124] sm:$0xf]
  %v108 = vld [vmem:[%s1 + $0x128] sm:$0xf]
  %v109 = vld [vmem:[%s1 + $0x12c] sm:$0xf]
  %v110 = vld [vmem:[%s1 + $0x130] sm:$0xf]
  %v111 = vld [vmem:[%s1 + $0x134] sm:$0xf]
  %v112 = vld [vmem:[%s1 + $0x138] sm:$0xf]
  %v113 = vld [vmem:[%s1 + $0x13c] sm:$0xf]
  %v114 = vld [vmem:[%s1 + $0x140] sm:$0xf]
  %v115 = vld [vmem:[%s1 + $0x144] sm:$0xf]
  %v116 = vld [vmem:[%s1 + $0x148] sm:$0xf]
  %v117 = vld [vmem:[%s1 + $0x14c] sm:$0xf]
  %v118 = vld [vmem:[%s1 + $0x150] sm:$0xf]
  %v119 = vld [vmem:[%s1 + $0x154] sm:$0xf]
  %v120 = vld [vmem:[%s1 + $0x158] sm:$0xf]
  %v121 = vld [vmem:[%s1 + $0x15c] sm:$0xf]
  %v122 = vld [vmem:[%s1 + $0x160] sm:$0xf]
  %v123 = vld [vmem:[%s1 + $0x164] sm:$0xf]
  %v124 = vld [vmem:[%s1 + $0x168] sm:$0xf]
  %v125 = vld [vmem:[%s1 + $0x16c] sm:$0xf]
  %v126 = vld [vmem:[%s1 + $0x170] sm:$0xf]
  %v127 = vld [vmem:[%s1 + $0x174] sm:$0xf]
  %v128 = vld [vmem:[%s1 + $0x178] sm:$0xf]
  %v129 = vld [vmem:[%s1 + $0x17c] sm:$0xf]
  %v130 = vld [vmem:[%s1 + $0x180] sm:$0xf]
  %v131 = vld [vmem:[%s1 + $0x184] sm:$0xf]
  %v132 = vld [vmem:[%s1 + $0x188] sm:$0xf]
  %v133 = vld [vmem:[%s1 + $0x18c] sm:$0xf]
  %v134 = vld [vmem:[%s1 + $0x190] sm:$0xf]
  %v135 = vld [vmem:[%s1 + $0x194] sm:$0xf]
  %v136 = vld [vmem:[%s1 + $0x198] sm:$0xf]
  %v137 = vld [vmem:[%s1 + $0x19c] sm:$0xf]
  %v138 = vld [vmem:[%s1 + $0x1a0] sm:$0xf]
  %v139 = vld [vmem:[%s1 + $0x1a4] sm:$0xf]
  %v140 = vld [vmem:[%s1 + $0x1a8] sm:$0xf]
  %v141 = vld [vmem:[%s1 + $0x1ac] sm:$0xf]
  %v142 = vld [vmem:[%s1 + $0x1b0] sm:$0xf]
  %v143 = vld [vmem:[%s1 + $0x1b4] sm:$0xf]
  %v144 = vld [vmem:[%s1 + $0x1b8] sm:$0xf]
  %v145 = vld [vmem:[%s1 + $0x1bc] sm:$0xf]
  %v146 = vld [vmem:[%s1 + $0x1c0] sm:$0xf]
  %v147 = vld [vmem:[%s1 + $0x1c4] sm:$0xf]
  %v148 = vld [vmem:[%s1 + $0x1c8] sm:$0xf]
  %v149 = vld [vmem:[%s1 + $0x1cc] sm:$0xf]
  %v150 = vld [vmem:[%s1 + $0x1d0] sm:$0xf]
  %v151 = vld [vmem:[%s1 + $0x1d4] sm:$0xf]
  %v152 = vld [vmem:[%s1 + $0x1d8] sm:$0xf]
  %v153 = vld [vmem:[%s1 + $0x1dc] sm:$0xf]
  %v154 = vld [vmem:[%s1 + $0x1e0] sm:$0xf]
  %v155 = vld [vmem:[%s1 + $0x1e4] sm:$0xf]
  %v156 = vld [vmem:[%s1 + $0x1e8] sm:$0xf]
  %v157 = vld [vmem:[%s1 + $0x1ec] sm:$0xf]
  %v158 = vld [vmem:[%s1 + $0x1f0] sm:$0xf]
  %v159 = vld [vmem:[%s1 + $0x1f4] sm:$0xf]
  %v160 = vld [vmem:[%s1 + $0x1f8] sm:$0xf]
  %v161 = vld [vmem:[%s1 + $0x1fc] sm:$0xf]
  %v178 = vunpack.c.l.b16 %v18
  %v179 = vunpack.c.h.b16 %v18
  %v180 = vunpack.c.l.b16 %v19
  %v181 = vunpack.c.h.b16 %v19
  %v182 = vunpack.c.l.b16 %v20
  %v183 = vunpack.c.h.b16 %v20
  %v184 = vunpack.c.l.b16 %v21
  %v185 = vunpack.c.h.b16 %v21
  %v186 = vunpack.c.l.b16 %v22
  %v187 = vunpack.c.h.b16 %v22
  %v188 = vunpack.c.l.b16 %v23
  %v189 = vunpack.c.h.b16 %v23
  %v190 = vunpack.c.l.b16 %v24
  %v191 = vunpack.c.h.b16 %v24
  %v192 = vunpack.c.l.b16 %v25
  %v193 = vunpack.c.h.b16 %v25
  %v194 = vunpack.c.l.b16 %v26
  %v195 = vunpack.c.h.b16 %v26
  %v196 = vunpack.c.l.b16 %v27
  %v197 = vunpack.c.h.b16 %v27
  %v198 = vunpack.c.l.b16 %v28
  %v199 = vunpack.c.h.b16 %v28
  %v200 = vunpack.c.l.b16 %v29
  %v201 = vunpack.c.h.b16 %v29
  %v202 = vunpack.c.l.b16 %v30
  %v203 = vunpack.c.h.b16 %v30
  %v204 = vunpack.c.l.b16 %v31
  %v205 = vunpack.c.h.b16 %v31
  %v206 = vunpack.c.l.b16 %v32
  %v207 = vunpack.c.h.b16 %v32
  %v208 = vunpack.c.l.b16 %v33
  %v209 = vunpack.c.h.b16 %v33
  %v210 = vpack.c.b16 %v186, %v178
  %v211 = vpack.c.b16 %v187, %v179
  %v212 = vpack.c.b16 %v188, %v180
  %v213 = vpack.c.b16 %v189, %v181
  %v214 = vpack.c.b16 %v190, %v182
  %v215 = vpack.c.b16 %v191, %v183
  %v216 = vpack.c.b16 %v192, %v184
  %v217 = vpack.c.b16 %v193, %v185
  %v218 = vpack.c.b16 %v202, %v194
  %v219 = vpack.c.b16 %v203, %v195
  %v220 = vpack.c.b16 %v204, %v196
  %v221 = vpack.c.b16 %v205, %v197
  %v222 = vpack.c.b16 %v206, %v198
  %v223 = vpack.c.b16 %v207, %v199
  %v224 = vpack.c.b16 %v208, %v200
  %v225 = vpack.c.b16 %v209, %v201
  %v370 = vunpack.c.l.b16 %v34
  %v371 = vunpack.c.l.b16 %v35
  %v372 = vunpack.c.l.b16 %v36
  %v373 = vunpack.c.l.b16 %v37
  %v374 = vunpack.c.l.b16 %v38
  %v375 = vunpack.c.l.b16 %v39
  %v376 = vunpack.c.l.b16 %v40
  %v377 = vunpack.c.l.b16 %v41
  %v378 = vunpack.c.l.b16 %v42
  %v379 = vunpack.c.l.b16 %v43
  %v380 = vunpack.c.l.b16 %v44
  %v381 = vunpack.c.l.b16 %v45
  %v382 = vunpack.c.l.b16 %v46
  %v383 = vunpack.c.l.b16 %v47
  %v384 = vunpack.c.l.b16 %v48
  %v385 = vunpack.c.l.b16 %v49
  %v386 = vunpack.c.l.b16 %v50
  %v387 = vunpack.c.l.b16 %v51
  %v388 = vunpack.c.l.b16 %v52
  %v389 = vunpack.c.l.b16 %v53
  %v390 = vunpack.c.l.b16 %v54
  %v391 = vunpack.c.l.b16 %v55
  %v392 = vunpack.c.l.b16 %v56
  %v393 = vunpack.c.l.b16 %v57
  %v394 = vunpack.c.l.b16 %v58
  %v395 = vunpack.c.l.b16 %v59
  %v396 = vunpack.c.l.b16 %v60
  %v397 = vunpack.c.l.b16 %v61
  %v398 = vunpack.c.l.b16 %v62
  %v399 = vunpack.c.l.b16 %v63
  %v400 = vunpack.c.l.b16 %v64
  %v401 = vunpack.c.l.b16 %v65
  %v402 = vunpack.c.l.b16 %v66
  %v403 = vunpack.c.l.b16 %v67
  %v404 = vunpack.c.l.b16 %v68
  %v405 = vunpack.c.l.b16 %v69
  %v406 = vunpack.c.l.b16 %v70
  %v407 = vunpack.c.l.b16 %v71
  %v408 = vunpack.c.l.b16 %v72
  %v409 = vunpack.c.l.b16 %v73
  %v410 = vunpack.c.l.b16 %v74
  %v411 = vunpack.c.l.b16 %v75
  %v412 = vunpack.c.l.b16 %v76
  %v413 = vunpack.c.l.b16 %v77
  %v414 = vunpack.c.l.b16 %v78
  %v415 = vunpack.c.l.b16 %v79
  %v416 = vunpack.c.l.b16 %v80
  %v417 = vunpack.c.l.b16 %v81
  %v418 = vunpack.c.l.b16 %v82
  %v419 = vunpack.c.l.b16 %v83
  %v420 = vunpack.c.l.b16 %v84
  %v421 = vunpack.c.l.b16 %v85
  %v422 = vunpack.c.l.b16 %v86
  %v423 = vunpack.c.l.b16 %v87
  %v424 = vunpack.c.l.b16 %v88
  %v425 = vunpack.c.l.b16 %v89
  %v426 = vunpack.c.l.b16 %v90
  %v427 = vunpack.c.l.b16 %v91
  %v428 = vunpack.c.l.b16 %v92
  %v429 = vunpack.c.l.b16 %v93
  %v430 = vunpack.c.l.b16 %v94
  %v431 = vunpack.c.l.b16 %v95
  %v432 = vunpack.c.l.b16 %v96
  %v433 = vunpack.c.l.b16 %v97
  %v434 = vunpack.c.l.b16 %v98
  %v435 = vunpack.c.l.b16 %v99
  %v436 = vunpack.c.l.b16 %v100
  %v437 = vunpack.c.l.b16 %v101
  %v438 = vunpack.c.l.b16 %v102
  %v439 = vunpack.c.l.b16 %v103
  %v440 = vunpack.c.l.b16 %v104
  %v441 = vunpack.c.l.b16 %v105
  %v442 = vunpack.c.l.b16 %v106
  %v443 = vunpack.c.l.b16 %v107
  %v444 = vunpack.c.l.b16 %v108
  %v445 = vunpack.c.l.b16 %v109
  %v446 = vunpack.c.l.b16 %v110
  %v447 = vunpack.c.l.b16 %v111
  %v448 = vunpack.c.l.b16 %v112
  %v449 = vunpack.c.l.b16 %v113
  %v450 = vunpack.c.l.b16 %v114
  %v451 = vunpack.c.l.b16 %v115
  %v452 = vunpack.c.l.b16 %v116
  %v453 = vunpack.c.l.b16 %v117
  %v454 = vunpack.c.l.b16 %v118
  %v455 = vunpack.c.l.b16 %v119
  %v456 = vunpack.c.l.b16 %v120
  %v457 = vunpack.c.l.b16 %v121
  %v458 = vunpack.c.l.b16 %v122
  %v459 = vunpack.c.l.b16 %v123
  %v460 = vunpack.c.l.b16 %v124
  %v461 = vunpack.c.l.b16 %v125
  %v462 = vunpack.c.l.b16 %v126
  %v463 = vunpack.c.l.b16 %v127
  %v464 = vunpack.c.l.b16 %v128
  %v465 = vunpack.c.l.b16 %v129
  %v466 = vunpack.c.l.b16 %v130
  %v467 = vunpack.c.l.b16 %v131
  %v468 = vunpack.c.l.b16 %v132
  %v469 = vunpack.c.l.b16 %v133
  %v470 = vunpack.c.l.b16 %v134
  %v471 = vunpack.c.l.b16 %v135
  %v472 = vunpack.c.l.b16 %v136
  %v473 = vunpack.c.l.b16 %v137
  %v474 = vunpack.c.l.b16 %v138
  %v475 = vunpack.c.l.b16 %v139
  %v476 = vunpack.c.l.b16 %v140
  %v477 = vunpack.c.l.b16 %v141
  %v478 = vunpack.c.l.b16 %v142
  %v479 = vunpack.c.l.b16 %v143
  %v480 = vunpack.c.l.b16 %v144
  %v481 = vunpack.c.l.b16 %v145
  %v482 = vunpack.c.l.b16 %v146
  %v483 = vunpack.c.l.b16 %v147
  %v484 = vunpack.c.l.b16 %v148
  %v485 = vunpack.c.l.b16 %v149
  %v486 = vunpack.c.l.b16 %v150
  %v487 = vunpack.c.l.b16 %v151
  %v488 = vunpack.c.l.b16 %v152
  %v489 = vunpack.c.l.b16 %v153
  %v490 = vunpack.c.l.b16 %v154
  %v491 = vunpack.c.l.b16 %v155
  %v492 = vunpack.c.l.b16 %v156
  %v493 = vunpack.c.l.b16 %v157
  %v494 = vunpack.c.l.b16 %v158
  %v495 = vunpack.c.l.b16 %v159
  %v496 = vunpack.c.l.b16 %v160
  %v497 = vunpack.c.l.b16 %v161
  %v498 = vpack.c.b16 %v371, %v370
  %v499 = vpack.c.b16 %v373, %v372
  %v500 = vpack.c.b16 %v375, %v374
  %v501 = vpack.c.b16 %v377, %v376
  %v502 = vpack.c.b16 %v379, %v378
  %v503 = vpack.c.b16 %v381, %v380
  %v504 = vpack.c.b16 %v383, %v382
  %v505 = vpack.c.b16 %v385, %v384
  %v506 = vpack.c.b16 %v387, %v386
  %v507 = vpack.c.b16 %v389, %v388
  %v508 = vpack.c.b16 %v391, %v390
  %v509 = vpack.c.b16 %v393, %v392
  %v510 = vpack.c.b16 %v395, %v394
  %v511 = vpack.c.b16 %v397, %v396
  %v512 = vpack.c.b16 %v399, %v398
  %v513 = vpack.c.b16 %v401, %v400
  %v514 = vpack.c.b16 %v403, %v402
  %v515 = vpack.c.b16 %v405, %v404
  %v516 = vpack.c.b16 %v407, %v406
  %v517 = vpack.c.b16 %v409, %v408
  %v518 = vpack.c.b16 %v411, %v410
  %v519 = vpack.c.b16 %v413, %v412
  %v520 = vpack.c.b16 %v415, %v414
  %v521 = vpack.c.b16 %v417, %v416
  %v522 = vpack.c.b16 %v419, %v418
  %v523 = vpack.c.b16 %v421, %v420
  %v524 = vpack.c.b16 %v423, %v422
  %v525 = vpack.c.b16 %v425, %v424
  %v526 = vpack.c.b16 %v427, %v426
  %v527 = vpack.c.b16 %v429, %v428
  %v528 = vpack.c.b16 %v431, %v430
  %v529 = vpack.c.b16 %v433, %v432
  %v530 = vpack.c.b16 %v435, %v434
  %v531 = vpack.c.b16 %v437, %v436
  %v532 = vpack.c.b16 %v439, %v438
  %v533 = vpack.c.b16 %v441, %v440
  %v534 = vpack.c.b16 %v443, %v442
  %v535 = vpack.c.b16 %v445, %v444
  %v536 = vpack.c.b16 %v447, %v446
  %v537 = vpack.c.b16 %v449, %v448
  %v538 = vpack.c.b16 %v451, %v450
  %v539 = vpack.c.b16 %v453, %v452
  %v540 = vpack.c.b16 %v455, %v454
  %v541 = vpack.c.b16 %v457, %v456
  %v542 = vpack.c.b16 %v459, %v458
  %v543 = vpack.c.b16 %v461, %v460
  %v544 = vpack.c.b16 %v463, %v462
  %v545 = vpack.c.b16 %v465, %v464
  %v546 = vpack.c.b16 %v467, %v466
  %v547 = vpack.c.b16 %v469, %v468
  %v548 = vpack.c.b16 %v471, %v470
  %v549 = vpack.c.b16 %v473, %v472
  %v550 = vpack.c.b16 %v475, %v474
  %v551 = vpack.c.b16 %v477, %v476
  %v552 = vpack.c.b16 %v479, %v478
  %v553 = vpack.c.b16 %v481, %v480
  %v554 = vpack.c.b16 %v483, %v482
  %v555 = vpack.c.b16 %v485, %v484
  %v556 = vpack.c.b16 %v487, %v486
  %v557 = vpack.c.b16 %v489, %v488
  %v558 = vpack.c.b16 %v491, %v490
  %v559 = vpack.c.b16 %v493, %v492
  %v560 = vpack.c.b16 %v495, %v494
  %v561 = vpack.c.b16 %v497, %v496
  %626 = vmatprep.subr.bf16.mxu0 0
  %627 = vmatpush1.bf16.msra.mxu0 %v498
  %628 = vmatprep.subr.bf16.mxu0 0
  %629 = vmatpush1.bf16.msra.mxu0 %v499
  %630 = vmatprep.subr.bf16.mxu0 0
  %631 = vmatpush1.bf16.msra.mxu0 %v500
  %632 = vmatprep.subr.bf16.mxu0 0
  %633 = vmatpush1.bf16.msra.mxu0 %v501
  %634 = vmatprep.subr.bf16.mxu0 0
  %635 = vmatpush1.bf16.msra.mxu0 %v502
  %636 = vmatprep.subr.bf16.mxu0 0
  %637 = vmatpush1.bf16.msra.mxu0 %v503
  %638 = vmatprep.subr.bf16.mxu0 0
  %639 = vmatpush1.bf16.msra.mxu0 %v504
  %640 = vmatprep.subr.bf16.mxu0 0
  %641 = vmatpush1.bf16.msra.mxu0 %v505
  %642 = vmatprep.subr.bf16.mxu0 0
  %643 = vmatpush1.bf16.msra.mxu0 %v506
  %644 = vmatprep.subr.bf16.mxu0 0
  %645 = vmatpush1.bf16.msra.mxu0 %v507
  %646 = vmatprep.subr.bf16.mxu0 0
  %647 = vmatpush1.bf16.msra.mxu0 %v508
  %648 = vmatprep.subr.bf16.mxu0 0
  %649 = vmatpush1.bf16.msra.mxu0 %v509
  %650 = vmatprep.subr.bf16.mxu0 0
  %651 = vmatpush1.bf16.msra.mxu0 %v510
  %652 = vmatprep.subr.bf16.mxu0 0
  %653 = vmatpush1.bf16.msra.mxu0 %v511
  %654 = vmatprep.subr.bf16.mxu0 0
  %655 = vmatpush1.bf16.msra.mxu0 %v512
  %656 = vmatprep.subr.bf16.mxu0 0
  %657 = vmatpush1.bf16.msra.mxu0 %v513
  %658 = vmatprep.mubr.bf16.mxu0 %v211
  %659 = vmatmul.mubr.bf16.gmra.mrb[0].mxu0 %v210
  %v660 = vpop.f32.mrb[0].mxu0
  %v661 = vadd.f32 0.0, %v660
  %v662 = vpop.f32.mrb[0].mxu0
  %v663 = vpop.f32.mrb[0].mxu0
  %v664 = vadd.f32 0.0, %v663
  %v665 = vpop.f32.mrb[0].mxu0
  %666 = vmatprep.mubr.bf16.mxu0 %v219
  %667 = vmatmul.mubr.bf16.gmra.mrb[0].mxu0 %v218
  %v668 = vpop.f32.mrb[0].mxu0
  %v669 = vadd.f32 0.0, %v668
  %v670 = vpop.f32.mrb[0].mxu0
  %v671 = vpop.f32.mrb[0].mxu0
  %v672 = vadd.f32 0.0, %v671
  %v673 = vpop.f32.mrb[0].mxu0
  %674 = vdwg.mxu0
  %675 = vmatprep.subr.bf16.mxu0 0
  %676 = vmatpush1.bf16.msra.mxu0 %v514
  %677 = vmatprep.subr.bf16.mxu0 0
  %678 = vmatpush1.bf16.msra.mxu0 %v515
  %679 = vmatprep.subr.bf16.mxu0 0
  %680 = vmatpush1.bf16.msra.mxu0 %v516
  %681 = vmatprep.subr.bf16.mxu0 0
  %682 = vmatpush1.bf16.msra.mxu0 %v517
  %683 = vmatprep.subr.bf16.mxu0 0
  %684 = vmatpush1.bf16.msra.mxu0 %v518
  %685 = vmatprep.subr.bf16.mxu0 0
  %686 = vmatpush1.bf16.msra.mxu0 %v519
  %687 = vmatprep.subr.bf16.mxu0 0
  %688 = vmatpush1.bf16.msra.mxu0 %v520
  %689 = vmatprep.subr.bf16.mxu0 0
  %690 = vmatpush1.bf16.msra.mxu0 %v521
  %691 = vmatprep.subr.bf16.mxu0 0
  %692 = vmatpush1.bf16.msra.mxu0 %v522
  %693 = vmatprep.subr.bf16.mxu0 0
  %694 = vmatpush1.bf16.msra.mxu0 %v523
  %695 = vmatprep.subr.bf16.mxu0 0
  %696 = vmatpush1.bf16.msra.mxu0 %v524
  %697 = vmatprep.subr.bf16.mxu0 0
  %698 = vmatpush1.bf16.msra.mxu0 %v525
  %699 = vmatprep.subr.bf16.mxu0 0
  %700 = vmatpush1.bf16.msra.mxu0 %v526
  %701 = vmatprep.subr.bf16.mxu0 0
  %702 = vmatpush1.bf16.msra.mxu0 %v527
  %703 = vmatprep.subr.bf16.mxu0 0
  %704 = vmatpush1.bf16.msra.mxu0 %v528
  %705 = vmatprep.subr.bf16.mxu0 0
  %706 = vmatpush1.bf16.msra.mxu0 %v529
  %707 = vmatprep.mubr.bf16.mxu0 %v213
  %708 = vmatmul.mubr.bf16.gmra.mrb[0].mxu0 %v212
  %v709 = vpop.f32.mrb[0].mxu0
  %v710 = vadd.f32 %v661, %v709
  %v711 = vpop.f32.mrb[0].mxu0
  %v712 = vpop.f32.mrb[0].mxu0
  %v713 = vadd.f32 %v664, %v712
  %v714 = vpop.f32.mrb[0].mxu0
  %715 = vmatprep.mubr.bf16.mxu0 %v221
  %716 = vmatmul.mubr.bf16.gmra.mrb[0].mxu0 %v220
  %v717 = vpop.f32.mrb[0].mxu0
  %v718 = vadd.f32 %v669, %v717
  %v719 = vpop.f32.mrb[0].mxu0
  %v720 = vpop.f32.mrb[0].mxu0
  %v721 = vadd.f32 %v672, %v720
  %v722 = vpop.f32.mrb[0].mxu0
  %723 = vdwg.mxu0
  %724 = vmatprep.subr.bf16.mxu0 0
  %725 = vmatpush1.bf16.msra.mxu0 %v530
  %726 = vmatprep.subr.bf16.mxu0 0
  %727 = vmatpush1.bf16.msra.mxu0 %v531
  %728 = vmatprep.subr.bf16.mxu0 0
  %729 = vmatpush1.bf16.msra.mxu0 %v532
  %730 = vmatprep.subr.bf16.mxu0 0
  %731 = vmatpush1.bf16.msra.mxu0 %v533
  %732 = vmatprep.subr.bf16.mxu0 0
  %733 = vmatpush1.bf16.msra.mxu0 %v534
  %734 = vmatprep.subr.bf16.mxu0 0
  %735 = vmatpush1.bf16.msra.mxu0 %v535
  %736 = vmatprep.subr.bf16.mxu0 0
  %737 = vmatpush1.bf16.msra.mxu0 %v536
  %738 = vmatprep.subr.bf16.mxu0 0
  %739 = vmatpush1.bf16.msra.mxu0 %v537
  %740 = vmatprep.subr.bf16.mxu0 0
  %741 = vmatpush1.bf16.msra.mxu0 %v538
  %742 = vmatprep.subr.bf16.mxu0 0
  %743 = vmatpush1.bf16.msra.mxu0 %v539
  %744 = vmatprep.subr.bf16.mxu0 0
  %745 = vmatpush1.bf16.msra.mxu0 %v540
  %746 = vmatprep.subr.bf16.mxu0 0
  %747 = vmatpush1.bf16.msra.mxu0 %v541
  %748 = vmatprep.subr.bf16.mxu0 0
  %749 = vmatpush1.bf16.msra.mxu0 %v542
  %750 = vmatprep.subr.bf16.mxu0 0
  %751 = vmatpush1.bf16.msra.mxu0 %v543
  %752 = vmatprep.subr.bf16.mxu0 0
  %753 = vmatpush1.bf16.msra.mxu0 %v544
  %754 = vmatprep.subr.bf16.mxu0 0
  %755 = vmatpush1.bf16.msra.mxu0 %v545
  %756 = vmatprep.mubr.bf16.mxu0 %v215
  %757 = vmatmul.mubr.bf16.gmra.mrb[0].mxu0 %v214
  %v758 = vpop.f32.mrb[0].mxu0
  %v759 = vadd.f32 %v710, %v758
  %v760 = vpop.f32.mrb[0].mxu0
  %v761 = vpop.f32.mrb[0].mxu0
  %v762 = vadd.f32 %v713, %v761
  %v763 = vpop.f32.mrb[0].mxu0
  %764 = vmatprep.mubr.bf16.mxu0 %v223
  %765 = vmatmul.mubr.bf16.gmra.mrb[0].mxu0 %v222
  %v766 = vpop.f32.mrb[0].mxu0
  %v767 = vadd.f32 %v718, %v766
  %v768 = vpop.f32.mrb[0].mxu0
  %v769 = vpop.f32.mrb[0].mxu0
  %v770 = vadd.f32 %v721, %v769
  %v771 = vpop.f32.mrb[0].mxu0
  %772 = vdwg.mxu0
  %773 = vmatprep.subr.bf16.mxu0 0
  %774 = vmatpush1.bf16.msra.mxu0 %v546
  %775 = vmatprep.subr.bf16.mxu0 0
  %776 = vmatpush1.bf16.msra.mxu0 %v547
  %777 = vmatprep.subr.bf16.mxu0 0
  %778 = vmatpush1.bf16.msra.mxu0 %v548
  %779 = vmatprep.subr.bf16.mxu0 0
  %780 = vmatpush1.bf16.msra.mxu0 %v549
  %781 = vmatprep.subr.bf16.mxu0 0
  %782 = vmatpush1.bf16.msra.mxu0 %v550
  %783 = vmatprep.subr.bf16.mxu0 0
  %784 = vmatpush1.bf16.msra.mxu0 %v551
  %785 = vmatprep.subr.bf16.mxu0 0
  %786 = vmatpush1.bf16.msra.mxu0 %v552
  %787 = vmatprep.subr.bf16.mxu0 0
  %788 = vmatpush1.bf16.msra.mxu0 %v553
  %789 = vmatprep.subr.bf16.mxu0 0
  %790 = vmatpush1.bf16.msra.mxu0 %v554
  %791 = vmatprep.subr.bf16.mxu0 0
  %792 = vmatpush1.bf16.msra.mxu0 %v555
  %793 = vmatprep.subr.bf16.mxu0 0
  %794 = vmatpush1.bf16.msra.mxu0 %v556
  %795 = vmatprep.subr.bf16.mxu0 0
  %796 = vmatpush1.bf16.msra.mxu0 %v557
  %797 = vmatprep.subr.bf16.mxu0 0
  %798 = vmatpush1.bf16.msra.mxu0 %v558
  %799 = vmatprep.subr.bf16.mxu0 0
  %800 = vmatpush1.bf16.msra.mxu0 %v559
  %801 = vmatprep.subr.bf16.mxu0 0
  %802 = vmatpush1.bf16.msra.mxu0 %v560
  %803 = vmatprep.subr.bf16.mxu0 0
  %804 = vmatpush1.bf16.msra.mxu0 %v561
  %805 = vmatprep.mubr.bf16.mxu0 %v217
  %806 = vmatmul.mubr.bf16.gmra.mrb[0].mxu0 %v216
  %v807 = vpop.f32.mrb[0].mxu0
  %v808 = vadd.f32 %v759, %v807
  %v809 = vpop.f32.mrb[0].mxu0
  %v810 = vpop.f32.mrb[0].mxu0
  %v811 = vadd.f32 %v762, %v810
  %v812 = vpop.f32.mrb[0].mxu0
  %813 = vmatprep.mubr.bf16.mxu0 %v225
  %814 = vmatmul.mubr.bf16.gmra.mrb[0].mxu0 %v224
  %v815 = vpop.f32.mrb[0].mxu0
  %v816 = vadd.f32 %v767, %v815
  %v817 = vpop.f32.mrb[0].mxu0
  %v818 = vpop.f32.mrb[0].mxu0
  %v819 = vadd.f32 %v770, %v818
  %v820 = vpop.f32.mrb[0].mxu0
  %821 = vdwg.mxu0
  %v822 = vlaneseq
  %v823 = vshrl.u32 %v822, 7
  %v824 = vadd.s32 %v823, 8
  %v825 = vadd.s32 %v823, 16
  %v826 = vadd.s32 %v823, 24
  %vm827 = vcmp.lt.s32.totalorder %v823, 32
  %vm828 = vcmp.lt.s32.totalorder %v824, 32
  %vm829 = vcmp.lt.s32.totalorder %v825, 32
  %vm830 = vcmp.lt.s32.totalorder %v826, 32
  %v831 = vsel %vm827, %v808, 0.0
  %v832 = vsel %vm828, %v811, 0.0
  %v833 = vsel %vm829, %v816, 0.0
  %v834 = vsel %vm830, %v819, 0.0
  %v835 = vadd.f32 %v831, %v832
  %v836 = vadd.f32 %v835, %v833
  %v837 = vadd.f32 %v836, %v834
  %v838 = vrot.slane %v837, 4
  %v839 = vadd.f32 %v837, %v838
  %v840 = vrot.slane %v839, 2
  %v841 = vadd.f32 %v839, %v840
  %v842 = vrot.slane %v841, 1
  %v843 = vadd.f32 %v841, %v842
  %v844 = vmul.f32 %v843, 0.03125
  %v845 = vmul.f32 %v831, %v831
  %v846 = vmul.f32 %v832, %v832
  %v847 = vmul.f32 %v833, %v833
  %v848 = vmul.f32 %v834, %v834
  %v849 = vadd.f32 %v845, %v846
  %v850 = vadd.f32 %v849, %v847
  %v851 = vadd.f32 %v850, %v848
  %v852 = vrot.slane %v851, 4
  %v853 = vadd.f32 %v851, %v852
  %v854 = vrot.slane %v853, 2
  %v855 = vadd.f32 %v853, %v854
  %v856 = vrot.slane %v855, 1
  %v857 = vadd.f32 %v855, %v856
  %v858 = vmul.f32 %v857, 0.03125
  %v859 = vmul.f32 %v844, %v844
  %v860 = vsub.f32 %v858, %v859
  %v861 = vmax.f32 %v860, 0.0
  %v862 = vadd.f32 %v861, 1e-05
  %v863 = vrsqrt.pop %v862
  %v864 = vld [vmem:[%s2] sm:$0x1]
  %v865 = vmul.f32 %v864, %v863
  %v866 = vld [vmem:[%s3] sm:$0x1]
  %v867 = vmul.f32 %v844, %v865
  %v868 = vsub.f32 %v866, %v867
  %v870 = vlaneseq
  %v871 = vshrl.u32 %v870, 7
  %v872 = vsub.s32 0, %v871
  %v873 = vrot.slane %v865, %v872
  %v875 = vmul.f32 %v808, %v873
  %v876 = vmul.f32 %v811, %v873
  %v877 = vmul.f32 %v816, %v873
  %v878 = vmul.f32 %v819, %v873
  %v880 = vlaneseq
  %v881 = vshrl.u32 %v880, 7
  %v882 = vsub.s32 0, %v881
  %v883 = vrot.slane %v868, %v882
  %v885 = vadd.f32 %v875, %v883
  %v886 = vadd.f32 %v876, %v883
  %v887 = vadd.f32 %v877, %v883
  %v888 = vadd.f32 %v878, %v883
  %vm889 = vcmp.gt.f32.partialorder %v885, 0.0
  %vm890 = vcmp.gt.f32.partialorder %v886, 0.0
  %vm891 = vcmp.gt.f32.partialorder %v887, 0.0
  %vm892 = vcmp.gt.f32.partialorder %v888, 0.0
  %v893 = vmul.f32 %v885, 0.2
  %v894 = vmul.f32 %v886, 0.2
  %v895 = vmul.f32 %v887, 0.2
  %v896 = vmul.f32 %v888, 0.2
  %v897 = vsel %vm889, %v885, %v893
  %v898 = vsel %vm890, %v886, %v894
  %v899 = vsel %vm891, %v887, %v895
  %v900 = vsel %vm892, %v888, %v896
  %v901 = vpack.c.bf16 %v898, %v897
  %v902 = vpack.c.bf16 %v900, %v899
  %v905 = vunpack.c.l.b16 %v901
  %v906 = vunpack.c.h.b16 %v901
  %v907 = vunpack.c.l.b16 %v902
  %v908 = vunpack.c.h.b16 %v902
  %v909 = vpack.c.b16 %v905, %v905
  %v910 = vpack.c.b16 %v906, %v906
  %v911 = vpack.c.b16 %v907, %v907
  %v912 = vpack.c.b16 %v908, %v908
  %917 = vst [vmem:[%s4] sm:$0xf] %v909
  %918 = vst [vmem:[%s4 + $0x4] sm:$0xf] %v910
  %919 = vst [vmem:[%s4 + $0x8] sm:$0xf] %v911
  %920 = vst [vmem:[%s4 + $0xc] sm:$0xf] %v912
  // Predicated region
  $region18: #{discriminator_wgan_forward.5} parent=0 // pred_check
    _
  $region19: #{discriminator_wgan_forward.5} parent=0 // pred_check_branch
    %922 = sbr.rel (0) target = $region21
  $region20: #{discriminator_wgan_forward.5} parent=0 // pred_region
    _
  $region21: #{discriminator_wgan_forward.5} parent=0 // pred_fallthru
    _
  // Predicated region
  $region22: #{discriminator_wgan_forward.5} parent=0 // pred_check
    _
  $region23: #{discriminator_wgan_forward.5} parent=0 // pred_check_branch
    %924 = sbr.rel (0) target = $region25
  $region24: #{discriminator_wgan_forward.5} parent=0 // pred_region
    _
  $region25: #{discriminator_wgan_forward.5} parent=0 // pred_fallthru
    _

// kernel: discriminator_wgan_forward.6
$region0: #{discriminator_wgan_forward.6}
  #allocation0 [shape = 'u32[]', space=smem, size = 0x4, offset = 0x4, fixed_abs, tag = 'smem constant byte address 0x4 - core index']
  #allocation1 [shape = 'u32[144,128]{1,0:T(1,128)}', space=vmem, size = 0x12000, scoped, tag = 'internal scratch']
  %s0 = inlined_call_operand.vmem [shape: bf16[16,2048], index: 0, kind: input, shape index: {}]
  %s1 = inlined_call_operand.vmem [shape: bf16[2048,256], index: 1, kind: input, shape index: {}]
  %s2 = inlined_call_operand.vmem [shape: f32[1,256], index: 2, kind: input, shape index: {}]
  %s3 = inlined_call_operand.vmem [shape: f32[1,256], index: 3, kind: input, shape index: {}]
  %s4 = inlined_call_operand.vmem [shape: bf16[16,256], index: 4, kind: output, shape index: {}]
  %s5 = sld [smem:[#allocation0]]
  $region127: #{discriminator_wgan_forward.6} parent=0
    _
  %s7 = ssub.s32 1, %s5
  %s8 = scalar_select 0, %s7, %s5
  $region1: #{discriminator_wgan_forward.6} parent=0
    #allocation2 [shape = 'u8[1048576]{0}', space=vmem, size = 0x100000, scoped, tag = 'input window, operand 1']
    #allocation3 [shape = 'u8[8192]{0}', space=vmem, size = 0x2000, scoped, tag = 'output window, operand 0']
    loop: start=0, step=1, limit=4
    $region2: #{discriminator_wgan_forward.6} parent=1 // loop_pre_header
      _
    $region3: #{discriminator_wgan_forward.6} parent=1 // loop_header
      %s10 = sphi 0, %s14
      %p11 = scmp.ge.s32.totalorder %s10, 4
      %s18 = sphi 0, %s18
      %s20 = sphi 0, %s18
      %s21 = sphi 0, %s20
      %s35 = sphi 0, %s21
      %s41 = sphi 0, %s43
      %s44 = sphi 0, %s41
      %s45 = sphi 0, %s44
      %s61 = sphi 0, %s45
      %s67 = sphi 0, %s69
      %s70 = sphi 0, %s67
      %s71 = sphi 0, %s70
      %s87 = sphi 0, %s71
      %s93 = sphi 0, %s95
      %s96 = sphi 0, %s93
      %s97 = sphi 0, %s96
      %s113 = sphi 0, %s97
      %s119 = sphi 0, %s121
      %s122 = sphi 0, %s119
      %s123 = sphi 0, %s122
      %s139 = sphi 0, %s123
    $region4: #{discriminator_wgan_forward.6} parent=1 // loop_header_branch
      %13 = sbr.rel (%p11) target = $region8
    $region5: #{discriminator_wgan_forward.6} parent=1 // loop_body
      %s15 = ssub.s32 %s10, 1
      %s16 = ssub.s32 %s10, 2
      %s17 = sadd.s32 %s10, 1
      %s19 = sadd.s32 %s18, 1
      %p22 = scmp.eq.s32.totalorder %s10, 1
      %p23 = scmp.ne.s32.totalorder %s18, %s20
      %p24 = scmp.eq.s32.totalorder %s10, 0
      %p25 = por %p23, %p24
      %p26 = scmp.ne.s32.totalorder %s18, %s20
      %p27 = scmp.eq.s32.totalorder %s15, 1
      %p28 = por %p26, %p27
      %p29 = scmp.ne.s32.totalorder %s20, %s21
      %p30 = scmp.eq.s32.totalorder %s15, 0
      %p31 = por %p29, %p30
      %p32 = scmp.ne.s32.totalorder %s20, %s21
      %p33 = scmp.eq.s32.totalorder %s16, 1
      %p34 = por %p32, %p33
      %p36 = scmp.ne.s32.totalorder %s21, %s35
      %p37 = scmp.eq.s32.totalorder %s16, 0
      %p38 = por %p36, %p37
      %s39 = ssub.s32 %s10, %s17
      %p40 = scmp.eq.s32.totalorder %s39, 0
      %s42 = sadd.s32 %s41, 1
      %s43 = scalar_select %p40, %s41, %s42
      %p46 = pneg %p40
      %p47 = scmp.eq.s32.totalorder %s10, 1
      %p48 = por %p46, %p47
      %p49 = scmp.ne.s32.totalorder %s41, %s44
      %p50 = scmp.eq.s32.totalorder %s10, 0
      %p51 = por %p49, %p50
      %p52 = scmp.ne.s32.totalorder %s41, %s44
      %p53 = scmp.eq.s32.totalorder %s15, 1
      %p54 = por %p52, %p53
      %p55 = scmp.ne.s32.totalorder %s44, %s45
      %p56 = scmp.eq.s32.totalorder %s15, 0
      %p57 = por %p55, %p56
      %p58 = scmp.ne.s32.totalorder %s44, %s45
      %p59 = scmp.eq.s32.totalorder %s16, 1
      %p60 = por %p58, %p59
      %p62 = scmp.ne.s32.totalorder %s45, %s61
      %p63 = scmp.eq.s32.totalorder %s16, 0
      %p64 = por %p62, %p63
      %s65 = ssub.s32 %s10, %s17
      %p66 = scmp.eq.s32.totalorder %s65, 0
      %s68 = sadd.s32 %s67, 1
      %s69 = scalar_select %p66, %s67, %s68
      %p72 = pneg %p66
      %p73 = scmp.eq.s32.totalorder %s10, 1
      %p74 = por %p72, %p73
      %p75 = scmp.ne.s32.totalorder %s67, %s70
      %p76 = scmp.eq.s32.totalorder %s10, 0
      %p77 = por %p75, %p76
      %p78 = scmp.ne.s32.totalorder %s67, %s70
      %p79 = scmp.eq.s32.totalorder %s15, 1
      %p80 = por %p78, %p79
      %p81 = scmp.ne.s32.totalorder %s70, %s71
      %p82 = scmp.eq.s32.totalorder %s15, 0
      %p83 = por %p81, %p82
      %p84 = scmp.ne.s32.totalorder %s70, %s71
      %p85 = scmp.eq.s32.totalorder %s16, 1
      %p86 = por %p84, %p85
      %p88 = scmp.ne.s32.totalorder %s71, %s87
      %p89 = scmp.eq.s32.totalorder %s16, 0
      %p90 = por %p88, %p89
      %s91 = ssub.s32 %s10, %s17
      %p92 = scmp.eq.s32.totalorder %s91, 0
      %s94 = sadd.s32 %s93, 1
      %s95 = scalar_select %p92, %s93, %s94
      %p98 = pneg %p92
      %p99 = scmp.eq.s32.totalorder %s10, 1
      %p100 = por %p98, %p99
      %p101 = scmp.ne.s32.totalorder %s93, %s96
      %p102 = scmp.eq.s32.totalorder %s10, 0
      %p103 = por %p101, %p102
      %p104 = scmp.ne.s32.totalorder %s93, %s96
      %p105 = scmp.eq.s32.totalorder %s15, 1
      %p106 = por %p104, %p105
      %p107 = scmp.ne.s32.totalorder %s96, %s97
      %p108 = scmp.eq.s32.totalorder %s15, 0
      %p109 = por %p107, %p108
      %p110 = scmp.ne.s32.totalorder %s96, %s97
      %p111 = scmp.eq.s32.totalorder %s16, 1
      %p112 = por %p110, %p111
      %p114 = scmp.ne.s32.totalorder %s97, %s113
      %p115 = scmp.eq.s32.totalorder %s16, 0
      %p116 = por %p114, %p115
      %s117 = ssub.s32 %s10, %s17
      %p118 = scmp.eq.s32.totalorder %s117, 0
      %s120 = sadd.s32 %s119, 1
      %s121 = scalar_select %p118, %s119, %s120
      %p124 = pneg %p118
      %p125 = scmp.eq.s32.totalorder %s10, 1
      %p126 = por %p124, %p125
      %p127 = scmp.ne.s32.totalorder %s119, %s122
      %p128 = scmp.eq.s32.totalorder %s10, 0
      %p129 = por %p127, %p128
      %p130 = scmp.ne.s32.totalorder %s119, %s122
      %p131 = scmp.eq.s32.totalorder %s15, 1
      %p132 = por %p130, %p131
      %p133 = scmp.ne.s32.totalorder %s122, %s123
      %p134 = scmp.eq.s32.totalorder %s15, 0
      %p135 = por %p133, %p134
      %p136 = scmp.ne.s32.totalorder %s122, %s123
      %p137 = scmp.eq.s32.totalorder %s16, 1
      %p138 = por %p136, %p137
      %p140 = scmp.ne.s32.totalorder %s123, %s139
      %p141 = scmp.eq.s32.totalorder %s16, 0
      %p142 = por %p140, %p141
      %p143 = scmp.le.s32.totalorder 1, %s10
      %p144 = scmp.lt.s32.totalorder %s10, 3
      %p145 = pnand %p143, %p144
      %p146 = pneg %p145
      // Predicated region
      $region9: #{discriminator_wgan_forward.6} parent=5 // pred_check
        _
      $region10: #{discriminator_wgan_forward.6} parent=5 // pred_check_branch
        %148 = sbr.rel (%p145) target = $region12
      $region11: #{discriminator_wgan_forward.6} parent=5 // pred_region
        %s149 = ssub.s32 %s10, 1
        // Predicated region
        $region13: #{discriminator_wgan_forward.6} parent=11 // pred_check
          %p150 = pneg %p31
        $region14: #{discriminator_wgan_forward.6} parent=11 // pred_check_branch
          %152 = sbr.rel (%p150) target = $region16
        $region15: #{discriminator_wgan_forward.6} parent=11 // pred_region
          _
        $region16: #{discriminator_wgan_forward.6} parent=11 // pred_fallthru
          _
      $region12: #{discriminator_wgan_forward.6} parent=5 // pred_fallthru
        _
      %p153 = scmp.lt.s32.totalorder %s10, 2
      // Predicated region
      $region17: #{discriminator_wgan_forward.6} parent=5 // pred_check
        %p154 = pneg %p153
      $region18: #{discriminator_wgan_forward.6} parent=5 // pred_check_branch
        %156 = sbr.rel (%p154) target = $region20
      $region19: #{discriminator_wgan_forward.6} parent=5 // pred_region
        // Predicated region
        $region21: #{discriminator_wgan_forward.6} parent=19 // pred_check
          %p157 = pneg %p51
        $region22: #{discriminator_wgan_forward.6} parent=19 // pred_check_branch
          %159 = sbr.rel (%p157) target = $region24
        $region23: #{discriminator_wgan_forward.6} parent=19 // pred_region
          %s160 = sand.u32 %s41, 1
          %s161 = sand.u32 %s41, 1
          %s162 = smul.addr %s161, 1024
          %s163 = scalar_lea.vmem [#allocation2], %s162
          %s164 = smul.addr %s10, 4
          %s165 = scalar_lea.vmem %s1, %s164
          // Predicated region
          $region25: #{discriminator_wgan_forward.6} parent=23 // pred_check
            _
          $region26: #{discriminator_wgan_forward.6} parent=23 // pred_check_branch
            %167 = sbr.rel (0) target = $region28
          $region27: #{discriminator_wgan_forward.6} parent=23 // pred_region
            // Predicated region
            $region29: #{discriminator_wgan_forward.6} parent=27 // pred_check
              _
            $region30: #{discriminator_wgan_forward.6} parent=27 // pred_check_branch
              %169 = sbr.rel target = $region32
            $region31: #{discriminator_wgan_forward.6} parent=27 // pred_region
              // Predicated region
              $region44: #{discriminator_wgan_forward.6} parent=31 // pred_check
                _
              $region45: #{discriminator_wgan_forward.6} parent=31 // pred_check_branch
                %694 = sbr.rel (0) target = $region47
              $region46: #{discriminator_wgan_forward.6} parent=31 // pred_region
                loop: start=0, step=1, limit=1
                $region48: #{discriminator_wgan_forward.6} parent=46 // loop_pre_header
                  _
                $region49: #{discriminator_wgan_forward.6} parent=46 // loop_header
                  %s696 = sphi 0, %s700
                  %p697 = scmp.ge.s32.totalorder %s696, 1
                  %s701 = sphi %s165, %s165
                  %s702 = sphi %s163, %s163
                $region50: #{discriminator_wgan_forward.6} parent=46 // loop_header_branch
                  %699 = sbr.rel (%p697) target = $region54
                $region51: #{discriminator_wgan_forward.6} parent=46 // loop_body
                  _
                $region52: #{discriminator_wgan_forward.6} parent=46 // loop_footer
                  %s700 = sadd.s32 1, %s696
                $region53: #{discriminator_wgan_forward.6} parent=46 // loop_footer_branch
                  %695 = sbr.rel target = $region49
                $region54: #{discriminator_wgan_forward.6} parent=46 // loop_exit
                  _
                loop: start=0, step=1, limit=1
                $region55: #{discriminator_wgan_forward.6} parent=46 // loop_pre_header
                  _
                $region56: #{discriminator_wgan_forward.6} parent=46 // loop_header
                  %s705 = sphi 0, %s709
                  %p706 = scmp.ge.s32.totalorder %s705, 1
                  %s710 = sphi %s165, %s165
                  %s711 = sphi %s163, %s163
                $region57: #{discriminator_wgan_forward.6} parent=46 // loop_header_branch
                  %708 = sbr.rel (%p706) target = $region61
                $region58: #{discriminator_wgan_forward.6} parent=46 // loop_body
                  %v712 = vld [vmem:[%s710] sm:$0xf]
                  %713 = vst [vmem:[%s711] sm:$0xf] %v712
                  %v714 = vld [vmem:[%s710 + $0x8] sm:$0xf]
                  %715 = vst [vmem:[%s711 + $0x4] sm:$0xf] %v714
                  %v716 = vld [vmem:[%s710 + $0x10] sm:$0xf]
                  %717 = vst [vmem:[%s711 + $0x8] sm:$0xf] %v716
                  %v718 = vld [vmem:[%s710 + $0x18] sm:$0xf]
                  %719 = vst [vmem:[%s711 + $0xc] sm:$0xf] %v718
                  %v720 = vld [vmem:[%s710 + $0x20] sm:$0xf]
                  %721 = vst [vmem:[%s711 + $0x10] sm:$0xf] %v720
                  %v722 = vld [vmem:[%s710 + $0x28] sm:$0xf]
                  %723 = vst [vmem:[%s711 + $0x14] sm:$0xf] %v722
                  %v724 = vld [vmem:[%s710 + $0x30] sm:$0xf]
                  %725 = vst [vmem:[%s711 + $0x18] sm:$0xf] %v724
                  %v726 = vld [vmem:[%s710 + $0x38] sm:$0xf]
                  %727 = vst [vmem:[%s711 + $0x1c] sm:$0xf] %v726
                  %v728 = vld [vmem:[%s710 + $0x40] sm:$0xf]
                  %729 = vst [vmem:[%s711 + $0x20] sm:$0xf] %v728
                  %v730 = vld [vmem:[%s710 + $0x48] sm:$0xf]
                  %731 = vst [vmem:[%s711 + $0x24] sm:$0xf] %v730
                  %v732 = vld [vmem:[%s710 + $0x50] sm:$0xf]
                  %733 = vst [vmem:[%s711 + $0x28] sm:$0xf] %v732
                  %v734 = vld [vmem:[%s710 + $0x58] sm:$0xf]
                  %735 = vst [vmem:[%s711 + $0x2c] sm:$0xf] %v734
                  %v736 = vld [vmem:[%s710 + $0x60] sm:$0xf]
                  %737 = vst [vmem:[%s711 + $0x30] sm:$0xf] %v736
                  %v738 = vld [vmem:[%s710 + $0x68] sm:$0xf]
                  %739 = vst [vmem:[%s711 + $0x34] sm:$0xf] %v738
                  %v740 = vld [vmem:[%s710 + $0x70] sm:$0xf]
                  %741 = vst [vmem:[%s711 + $0x38] sm:$0xf] %v740
                  %v742 = vld [vmem:[%s710 + $0x78] sm:$0xf]
                  %743 = vst [vmem:[%s711 + $0x3c] sm:$0xf] %v742
                  %v744 = vld [vmem:[%s710 + $0x80] sm:$0xf]
                  %745 = vst [vmem:[%s711 + $0x40] sm:$0xf] %v744
                  %v746 = vld [vmem:[%s710 + $0x88] sm:$0xf]
                  %747 = vst [vmem:[%s711 + $0x44] sm:$0xf] %v746
                  %v748 = vld [vmem:[%s710 + $0x90] sm:$0xf]
                  %749 = vst [vmem:[%s711 + $0x48] sm:$0xf] %v748
                  %v750 = vld [vmem:[%s710 + $0x98] sm:$0xf]
                  %751 = vst [vmem:[%s711 + $0x4c] sm:$0xf] %v750
                  %v752 = vld [vmem:[%s710 + $0xa0] sm:$0xf]
                  %753 = vst [vmem:[%s711 + $0x50] sm:$0xf] %v752
                  %v754 = vld [vmem:[%s710 + $0xa8] sm:$0xf]
                  %755 = vst [vmem:[%s711 + $0x54] sm:$0xf] %v754
                  %v756 = vld [vmem:[%s710 + $0xb0] sm:$0xf]
                  %757 = vst [vmem:[%s711 + $0x58] sm:$0xf] %v756
                  %v758 = vld [vmem:[%s710 + $0xb8] sm:$0xf]
                  %759 = vst [vmem:[%s711 + $0x5c] sm:$0xf] %v758
                  %v760 = vld [vmem:[%s710 + $0xc0] sm:$0xf]
                  %761 = vst [vmem:[%s711 + $0x60] sm:$0xf] %v760
                  %v762 = vld [vmem:[%s710 + $0xc8] sm:$0xf]
                  %763 = vst [vmem:[%s711 + $0x64] sm:$0xf] %v762
                  %v764 = vld [vmem:[%s710 + $0xd0] sm:$0xf]
                  %765 = vst [vmem:[%s711 + $0x68] sm:$0xf] %v764
                  %v766 = vld [vmem:[%s710 + $0xd8] sm:$0xf]
                  %767 = vst [vmem:[%s711 + $0x6c] sm:$0xf] %v766
                  %v768 = vld [vmem:[%s710 + $0xe0] sm:$0xf]
                  %769 = vst [vmem:[%s711 + $0x70] sm:$0xf] %v768
                  %v770 = vld [vmem:[%s710 + $0xe8] sm:$0xf]
                  %771 = vst [vmem:[%s711 + $0x74] sm:$0xf] %v770
                  %v772 = vld [vmem:[%s710 + $0xf0] sm:$0xf]
                  %773 = vst [vmem:[%s711 + $0x78] sm:$0xf] %v772
                  %v774 = vld [vmem:[%s710 + $0xf8] sm:$0xf]
                  %775 = vst [vmem:[%s711 + $0x7c] sm:$0xf] %v774
                  %v776 = vld [vmem:[%s710 + $0x100] sm:$0xf]
                  %777 = vst [vmem:[%s711 + $0x80] sm:$0xf] %v776
                  %v778 = vld [vmem:[%s710 + $0x108] sm:$0xf]
                  %779 = vst [vmem:[%s711 + $0x84] sm:$0xf] %v778
                  %v780 = vld [vmem:[%s710 + $0x110] sm:$0xf]
                  %781 = vst [vmem:[%s711 + $0x88] sm:$0xf] %v780
                  %v782 = vld [vmem:[%s710 + $0x118] sm:$0xf]
                  %783 = vst [vmem:[%s711 + $0x8c] sm:$0xf] %v782
                  %v784 = vld [vmem:[%s710 + $0x120] sm:$0xf]
                  %785 = vst [vmem:[%s711 + $0x90] sm:$0xf] %v784
                  %v786 = vld [vmem:[%s710 + $0x128] sm:$0xf]
                  %787 = vst [vmem:[%s711 + $0x94] sm:$0xf] %v786
                  %v788 = vld [vmem:[%s710 + $0x130] sm:$0xf]
                  %789 = vst [vmem:[%s711 + $0x98] sm:$0xf] %v788
                  %v790 = vld [vmem:[%s710 + $0x138] sm:$0xf]
                  %791 = vst [vmem:[%s711 + $0x9c] sm:$0xf] %v790
                  %v792 = vld [vmem:[%s710 + $0x140] sm:$0xf]
                  %793 = vst [vmem:[%s711 + $0xa0] sm:$0xf] %v792
                  %v794 = vld [vmem:[%s710 + $0x148] sm:$0xf]
                  %795 = vst [vmem:[%s711 + $0xa4] sm:$0xf] %v794
                  %v796 = vld [vmem:[%s710 + $0x150] sm:$0xf]
                  %797 = vst [vmem:[%s711 + $0xa8] sm:$0xf] %v796
                  %v798 = vld [vmem:[%s710 + $0x158] sm:$0xf]
                  %799 = vst [vmem:[%s711 + $0xac] sm:$0xf] %v798
                  %v800 = vld [vmem:[%s710 + $0x160] sm:$0xf]
                  %801 = vst [vmem:[%s711 + $0xb0] sm:$0xf] %v800
                  %v802 = vld [vmem:[%s710 + $0x168] sm:$0xf]
                  %803 = vst [vmem:[%s711 + $0xb4] sm:$0xf] %v802
                  %v804 = vld [vmem:[%s710 + $0x170] sm:$0xf]
                  %805 = vst [vmem:[%s711 + $0xb8] sm:$0xf] %v804
                  %v806 = vld [vmem:[%s710 + $0x178] sm:$0xf]
                  %807 = vst [vmem:[%s711 + $0xbc] sm:$0xf] %v806
                  %v808 = vld [vmem:[%s710 + $0x180] sm:$0xf]
                  %809 = vst [vmem:[%s711 + $0xc0] sm:$0xf] %v808
                  %v810 = vld [vmem:[%s710 + $0x188] sm:$0xf]
                  %811 = vst [vmem:[%s711 + $0xc4] sm:$0xf] %v810
                  %v812 = vld [vmem:[%s710 + $0x190] sm:$0xf]
                  %813 = vst [vmem:[%s711 + $0xc8] sm:$0xf] %v812
                  %v814 = vld [vmem:[%s710 + $0x198] sm:$0xf]
                  %815 = vst [vmem:[%s711 + $0xcc] sm:$0xf] %v814
                  %v816 = vld [vmem:[%s710 + $0x1a0] sm:$0xf]
                  %817 = vst [vmem:[%s711 + $0xd0] sm:$0xf] %v816
                  %v818 = vld [vmem:[%s710 + $0x1a8] sm:$0xf]
                  %819 = vst [vmem:[%s711 + $0xd4] sm:$0xf] %v818
                  %v820 = vld [vmem:[%s710 + $0x1b0] sm:$0xf]
                  %821 = vst [vmem:[%s711 + $0xd8] sm:$0xf] %v820
                  %v822 = vld [vmem:[%s710 + $0x1b8] sm:$0xf]
                  %823 = vst [vmem:[%s711 + $0xdc] sm:$0xf] %v822
                  %v824 = vld [vmem:[%s710 + $0x1c0] sm:$0xf]
                  %825 = vst [vmem:[%s711 + $0xe0] sm:$0xf] %v824
                  %v826 = vld [vmem:[%s710 + $0x1c8] sm:$0xf]
                  %827 = vst [vmem:[%s711 + $0xe4] sm:$0xf] %v826
                  %v828 = vld [vmem:[%s710 + $0x1d0] sm:$0xf]
                  %829 = vst [vmem:[%s711 + $0xe8] sm:$0xf] %v828
                  %v830 = vld [vmem:[%s710 + $0x1d8] sm:$0xf]
                  %831 = vst [vmem:[%s711 + $0xec] sm:$0xf] %v830
                  %v832 = vld [vmem:[%s710 + $0x1e0] sm:$0xf]
                  %833 = vst [vmem:[%s711 + $0xf0] sm:$0xf] %v832
                  %v834 = vld [vmem:[%s710 + $0x1e8] sm:$0xf]
                  %835 = vst [vmem:[%s711 + $0xf4] sm:$0xf] %v834
                  %v836 = vld [vmem:[%s710 + $0x1f0] sm:$0xf]
                  %837 = vst [vmem:[%s711 + $0xf8] sm:$0xf] %v836
                  %v838 = vld [vmem:[%s710 + $0x1f8] sm:$0xf]
                  %839 = vst [vmem:[%s711 + $0xfc] sm:$0xf] %v838
                  %v840 = vld [vmem:[%s710 + $0x200] sm:$0xf]
                  %841 = vst [vmem:[%s711 + $0x100] sm:$0xf] %v840
                  %v842 = vld [vmem:[%s710 + $0x208] sm:$0xf]
                  %843 = vst [vmem:[%s711 + $0x104] sm:$0xf] %v842
                  %v844 = vld [vmem:[%s710 + $0x210] sm:$0xf]
                  %845 = vst [vmem:[%s711 + $0x108] sm:$0xf] %v844
                  %v846 = vld [vmem:[%s710 + $0x218] sm:$0xf]
                  %847 = vst [vmem:[%s711 + $0x10c] sm:$0xf] %v846
                  %v848 = vld [vmem:[%s710 + $0x220] sm:$0xf]
                  %849 = vst [vmem:[%s711 + $0x110] sm:$0xf] %v848
                  %v850 = vld [vmem:[%s710 + $0x228] sm:$0xf]
                  %851 = vst [vmem:[%s711 + $0x114] sm:$0xf] %v850
                  %v852 = vld [vmem:[%s710 + $0x230] sm:$0xf]
                  %853 = vst [vmem:[%s711 + $0x118] sm:$0xf] %v852
                  %v854 = vld [vmem:[%s710 + $0x238] sm:$0xf]
                  %855 = vst [vmem:[%s711 + $0x11c] sm:$0xf] %v854
                  %v856 = vld [vmem:[%s710 + $0x240] sm:$0xf]
                  %857 = vst [vmem:[%s711 + $0x120] sm:$0xf] %v856
                  %v858 = vld [vmem:[%s710 + $0x248] sm:$0xf]
                  %859 = vst [vmem:[%s711 + $0x124] sm:$0xf] %v858
                  %v860 = vld [vmem:[%s710 + $0x250] sm:$0xf]
                  %861 = vst [vmem:[%s711 + $0x128] sm:$0xf] %v860
                  %v862 = vld [vmem:[%s710 + $0x258] sm:$0xf]
                  %863 = vst [vmem:[%s711 + $0x12c] sm:$0xf] %v862
                  %v864 = vld [vmem:[%s710 + $0x260] sm:$0xf]
                  %865 = vst [vmem:[%s711 + $0x130] sm:$0xf] %v864
                  %v866 = vld [vmem:[%s710 + $0x268] sm:$0xf]
                  %867 = vst [vmem:[%s711 + $0x134] sm:$0xf] %v866
                  %v868 = vld [vmem:[%s710 + $0x270] sm:$0xf]
                  %869 = vst [vmem:[%s711 + $0x138] sm:$0xf] %v868
                  %v870 = vld [vmem:[%s710 + $0x278] sm:$0xf]
                  %871 = vst [vmem:[%s711 + $0x13c] sm:$0xf] %v870
                  %v872 = vld [vmem:[%s710 + $0x280] sm:$0xf]
                  %873 = vst [vmem:[%s711 + $0x140] sm:$0xf] %v872
                  %v874 = vld [vmem:[%s710 + $0x288] sm:$0xf]
                  %875 = vst [vmem:[%s711 + $0x144] sm:$0xf] %v874
                  %v876 = vld [vmem:[%s710 + $0x290] sm:$0xf]
                  %877 = vst [vmem:[%s711 + $0x148] sm:$0xf] %v876
                  %v878 = vld [vmem:[%s710 + $0x298] sm:$0xf]
                  %879 = vst [vmem:[%s711 + $0x14c] sm:$0xf] %v878
                  %v880 = vld [vmem:[%s710 + $0x2a0] sm:$0xf]
                  %881 = vst [vmem:[%s711 + $0x150] sm:$0xf] %v880
                  %v882 = vld [vmem:[%s710 + $0x2a8] sm:$0xf]
                  %883 = vst [vmem:[%s711 + $0x154] sm:$0xf] %v882
                  %v884 = vld [vmem:[%s710 + $0x2b0] sm:$0xf]
                  %885 = vst [vmem:[%s711 + $0x158] sm:$0xf] %v884
                  %v886 = vld [vmem:[%s710 + $0x2b8] sm:$0xf]
                  %887 = vst [vmem:[%s711 + $0x15c] sm:$0xf] %v886
                  %v888 = vld [vmem:[%s710 + $0x2c0] sm:$0xf]
                  %889 = vst [vmem:[%s711 + $0x160] sm:$0xf] %v888
                  %v890 = vld [vmem:[%s710 + $0x2c8] sm:$0xf]
                  %891 = vst [vmem:[%s711 + $0x164] sm:$0xf] %v890
                  %v892 = vld [vmem:[%s710 + $0x2d0] sm:$0xf]
                  %893 = vst [vmem:[%s711 + $0x168] sm:$0xf] %v892
                  %v894 = vld [vmem:[%s710 + $0x2d8] sm:$0xf]
                  %895 = vst [vmem:[%s711 + $0x16c] sm:$0xf] %v894
                  %v896 = vld [vmem:[%s710 + $0x2e0] sm:$0xf]
                  %897 = vst [vmem:[%s711 + $0x170] sm:$0xf] %v896
                  %v898 = vld [vmem:[%s710 + $0x2e8] sm:$0xf]
                  %899 = vst [vmem:[%s711 + $0x174] sm:$0xf] %v898
                  %v900 = vld [vmem:[%s710 + $0x2f0] sm:$0xf]
                  %901 = vst [vmem:[%s711 + $0x178] sm:$0xf] %v900
                  %v902 = vld [vmem:[%s710 + $0x2f8] sm:$0xf]
                  %903 = vst [vmem:[%s711 + $0x17c] sm:$0xf] %v902
                  %v904 = vld [vmem:[%s710 + $0x300] sm:$0xf]
                  %905 = vst [vmem:[%s711 + $0x180] sm:$0xf] %v904
                  %v906 = vld [vmem:[%s710 + $0x308] sm:$0xf]
                  %907 = vst [vmem:[%s711 + $0x184] sm:$0xf] %v906
                  %v908 = vld [vmem:[%s710 + $0x310] sm:$0xf]
                  %909 = vst [vmem:[%s711 + $0x188] sm:$0xf] %v908
                  %v910 = vld [vmem:[%s710 + $0x318] sm:$0xf]
                  %911 = vst [vmem:[%s711 + $0x18c] sm:$0xf] %v910
                  %v912 = vld [vmem:[%s710 + $0x320] sm:$0xf]
                  %913 = vst [vmem:[%s711 + $0x190] sm:$0xf] %v912
                  %v914 = vld [vmem:[%s710 + $0x328] sm:$0xf]
                  %915 = vst [vmem:[%s711 + $0x194] sm:$0xf] %v914
                  %v916 = vld [vmem:[%s710 + $0x330] sm:$0xf]
                  %917 = vst [vmem:[%s711 + $0x198] sm:$0xf] %v916
                  %v918 = vld [vmem:[%s710 + $0x338] sm:$0xf]
                  %919 = vst [vmem:[%s711 + $0x19c] sm:$0xf] %v918
                  %v920 = vld [vmem:[%s710 + $0x340] sm:$0xf]
                  %921 = vst [vmem:[%s711 + $0x1a0] sm:$0xf] %v920
                  %v922 = vld [vmem:[%s710 + $0x348] sm:$0xf]
                  %923 = vst [vmem:[%s711 + $0x1a4] sm:$0xf] %v922
                  %v924 = vld [vmem:[%s710 + $0x350] sm:$0xf]
                  %925 = vst [vmem:[%s711 + $0x1a8] sm:$0xf] %v924
                  %v926 = vld [vmem:[%s710 + $0x358] sm:$0xf]
                  %927 = vst [vmem:[%s711 + $0x1ac] sm:$0xf] %v926
                  %v928 = vld [vmem:[%s710 + $0x360] sm:$0xf]
                  %929 = vst [vmem:[%s711 + $0x1b0] sm:$0xf] %v928
                  %v930 = vld [vmem:[%s710 + $0x368] sm:$0xf]
                  %931 = vst [vmem:[%s711 + $0x1b4] sm:$0xf] %v930
                  %v932 = vld [vmem:[%s710 + $0x370] sm:$0xf]
                  %933 = vst [vmem:[%s711 + $0x1b8] sm:$0xf] %v932
                  %v934 = vld [vmem:[%s710 + $0x378] sm:$0xf]
                  %935 = vst [vmem:[%s711 + $0x1bc] sm:$0xf] %v934
                  %v936 = vld [vmem:[%s710 + $0x380] sm:$0xf]
                  %937 = vst [vmem:[%s711 + $0x1c0] sm:$0xf] %v936
                  %v938 = vld [vmem:[%s710 + $0x388] sm:$0xf]
                  %939 = vst [vmem:[%s711 + $0x1c4] sm:$0xf] %v938
                  %v940 = vld [vmem:[%s710 + $0x390] sm:$0xf]
                  %941 = vst [vmem:[%s711 + $0x1c8] sm:$0xf] %v940
                  %v942 = vld [vmem:[%s710 + $0x398] sm:$0xf]
                  %943 = vst [vmem:[%s711 + $0x1cc] sm:$0xf] %v942
                  %v944 = vld [vmem:[%s710 + $0x3a0] sm:$0xf]
                  %945 = vst [vmem:[%s711 + $0x1d0] sm:$0xf] %v944
                  %v946 = vld [vmem:[%s710 + $0x3a8] sm:$0xf]
                  %947 = vst [vmem:[%s711 + $0x1d4] sm:$0xf] %v946
                  %v948 = vld [vmem:[%s710 + $0x3b0] sm:$0xf]
                  %949 = vst [vmem:[%s711 + $0x1d8] sm:$0xf] %v948
                  %v950 = vld [vmem:[%s710 + $0x3b8] sm:$0xf]
                  %951 = vst [vmem:[%s711 + $0x1dc] sm:$0xf] %v950
                  %v952 = vld [vmem:[%s710 + $0x3c0] sm:$0xf]
                  %953 = vst [vmem:[%s711 + $0x1e0] sm:$0xf] %v952
                  %v954 = vld [vmem:[%s710 + $0x3c8] sm:$0xf]
                  %955 = vst [vmem:[%s711 + $0x1e4] sm:$0xf] %v954
                  %v956 = vld [vmem:[%s710 + $0x3d0] sm:$0xf]
                  %957 = vst [vmem:[%s711 + $0x1e8] sm:$0xf] %v956
                  %v958 = vld [vmem:[%s710 + $0x3d8] sm:$0xf]
                  %959 = vst [vmem:[%s711 + $0x1ec] sm:$0xf] %v958
                  %v960 = vld [vmem:[%s710 + $0x3e0] sm:$0xf]
                  %961 = vst [vmem:[%s711 + $0x1f0] sm:$0xf] %v960
                  %v962 = vld [vmem:[%s710 + $0x3e8] sm:$0xf]
                  %963 = vst [vmem:[%s711 + $0x1f4] sm:$0xf] %v962
                  %v964 = vld [vmem:[%s710 + $0x3f0] sm:$0xf]
                  %965 = vst [vmem:[%s711 + $0x1f8] sm:$0xf] %v964
                  %v966 = vld [vmem:[%s710 + $0x3f8] sm:$0xf]
                  %967 = vst [vmem:[%s711 + $0x1fc] sm:$0xf] %v966
                  %v968 = vld [vmem:[%s710 + $0x400] sm:$0xf]
                  %969 = vst [vmem:[%s711 + $0x200] sm:$0xf] %v968
                  %v970 = vld [vmem:[%s710 + $0x408] sm:$0xf]
                  %971 = vst [vmem:[%s711 + $0x204] sm:$0xf] %v970
                  %v972 = vld [vmem:[%s710 + $0x410] sm:$0xf]
                  %973 = vst [vmem:[%s711 + $0x208] sm:$0xf] %v972
                  %v974 = vld [vmem:[%s710 + $0x418] sm:$0xf]
                  %975 = vst [vmem:[%s711 + $0x20c] sm:$0xf] %v974
                  %v976 = vld [vmem:[%s710 + $0x420] sm:$0xf]
                  %977 = vst [vmem:[%s711 + $0x210] sm:$0xf] %v976
                  %v978 = vld [vmem:[%s710 + $0x428] sm:$0xf]
                  %979 = vst [vmem:[%s711 + $0x214] sm:$0xf] %v978
                  %v980 = vld [vmem:[%s710 + $0x430] sm:$0xf]
                  %981 = vst [vmem:[%s711 + $0x218] sm:$0xf] %v980
                  %v982 = vld [vmem:[%s710 + $0x438] sm:$0xf]
                  %983 = vst [vmem:[%s711 + $0x21c] sm:$0xf] %v982
                  %v984 = vld [vmem:[%s710 + $0x440] sm:$0xf]
                  %985 = vst [vmem:[%s711 + $0x220] sm:$0xf] %v984
                  %v986 = vld [vmem:[%s710 + $0x448] sm:$0xf]
                  %987 = vst [vmem:[%s711 + $0x224] sm:$0xf] %v986
                  %v988 = vld [vmem:[%s710 + $0x450] sm:$0xf]
                  %989 = vst [vmem:[%s711 + $0x228] sm:$0xf] %v988
                  %v990 = vld [vmem:[%s710 + $0x458] sm:$0xf]
                  %991 = vst [vmem:[%s711 + $0x22c] sm:$0xf] %v990
                  %v992 = vld [vmem:[%s710 + $0x460] sm:$0xf]
                  %993 = vst [vmem:[%s711 + $0x230] sm:$0xf] %v992
                  %v994 = vld [vmem:[%s710 + $0x468] sm:$0xf]
                  %995 = vst [vmem:[%s711 + $0x234] sm:$0xf] %v994
                  %v996 = vld [vmem:[%s710 + $0x470] sm:$0xf]
                  %997 = vst [vmem:[%s711 + $0x238] sm:$0xf] %v996
                  %v998 = vld [vmem:[%s710 + $0x478] sm:$0xf]
                  %999 = vst [vmem:[%s711 + $0x23c] sm:$0xf] %v998
                  %v1000 = vld [vmem:[%s710 + $0x480] sm:$0xf]
                  %1001 = vst [vmem:[%s711 + $0x240] sm:$0xf] %v1000
                  %v1002 = vld [vmem:[%s710 + $0x488] sm:$0xf]
                  %1003 = vst [vmem:[%s711 + $0x244] sm:$0xf] %v1002
                  %v1004 = vld [vmem:[%s710 + $0x490] sm:$0xf]
                  %1005 = vst [vmem:[%s711 + $0x248] sm:$0xf] %v1004
                  %v1006 = vld [vmem:[%s710 + $0x498] sm:$0xf]
                  %1007 = vst [vmem:[%s711 + $0x24c] sm:$0xf] %v1006
                  %v1008 = vld [vmem:[%s710 + $0x4a0] sm:$0xf]
                  %1009 = vst [vmem:[%s711 + $0x250] sm:$0xf] %v1008
                  %v1010 = vld [vmem:[%s710 + $0x4a8] sm:$0xf]
                  %1011 = vst [vmem:[%s711 + $0x254] sm:$0xf] %v1010
                  %v1012 = vld [vmem:[%s710 + $0x4b0] sm:$0xf]
                  %1013 = vst [vmem:[%s711 + $0x258] sm:$0xf] %v1012
                  %v1014 = vld [vmem:[%s710 + $0x4b8] sm:$0xf]
                  %1015 = vst [vmem:[%s711 + $0x25c] sm:$0xf] %v1014
                  %v1016 = vld [vmem:[%s710 + $0x4c0] sm:$0xf]
                  %1017 = vst [vmem:[%s711 + $0x260] sm:$0xf] %v1016
                  %v1018 = vld [vmem:[%s710 + $0x4c8] sm:$0xf]
                  %1019 = vst [vmem:[%s711 + $0x264] sm:$0xf] %v1018
                  %v1020 = vld [vmem:[%s710 + $0x4d0] sm:$0xf]
                  %1021 = vst [vmem:[%s711 + $0x268] sm:$0xf] %v1020
                  %v1022 = vld [vmem:[%s710 + $0x4d8] sm:$0xf]
                  %1023 = vst [vmem:[%s711 + $0x26c] sm:$0xf] %v1022
                  %v1024 = vld [vmem:[%s710 + $0x4e0] sm:$0xf]
                  %1025 = vst [vmem:[%s711 + $0x270] sm:$0xf] %v1024
                  %v1026 = vld [vmem:[%s710 + $0x4e8] sm:$0xf]
                  %1027 = vst [vmem:[%s711 + $0x274] sm:$0xf] %v1026
                  %v1028 = vld [vmem:[%s710 + $0x4f0] sm:$0xf]
                  %1029 = vst [vmem:[%s711 + $0x278] sm:$0xf] %v1028
                  %v1030 = vld [vmem:[%s710 + $0x4f8] sm:$0xf]
                  %1031 = vst [vmem:[%s711 + $0x27c] sm:$0xf] %v1030
                  %v1032 = vld [vmem:[%s710 + $0x500] sm:$0xf]
                  %1033 = vst [vmem:[%s711 + $0x280] sm:$0xf] %v1032
                  %v1034 = vld [vmem:[%s710 + $0x508] sm:$0xf]
                  %1035 = vst [vmem:[%s711 + $0x284] sm:$0xf] %v1034
                  %v1036 = vld [vmem:[%s710 + $0x510] sm:$0xf]
                  %1037 = vst [vmem:[%s711 + $0x288] sm:$0xf] %v1036
                  %v1038 = vld [vmem:[%s710 + $0x518] sm:$0xf]
                  %1039 = vst [vmem:[%s711 + $0x28c] sm:$0xf] %v1038
                  %v1040 = vld [vmem:[%s710 + $0x520] sm:$0xf]
                  %1041 = vst [vmem:[%s711 + $0x290] sm:$0xf] %v1040
                  %v1042 = vld [vmem:[%s710 + $0x528] sm:$0xf]
                  %1043 = vst [vmem:[%s711 + $0x294] sm:$0xf] %v1042
                  %v1044 = vld [vmem:[%s710 + $0x530] sm:$0xf]
                  %1045 = vst [vmem:[%s711 + $0x298] sm:$0xf] %v1044
                  %v1046 = vld [vmem:[%s710 + $0x538] sm:$0xf]
                  %1047 = vst [vmem:[%s711 + $0x29c] sm:$0xf] %v1046
                  %v1048 = vld [vmem:[%s710 + $0x540] sm:$0xf]
                  %1049 = vst [vmem:[%s711 + $0x2a0] sm:$0xf] %v1048
                  %v1050 = vld [vmem:[%s710 + $0x548] sm:$0xf]
                  %1051 = vst [vmem:[%s711 + $0x2a4] sm:$0xf] %v1050
                  %v1052 = vld [vmem:[%s710 + $0x550] sm:$0xf]
                  %1053 = vst [vmem:[%s711 + $0x2a8] sm:$0xf] %v1052
                  %v1054 = vld [vmem:[%s710 + $0x558] sm:$0xf]
                  %1055 = vst [vmem:[%s711 + $0x2ac] sm:$0xf] %v1054
                  %v1056 = vld [vmem:[%s710 + $0x560] sm:$0xf]
                  %1057 = vst [vmem:[%s711 + $0x2b0] sm:$0xf] %v1056
                  %v1058 = vld [vmem:[%s710 + $0x568] sm:$0xf]
                  %1059 = vst [vmem:[%s711 + $0x2b4] sm:$0xf] %v1058
                  %v1060 = vld [vmem:[%s710 + $0x570] sm:$0xf]
                  %1061 = vst [vmem:[%s711 + $0x2b8] sm:$0xf] %v1060
                  %v1062 = vld [vmem:[%s710 + $0x578] sm:$0xf]
                  %1063 = vst [vmem:[%s711 + $0x2bc] sm:$0xf] %v1062
                  %v1064 = vld [vmem:[%s710 + $0x580] sm:$0xf]
                  %1065 = vst [vmem:[%s711 + $0x2c0] sm:$0xf] %v1064
                  %v1066 = vld [vmem:[%s710 + $0x588] sm:$0xf]
                  %1067 = vst [vmem:[%s711 + $0x2c4] sm:$0xf] %v1066
                  %v1068 = vld [vmem:[%s710 + $0x590] sm:$0xf]
                  %1069 = vst [vmem:[%s711 + $0x2c8] sm:$0xf] %v1068
                  %v1070 = vld [vmem:[%s710 + $0x598] sm:$0xf]
                  %1071 = vst [vmem:[%s711 + $0x2cc] sm:$0xf] %v1070
                  %v1072 = vld [vmem:[%s710 + $0x5a0] sm:$0xf]
                  %1073 = vst [vmem:[%s711 + $0x2d0] sm:$0xf] %v1072
                  %v1074 = vld [vmem:[%s710 + $0x5a8] sm:$0xf]
                  %1075 = vst [vmem:[%s711 + $0x2d4] sm:$0xf] %v1074
                  %v1076 = vld [vmem:[%s710 + $0x5b0] sm:$0xf]
                  %1077 = vst [vmem:[%s711 + $0x2d8] sm:$0xf] %v1076
                  %v1078 = vld [vmem:[%s710 + $0x5b8] sm:$0xf]
                  %1079 = vst [vmem:[%s711 + $0x2dc] sm:$0xf] %v1078
                  %v1080 = vld [vmem:[%s710 + $0x5c0] sm:$0xf]
                  %1081 = vst [vmem:[%s711 + $0x2e0] sm:$0xf] %v1080
                  %v1082 = vld [vmem:[%s710 + $0x5c8] sm:$0xf]
                  %1083 = vst [vmem:[%s711 + $0x2e4] sm:$0xf] %v1082
                  %v1084 = vld [vmem:[%s710 + $0x5d0] sm:$0xf]
                  %1085 = vst [vmem:[%s711 + $0x2e8] sm:$0xf] %v1084
                  %v1086 = vld [vmem:[%s710 + $0x5d8] sm:$0xf]
                  %1087 = vst [vmem:[%s711 + $0x2ec] sm:$0xf] %v1086
                  %v1088 = vld [vmem:[%s710 + $0x5e0] sm:$0xf]
                  %1089 = vst [vmem:[%s711 + $0x2f0] sm:$0xf] %v1088
                  %v1090 = vld [vmem:[%s710 + $0x5e8] sm:$0xf]
                  %1091 = vst [vmem:[%s711 + $0x2f4] sm:$0xf] %v1090
                  %v1092 = vld [vmem:[%s710 + $0x5f0] sm:$0xf]
                  %1093 = vst [vmem:[%s711 + $0x2f8] sm:$0xf] %v1092
                  %v1094 = vld [vmem:[%s710 + $0x5f8] sm:$0xf]
                  %1095 = vst [vmem:[%s711 + $0x2fc] sm:$0xf] %v1094
                  %v1096 = vld [vmem:[%s710 + $0x600] sm:$0xf]
                  %1097 = vst [vmem:[%s711 + $0x300] sm:$0xf] %v1096
                  %v1098 = vld [vmem:[%s710 + $0x608] sm:$0xf]
                  %1099 = vst [vmem:[%s711 + $0x304] sm:$0xf] %v1098
                  %v1100 = vld [vmem:[%s710 + $0x610] sm:$0xf]
                  %1101 = vst [vmem:[%s711 + $0x308] sm:$0xf] %v1100
                  %v1102 = vld [vmem:[%s710 + $0x618] sm:$0xf]
                  %1103 = vst [vmem:[%s711 + $0x30c] sm:$0xf] %v1102
                  %v1104 = vld [vmem:[%s710 + $0x620] sm:$0xf]
                  %1105 = vst [vmem:[%s711 + $0x310] sm:$0xf] %v1104
                  %v1106 = vld [vmem:[%s710 + $0x628] sm:$0xf]
                  %1107 = vst [vmem:[%s711 + $0x314] sm:$0xf] %v1106
                  %v1108 = vld [vmem:[%s710 + $0x630] sm:$0xf]
                  %1109 = vst [vmem:[%s711 + $0x318] sm:$0xf] %v1108
                  %v1110 = vld [vmem:[%s710 + $0x638] sm:$0xf]
                  %1111 = vst [vmem:[%s711 + $0x31c] sm:$0xf] %v1110
                  %v1112 = vld [vmem:[%s710 + $0x640] sm:$0xf]
                  %1113 = vst [vmem:[%s711 + $0x320] sm:$0xf] %v1112
                  %v1114 = vld [vmem:[%s710 + $0x648] sm:$0xf]
                  %1115 = vst [vmem:[%s711 + $0x324] sm:$0xf] %v1114
                  %v1116 = vld [vmem:[%s710 + $0x650] sm:$0xf]
                  %1117 = vst [vmem:[%s711 + $0x328] sm:$0xf] %v1116
                  %v1118 = vld [vmem:[%s710 + $0x658] sm:$0xf]
                  %1119 = vst [vmem:[%s711 + $0x32c] sm:$0xf] %v1118
                  %v1120 = vld [vmem:[%s710 + $0x660] sm:$0xf]
                  %1121 = vst [vmem:[%s711 + $0x330] sm:$0xf] %v1120
                  %v1122 = vld [vmem:[%s710 + $0x668] sm:$0xf]
                  %1123 = vst [vmem:[%s711 + $0x334] sm:$0xf] %v1122
                  %v1124 = vld [vmem:[%s710 + $0x670] sm:$0xf]
                  %1125 = vst [vmem:[%s711 + $0x338] sm:$0xf] %v1124
                  %v1126 = vld [vmem:[%s710 + $0x678] sm:$0xf]
                  %1127 = vst [vmem:[%s711 + $0x33c] sm:$0xf] %v1126
                  %v1128 = vld [vmem:[%s710 + $0x680] sm:$0xf]
                  %1129 = vst [vmem:[%s711 + $0x340] sm:$0xf] %v1128
                  %v1130 = vld [vmem:[%s710 + $0x688] sm:$0xf]
                  %1131 = vst [vmem:[%s711 + $0x344] sm:$0xf] %v1130
                  %v1132 = vld [vmem:[%s710 + $0x690] sm:$0xf]
                  %1133 = vst [vmem:[%s711 + $0x348] sm:$0xf] %v1132
                  %v1134 = vld [vmem:[%s710 + $0x698] sm:$0xf]
                  %1135 = vst [vmem:[%s711 + $0x34c] sm:$0xf] %v1134
                  %v1136 = vld [vmem:[%s710 + $0x6a0] sm:$0xf]
                  %1137 = vst [vmem:[%s711 + $0x350] sm:$0xf] %v1136
                  %v1138 = vld [vmem:[%s710 + $0x6a8] sm:$0xf]
                  %1139 = vst [vmem:[%s711 + $0x354] sm:$0xf] %v1138
                  %v1140 = vld [vmem:[%s710 + $0x6b0] sm:$0xf]
                  %1141 = vst [vmem:[%s711 + $0x358] sm:$0xf] %v1140
                  %v1142 = vld [vmem:[%s710 + $0x6b8] sm:$0xf]
                  %1143 = vst [vmem:[%s711 + $0x35c] sm:$0xf] %v1142
                  %v1144 = vld [vmem:[%s710 + $0x6c0] sm:$0xf]
                  %1145 = vst [vmem:[%s711 + $0x360] sm:$0xf] %v1144
                  %v1146 = vld [vmem:[%s710 + $0x6c8] sm:$0xf]
                  %1147 = vst [vmem:[%s711 + $0x364] sm:$0xf] %v1146
                  %v1148 = vld [vmem:[%s710 + $0x6d0] sm:$0xf]
                  %1149 = vst [vmem:[%s711 + $0x368] sm:$0xf] %v1148
                  %v1150 = vld [vmem:[%s710 + $0x6d8] sm:$0xf]
                  %1151 = vst [vmem:[%s711 + $0x36c] sm:$0xf] %v1150
                  %v1152 = vld [vmem:[%s710 + $0x6e0] sm:$0xf]
                  %1153 = vst [vmem:[%s711 + $0x370] sm:$0xf] %v1152
                  %v1154 = vld [vmem:[%s710 + $0x6e8] sm:$0xf]
                  %1155 = vst [vmem:[%s711 + $0x374] sm:$0xf] %v1154
                  %v1156 = vld [vmem:[%s710 + $0x6f0] sm:$0xf]
                  %1157 = vst [vmem:[%s711 + $0x378] sm:$0xf] %v1156
                  %v1158 = vld [vmem:[%s710 + $0x6f8] sm:$0xf]
                  %1159 = vst [vmem:[%s711 + $0x37c] sm:$0xf] %v1158
                  %v1160 = vld [vmem:[%s710 + $0x700] sm:$0xf]
                  %1161 = vst [vmem:[%s711 + $0x380] sm:$0xf] %v1160
                  %v1162 = vld [vmem:[%s710 + $0x708] sm:$0xf]
                  %1163 = vst [vmem:[%s711 + $0x384] sm:$0xf] %v1162
                  %v1164 = vld [vmem:[%s710 + $0x710] sm:$0xf]
                  %1165 = vst [vmem:[%s711 + $0x388] sm:$0xf] %v1164
                  %v1166 = vld [vmem:[%s710 + $0x718] sm:$0xf]
                  %1167 = vst [vmem:[%s711 + $0x38c] sm:$0xf] %v1166
                  %v1168 = vld [vmem:[%s710 + $0x720] sm:$0xf]
                  %1169 = vst [vmem:[%s711 + $0x390] sm:$0xf] %v1168
                  %v1170 = vld [vmem:[%s710 + $0x728] sm:$0xf]
                  %1171 = vst [vmem:[%s711 + $0x394] sm:$0xf] %v1170
                  %v1172 = vld [vmem:[%s710 + $0x730] sm:$0xf]
                  %1173 = vst [vmem:[%s711 + $0x398] sm:$0xf] %v1172
                  %v1174 = vld [vmem:[%s710 + $0x738] sm:$0xf]
                  %1175 = vst [vmem:[%s711 + $0x39c] sm:$0xf] %v1174
                  %v1176 = vld [vmem:[%s710 + $0x740] sm:$0xf]
                  %1177 = vst [vmem:[%s711 + $0x3a0] sm:$0xf] %v1176
                  %v1178 = vld [vmem:[%s710 + $0x748] sm:$0xf]
                  %1179 = vst [vmem:[%s711 + $0x3a4] sm:$0xf] %v1178
                  %v1180 = vld [vmem:[%s710 + $0x750] sm:$0xf]
                  %1181 = vst [vmem:[%s711 + $0x3a8] sm:$0xf] %v1180
                  %v1182 = vld [vmem:[%s710 + $0x758] sm:$0xf]
                  %1183 = vst [vmem:[%s711 + $0x3ac] sm:$0xf] %v1182
                  %v1184 = vld [vmem:[%s710 + $0x760] sm:$0xf]
                  %1185 = vst [vmem:[%s711 + $0x3b0] sm:$0xf] %v1184
                  %v1186 = vld [vmem:[%s710 + $0x768] sm:$0xf]
                  %1187 = vst [vmem:[%s711 + $0x3b4] sm:$0xf] %v1186
                  %v1188 = vld [vmem:[%s710 + $0x770] sm:$0xf]
                  %1189 = vst [vmem:[%s711 + $0x3b8] sm:$0xf] %v1188
                  %v1190 = vld [vmem:[%s710 + $0x778] sm:$0xf]
                  %1191 = vst [vmem:[%s711 + $0x3bc] sm:$0xf] %v1190
                  %v1192 = vld [vmem:[%s710 + $0x780] sm:$0xf]
                  %1193 = vst [vmem:[%s711 + $0x3c0] sm:$0xf] %v1192
                  %v1194 = vld [vmem:[%s710 + $0x788] sm:$0xf]
                  %1195 = vst [vmem:[%s711 + $0x3c4] sm:$0xf] %v1194
                  %v1196 = vld [vmem:[%s710 + $0x790] sm:$0xf]
                  %1197 = vst [vmem:[%s711 + $0x3c8] sm:$0xf] %v1196
                  %v1198 = vld [vmem:[%s710 + $0x798] sm:$0xf]
                  %1199 = vst [vmem:[%s711 + $0x3cc] sm:$0xf] %v1198
                  %v1200 = vld [vmem:[%s710 + $0x7a0] sm:$0xf]
                  %1201 = vst [vmem:[%s711 + $0x3d0] sm:$0xf] %v1200
                  %v1202 = vld [vmem:[%s710 + $0x7a8] sm:$0xf]
                  %1203 = vst [vmem:[%s711 + $0x3d4] sm:$0xf] %v1202
                  %v1204 = vld [vmem:[%s710 + $0x7b0] sm:$0xf]
                  %1205 = vst [vmem:[%s711 + $0x3d8] sm:$0xf] %v1204
                  %v1206 = vld [vmem:[%s710 + $0x7b8] sm:$0xf]
                  %1207 = vst [vmem:[%s711 + $0x3dc] sm:$0xf] %v1206
                  %v1208 = vld [vmem:[%s710 + $0x7c0] sm:$0xf]
                  %1209 = vst [vmem:[%s711 + $0x3e0] sm:$0xf] %v1208
                  %v1210 = vld [vmem:[%s710 + $0x7c8] sm:$0xf]
                  %1211 = vst [vmem:[%s711 + $0x3e4] sm:$0xf] %v1210
                  %v1212 = vld [vmem:[%s710 + $0x7d0] sm:$0xf]
                  %1213 = vst [vmem:[%s711 + $0x3e8] sm:$0xf] %v1212
                  %v1214 = vld [vmem:[%s710 + $0x7d8] sm:$0xf]
                  %1215 = vst [vmem:[%s711 + $0x3ec] sm:$0xf] %v1214
                  %v1216 = vld [vmem:[%s710 + $0x7e0] sm:$0xf]
                  %1217 = vst [vmem:[%s711 + $0x3f0] sm:$0xf] %v1216
                  %v1218 = vld [vmem:[%s710 + $0x7e8] sm:$0xf]
                  %1219 = vst [vmem:[%s711 + $0x3f4] sm:$0xf] %v1218
                  %v1220 = vld [vmem:[%s710 + $0x7f0] sm:$0xf]
                  %1221 = vst [vmem:[%s711 + $0x3f8] sm:$0xf] %v1220
                  %v1222 = vld [vmem:[%s710 + $0x7f8] sm:$0xf]
                  %1223 = vst [vmem:[%s711 + $0x3fc] sm:$0xf] %v1222
                $region59: #{discriminator_wgan_forward.6} parent=46 // loop_footer
                  %s709 = sadd.s32 1, %s705
                $region60: #{discriminator_wgan_forward.6} parent=46 // loop_footer_branch
                  %704 = sbr.rel target = $region56
                $region61: #{discriminator_wgan_forward.6} parent=46 // loop_exit
                  _
              $region47: #{discriminator_wgan_forward.6} parent=31 // pred_fallthru
                _
            $region32: #{discriminator_wgan_forward.6} parent=27 // pred_fallthru
              _
            // Predicated region
            $region33: #{discriminator_wgan_forward.6} parent=27 // pred_check
              _
            $region34: #{discriminator_wgan_forward.6} parent=27 // pred_check_branch
              %171 = sbr.rel (0) target = $region36
            $region35: #{discriminator_wgan_forward.6} parent=27 // pred_region
              loop: start=0, step=1, limit=1
              $region37: #{discriminator_wgan_forward.6} parent=35 // loop_pre_header
                _
              $region38: #{discriminator_wgan_forward.6} parent=35 // loop_header
                %s174 = sphi 0, %s178
                %p175 = scmp.ge.s32.totalorder %s174, 1
                %s179 = sphi %s165, %s165
                %s180 = sphi %s163, %s163
              $region39: #{discriminator_wgan_forward.6} parent=35 // loop_header_branch
                %177 = sbr.rel (%p175) target = $region43
              $region40: #{discriminator_wgan_forward.6} parent=35 // loop_body
                %v181 = vld [vmem:[%s179] sm:$0xf]
                %182 = vst [vmem:[%s180] sm:$0xf] %v181
                %v183 = vld [vmem:[%s179 + $0x8] sm:$0xf]
                %184 = vst [vmem:[%s180 + $0x4] sm:$0xf] %v183
                %v185 = vld [vmem:[%s179 + $0x10] sm:$0xf]
                %186 = vst [vmem:[%s180 + $0x8] sm:$0xf] %v185
                %v187 = vld [vmem:[%s179 + $0x18] sm:$0xf]
                %188 = vst [vmem:[%s180 + $0xc] sm:$0xf] %v187
                %v189 = vld [vmem:[%s179 + $0x20] sm:$0xf]
                %190 = vst [vmem:[%s180 + $0x10] sm:$0xf] %v189
                %v191 = vld [vmem:[%s179 + $0x28] sm:$0xf]
                %192 = vst [vmem:[%s180 + $0x14] sm:$0xf] %v191
                %v193 = vld [vmem:[%s179 + $0x30] sm:$0xf]
                %194 = vst [vmem:[%s180 + $0x18] sm:$0xf] %v193
                %v195 = vld [vmem:[%s179 + $0x38] sm:$0xf]
                %196 = vst [vmem:[%s180 + $0x1c] sm:$0xf] %v195
                %v197 = vld [vmem:[%s179 + $0x40] sm:$0xf]
                %198 = vst [vmem:[%s180 + $0x20] sm:$0xf] %v197
                %v199 = vld [vmem:[%s179 + $0x48] sm:$0xf]
                %200 = vst [vmem:[%s180 + $0x24] sm:$0xf] %v199
                %v201 = vld [vmem:[%s179 + $0x50] sm:$0xf]
                %202 = vst [vmem:[%s180 + $0x28] sm:$0xf] %v201
                %v203 = vld [vmem:[%s179 + $0x58] sm:$0xf]
                %204 = vst [vmem:[%s180 + $0x2c] sm:$0xf] %v203
                %v205 = vld [vmem:[%s179 + $0x60] sm:$0xf]
                %206 = vst [vmem:[%s180 + $0x30] sm:$0xf] %v205
                %v207 = vld [vmem:[%s179 + $0x68] sm:$0xf]
                %208 = vst [vmem:[%s180 + $0x34] sm:$0xf] %v207
                %v209 = vld [vmem:[%s179 + $0x70] sm:$0xf]
                %210 = vst [vmem:[%s180 + $0x38] sm:$0xf] %v209
                %v211 = vld [vmem:[%s179 + $0x78] sm:$0xf]
                %212 = vst [vmem:[%s180 + $0x3c] sm:$0xf] %v211
                %v213 = vld [vmem:[%s179 + $0x80] sm:$0xf]
                %214 = vst [vmem:[%s180 + $0x40] sm:$0xf] %v213
                %v215 = vld [vmem:[%s179 + $0x88] sm:$0xf]
                %216 = vst [vmem:[%s180 + $0x44] sm:$0xf] %v215
                %v217 = vld [vmem:[%s179 + $0x90] sm:$0xf]
                %218 = vst [vmem:[%s180 + $0x48] sm:$0xf] %v217
                %v219 = vld [vmem:[%s179 + $0x98] sm:$0xf]
                %220 = vst [vmem:[%s180 + $0x4c] sm:$0xf] %v219
                %v221 = vld [vmem:[%s179 + $0xa0] sm:$0xf]
                %222 = vst [vmem:[%s180 + $0x50] sm:$0xf] %v221
                %v223 = vld [vmem:[%s179 + $0xa8] sm:$0xf]
                %224 = vst [vmem:[%s180 + $0x54] sm:$0xf] %v223
                %v225 = vld [vmem:[%s179 + $0xb0] sm:$0xf]
                %226 = vst [vmem:[%s180 + $0x58] sm:$0xf] %v225
                %v227 = vld [vmem:[%s179 + $0xb8] sm:$0xf]
                %228 = vst [vmem:[%s180 + $0x5c] sm:$0xf] %v227
                %v229 = vld [vmem:[%s179 + $0xc0] sm:$0xf]
                %230 = vst [vmem:[%s180 + $0x60] sm:$0xf] %v229
                %v231 = vld [vmem:[%s179 + $0xc8] sm:$0xf]
                %232 = vst [vmem:[%s180 + $0x64] sm:$0xf] %v231
                %v233 = vld [vmem:[%s179 + $0xd0] sm:$0xf]
                %234 = vst [vmem:[%s180 + $0x68] sm:$0xf] %v233
                %v235 = vld [vmem:[%s179 + $0xd8] sm:$0xf]
                %236 = vst [vmem:[%s180 + $0x6c] sm:$0xf] %v235
                %v237 = vld [vmem:[%s179 + $0xe0] sm:$0xf]
                %238 = vst [vmem:[%s180 + $0x70] sm:$0xf] %v237
                %v239 = vld [vmem:[%s179 + $0xe8] sm:$0xf]
                %240 = vst [vmem:[%s180 + $0x74] sm:$0xf] %v239
                %v241 = vld [vmem:[%s179 + $0xf0] sm:$0xf]
                %242 = vst [vmem:[%s180 + $0x78] sm:$0xf] %v241
                %v243 = vld [vmem:[%s179 + $0xf8] sm:$0xf]
                %244 = vst [vmem:[%s180 + $0x7c] sm:$0xf] %v243
                %v245 = vld [vmem:[%s179 + $0x100] sm:$0xf]
                %246 = vst [vmem:[%s180 + $0x80] sm:$0xf] %v245
                %v247 = vld [vmem:[%s179 + $0x108] sm:$0xf]
                %248 = vst [vmem:[%s180 + $0x84] sm:$0xf] %v247
                %v249 = vld [vmem:[%s179 + $0x110] sm:$0xf]
                %250 = vst [vmem:[%s180 + $0x88] sm:$0xf] %v249
                %v251 = vld [vmem:[%s179 + $0x118] sm:$0xf]
                %252 = vst [vmem:[%s180 + $0x8c] sm:$0xf] %v251
                %v253 = vld [vmem:[%s179 + $0x120] sm:$0xf]
                %254 = vst [vmem:[%s180 + $0x90] sm:$0xf] %v253
                %v255 = vld [vmem:[%s179 + $0x128] sm:$0xf]
                %256 = vst [vmem:[%s180 + $0x94] sm:$0xf] %v255
                %v257 = vld [vmem:[%s179 + $0x130] sm:$0xf]
                %258 = vst [vmem:[%s180 + $0x98] sm:$0xf] %v257
                %v259 = vld [vmem:[%s179 + $0x138] sm:$0xf]
                %260 = vst [vmem:[%s180 + $0x9c] sm:$0xf] %v259
                %v261 = vld [vmem:[%s179 + $0x140] sm:$0xf]
                %262 = vst [vmem:[%s180 + $0xa0] sm:$0xf] %v261
                %v263 = vld [vmem:[%s179 + $0x148] sm:$0xf]
                %264 = vst [vmem:[%s180 + $0xa4] sm:$0xf] %v263
                %v265 = vld [vmem:[%s179 + $0x150] sm:$0xf]
                %266 = vst [vmem:[%s180 + $0xa8] sm:$0xf] %v265
                %v267 = vld [vmem:[%s179 + $0x158] sm:$0xf]
                %268 = vst [vmem:[%s180 + $0xac] sm:$0xf] %v267
                %v269 = vld [vmem:[%s179 + $0x160] sm:$0xf]
                %270 = vst [vmem:[%s180 + $0xb0] sm:$0xf] %v269
                %v271 = vld [vmem:[%s179 + $0x168] sm:$0xf]
                %272 = vst [vmem:[%s180 + $0xb4] sm:$0xf] %v271
                %v273 = vld [vmem:[%s179 + $0x170] sm:$0xf]
                %274 = vst [vmem:[%s180 + $0xb8] sm:$0xf] %v273
                %v275 = vld [vmem:[%s179 + $0x178] sm:$0xf]
                %276 = vst [vmem:[%s180 + $0xbc] sm:$0xf] %v275
                %v277 = vld [vmem:[%s179 + $0x180] sm:$0xf]
                %278 = vst [vmem:[%s180 + $0xc0] sm:$0xf] %v277
                %v279 = vld [vmem:[%s179 + $0x188] sm:$0xf]
                %280 = vst [vmem:[%s180 + $0xc4] sm:$0xf] %v279
                %v281 = vld [vmem:[%s179 + $0x190] sm:$0xf]
                %282 = vst [vmem:[%s180 + $0xc8] sm:$0xf] %v281
                %v283 = vld [vmem:[%s179 + $0x198] sm:$0xf]
                %284 = vst [vmem:[%s180 + $0xcc] sm:$0xf] %v283
                %v285 = vld [vmem:[%s179 + $0x1a0] sm:$0xf]
                %286 = vst [vmem:[%s180 + $0xd0] sm:$0xf] %v285
                %v287 = vld [vmem:[%s179 + $0x1a8] sm:$0xf]
                %288 = vst [vmem:[%s180 + $0xd4] sm:$0xf] %v287
                %v289 = vld [vmem:[%s179 + $0x1b0] sm:$0xf]
                %290 = vst [vmem:[%s180 + $0xd8] sm:$0xf] %v289
                %v291 = vld [vmem:[%s179 + $0x1b8] sm:$0xf]
                %292 = vst [vmem:[%s180 + $0xdc] sm:$0xf] %v291
                %v293 = vld [vmem:[%s179 + $0x1c0] sm:$0xf]
                %294 = vst [vmem:[%s180 + $0xe0] sm:$0xf] %v293
                %v295 = vld [vmem:[%s179 + $0x1c8] sm:$0xf]
                %296 = vst [vmem:[%s180 + $0xe4] sm:$0xf] %v295
                %v297 = vld [vmem:[%s179 + $0x1d0] sm:$0xf]
                %298 = vst [vmem:[%s180 + $0xe8] sm:$0xf] %v297
                %v299 = vld [vmem:[%s179 + $0x1d8] sm:$0xf]
                %300 = vst [vmem:[%s180 + $0xec] sm:$0xf] %v299
                %v301 = vld [vmem:[%s179 + $0x1e0] sm:$0xf]
                %302 = vst [vmem:[%s180 + $0xf0] sm:$0xf] %v301
                %v303 = vld [vmem:[%s179 + $0x1e8] sm:$0xf]
                %304 = vst [vmem:[%s180 + $0xf4] sm:$0xf] %v303
                %v305 = vld [vmem:[%s179 + $0x1f0] sm:$0xf]
                %306 = vst [vmem:[%s180 + $0xf8] sm:$0xf] %v305
                %v307 = vld [vmem:[%s179 + $0x1f8] sm:$0xf]
                %308 = vst [vmem:[%s180 + $0xfc] sm:$0xf] %v307
                %v309 = vld [vmem:[%s179 + $0x200] sm:$0xf]
                %310 = vst [vmem:[%s180 + $0x100] sm:$0xf] %v309
                %v311 = vld [vmem:[%s179 + $0x208] sm:$0xf]
                %312 = vst [vmem:[%s180 + $0x104] sm:$0xf] %v311
                %v313 = vld [vmem:[%s179 + $0x210] sm:$0xf]
                %314 = vst [vmem:[%s180 + $0x108] sm:$0xf] %v313
                %v315 = vld [vmem:[%s179 + $0x218] sm:$0xf]
                %316 = vst [vmem:[%s180 + $0x10c] sm:$0xf] %v315
                %v317 = vld [vmem:[%s179 + $0x220] sm:$0xf]
                %318 = vst [vmem:[%s180 + $0x110] sm:$0xf] %v317
                %v319 = vld [vmem:[%s179 + $0x228] sm:$0xf]
                %320 = vst [vmem:[%s180 + $0x114] sm:$0xf] %v319
                %v321 = vld [vmem:[%s179 + $0x230] sm:$0xf]
                %322 = vst [vmem:[%s180 + $0x118] sm:$0xf] %v321
                %v323 = vld [vmem:[%s179 + $0x238] sm:$0xf]
                %324 = vst [vmem:[%s180 + $0x11c] sm:$0xf] %v323
                %v325 = vld [vmem:[%s179 + $0x240] sm:$0xf]
                %326 = vst [vmem:[%s180 + $0x120] sm:$0xf] %v325
                %v327 = vld [vmem:[%s179 + $0x248] sm:$0xf]
                %328 = vst [vmem:[%s180 + $0x124] sm:$0xf] %v327
                %v329 = vld [vmem:[%s179 + $0x250] sm:$0xf]
                %330 = vst [vmem:[%s180 + $0x128] sm:$0xf] %v329
                %v331 = vld [vmem:[%s179 + $0x258] sm:$0xf]
                %332 = vst [vmem:[%s180 + $0x12c] sm:$0xf] %v331
                %v333 = vld [vmem:[%s179 + $0x260] sm:$0xf]
                %334 = vst [vmem:[%s180 + $0x130] sm:$0xf] %v333
                %v335 = vld [vmem:[%s179 + $0x268] sm:$0xf]
                %336 = vst [vmem:[%s180 + $0x134] sm:$0xf] %v335
                %v337 = vld [vmem:[%s179 + $0x270] sm:$0xf]
                %338 = vst [vmem:[%s180 + $0x138] sm:$0xf] %v337
                %v339 = vld [vmem:[%s179 + $0x278] sm:$0xf]
                %340 = vst [vmem:[%s180 + $0x13c] sm:$0xf] %v339
                %v341 = vld [vmem:[%s179 + $0x280] sm:$0xf]
                %342 = vst [vmem:[%s180 + $0x140] sm:$0xf] %v341
                %v343 = vld [vmem:[%s179 + $0x288] sm:$0xf]
                %344 = vst [vmem:[%s180 + $0x144] sm:$0xf] %v343
                %v345 = vld [vmem:[%s179 + $0x290] sm:$0xf]
                %346 = vst [vmem:[%s180 + $0x148] sm:$0xf] %v345
                %v347 = vld [vmem:[%s179 + $0x298] sm:$0xf]
                %348 = vst [vmem:[%s180 + $0x14c] sm:$0xf] %v347
                %v349 = vld [vmem:[%s179 + $0x2a0] sm:$0xf]
                %350 = vst [vmem:[%s180 + $0x150] sm:$0xf] %v349
                %v351 = vld [vmem:[%s179 + $0x2a8] sm:$0xf]
                %352 = vst [vmem:[%s180 + $0x154] sm:$0xf] %v351
                %v353 = vld [vmem:[%s179 + $0x2b0] sm:$0xf]
                %354 = vst [vmem:[%s180 + $0x158] sm:$0xf] %v353
                %v355 = vld [vmem:[%s179 + $0x2b8] sm:$0xf]
                %356 = vst [vmem:[%s180 + $0x15c] sm:$0xf] %v355
                %v357 = vld [vmem:[%s179 + $0x2c0] sm:$0xf]
                %358 = vst [vmem:[%s180 + $0x160] sm:$0xf] %v357
                %v359 = vld [vmem:[%s179 + $0x2c8] sm:$0xf]
                %360 = vst [vmem:[%s180 + $0x164] sm:$0xf] %v359
                %v361 = vld [vmem:[%s179 + $0x2d0] sm:$0xf]
                %362 = vst [vmem:[%s180 + $0x168] sm:$0xf] %v361
                %v363 = vld [vmem:[%s179 + $0x2d8] sm:$0xf]
                %364 = vst [vmem:[%s180 + $0x16c] sm:$0xf] %v363
                %v365 = vld [vmem:[%s179 + $0x2e0] sm:$0xf]
                %366 = vst [vmem:[%s180 + $0x170] sm:$0xf] %v365
                %v367 = vld [vmem:[%s179 + $0x2e8] sm:$0xf]
                %368 = vst [vmem:[%s180 + $0x174] sm:$0xf] %v367
                %v369 = vld [vmem:[%s179 + $0x2f0] sm:$0xf]
                %370 = vst [vmem:[%s180 + $0x178] sm:$0xf] %v369
                %v371 = vld [vmem:[%s179 + $0x2f8] sm:$0xf]
                %372 = vst [vmem:[%s180 + $0x17c] sm:$0xf] %v371
                %v373 = vld [vmem:[%s179 + $0x300] sm:$0xf]
                %374 = vst [vmem:[%s180 + $0x180] sm:$0xf] %v373
                %v375 = vld [vmem:[%s179 + $0x308] sm:$0xf]
                %376 = vst [vmem:[%s180 + $0x184] sm:$0xf] %v375
                %v377 = vld [vmem:[%s179 + $0x310] sm:$0xf]
                %378 = vst [vmem:[%s180 + $0x188] sm:$0xf] %v377
                %v379 = vld [vmem:[%s179 + $0x318] sm:$0xf]
                %380 = vst [vmem:[%s180 + $0x18c] sm:$0xf] %v379
                %v381 = vld [vmem:[%s179 + $0x320] sm:$0xf]
                %382 = vst [vmem:[%s180 + $0x190] sm:$0xf] %v381
                %v383 = vld [vmem:[%s179 + $0x328] sm:$0xf]
                %384 = vst [vmem:[%s180 + $0x194] sm:$0xf] %v383
                %v385 = vld [vmem:[%s179 + $0x330] sm:$0xf]
                %386 = vst [vmem:[%s180 + $0x198] sm:$0xf] %v385
                %v387 = vld [vmem:[%s179 + $0x338] sm:$0xf]
                %388 = vst [vmem:[%s180 + $0x19c] sm:$0xf] %v387
                %v389 = vld [vmem:[%s179 + $0x340] sm:$0xf]
                %390 = vst [vmem:[%s180 + $0x1a0] sm:$0xf] %v389
                %v391 = vld [vmem:[%s179 + $0x348] sm:$0xf]
                %392 = vst [vmem:[%s180 + $0x1a4] sm:$0xf] %v391
                %v393 = vld [vmem:[%s179 + $0x350] sm:$0xf]
                %394 = vst [vmem:[%s180 + $0x1a8] sm:$0xf] %v393
                %v395 = vld [vmem:[%s179 + $0x358] sm:$0xf]
                %396 = vst [vmem:[%s180 + $0x1ac] sm:$0xf] %v395
                %v397 = vld [vmem:[%s179 + $0x360] sm:$0xf]
                %398 = vst [vmem:[%s180 + $0x1b0] sm:$0xf] %v397
                %v399 = vld [vmem:[%s179 + $0x368] sm:$0xf]
                %400 = vst [vmem:[%s180 + $0x1b4] sm:$0xf] %v399
                %v401 = vld [vmem:[%s179 + $0x370] sm:$0xf]
                %402 = vst [vmem:[%s180 + $0x1b8] sm:$0xf] %v401
                %v403 = vld [vmem:[%s179 + $0x378] sm:$0xf]
                %404 = vst [vmem:[%s180 + $0x1bc] sm:$0xf] %v403
                %v405 = vld [vmem:[%s179 + $0x380] sm:$0xf]
                %406 = vst [vmem:[%s180 + $0x1c0] sm:$0xf] %v405
                %v407 = vld [vmem:[%s179 + $0x388] sm:$0xf]
                %408 = vst [vmem:[%s180 + $0x1c4] sm:$0xf] %v407
                %v409 = vld [vmem:[%s179 + $0x390] sm:$0xf]
                %410 = vst [vmem:[%s180 + $0x1c8] sm:$0xf] %v409
                %v411 = vld [vmem:[%s179 + $0x398] sm:$0xf]
                %412 = vst [vmem:[%s180 + $0x1cc] sm:$0xf] %v411
                %v413 = vld [vmem:[%s179 + $0x3a0] sm:$0xf]
                %414 = vst [vmem:[%s180 + $0x1d0] sm:$0xf] %v413
                %v415 = vld [vmem:[%s179 + $0x3a8] sm:$0xf]
                %416 = vst [vmem:[%s180 + $0x1d4] sm:$0xf] %v415
                %v417 = vld [vmem:[%s179 + $0x3b0] sm:$0xf]
                %418 = vst [vmem:[%s180 + $0x1d8] sm:$0xf] %v417
                %v419 = vld [vmem:[%s179 + $0x3b8] sm:$0xf]
                %420 = vst [vmem:[%s180 + $0x1dc] sm:$0xf] %v419
                %v421 = vld [vmem:[%s179 + $0x3c0] sm:$0xf]
                %422 = vst [vmem:[%s180 + $0x1e0] sm:$0xf] %v421
                %v423 = vld [vmem:[%s179 + $0x3c8] sm:$0xf]
                %424 = vst [vmem:[%s180 + $0x1e4] sm:$0xf] %v423
                %v425 = vld [vmem:[%s179 + $0x3d0] sm:$0xf]
                %426 = vst [vmem:[%s180 + $0x1e8] sm:$0xf] %v425
                %v427 = vld [vmem:[%s179 + $0x3d8] sm:$0xf]
                %428 = vst [vmem:[%s180 + $0x1ec] sm:$0xf] %v427
                %v429 = vld [vmem:[%s179 + $0x3e0] sm:$0xf]
                %430 = vst [vmem:[%s180 + $0x1f0] sm:$0xf] %v429
                %v431 = vld [vmem:[%s179 + $0x3e8] sm:$0xf]
                %432 = vst [vmem:[%s180 + $0x1f4] sm:$0xf] %v431
                %v433 = vld [vmem:[%s179 + $0x3f0] sm:$0xf]
                %434 = vst [vmem:[%s180 + $0x1f8] sm:$0xf] %v433
                %v435 = vld [vmem:[%s179 + $0x3f8] sm:$0xf]
                %436 = vst [vmem:[%s180 + $0x1fc] sm:$0xf] %v435
                %v437 = vld [vmem:[%s179 + $0x400] sm:$0xf]
                %438 = vst [vmem:[%s180 + $0x200] sm:$0xf] %v437
                %v439 = vld [vmem:[%s179 + $0x408] sm:$0xf]
                %440 = vst [vmem:[%s180 + $0x204] sm:$0xf] %v439
                %v441 = vld [vmem:[%s179 + $0x410] sm:$0xf]
                %442 = vst [vmem:[%s180 + $0x208] sm:$0xf] %v441
                %v443 = vld [vmem:[%s179 + $0x418] sm:$0xf]
                %444 = vst [vmem:[%s180 + $0x20c] sm:$0xf] %v443
                %v445 = vld [vmem:[%s179 + $0x420] sm:$0xf]
                %446 = vst [vmem:[%s180 + $0x210] sm:$0xf] %v445
                %v447 = vld [vmem:[%s179 + $0x428] sm:$0xf]
                %448 = vst [vmem:[%s180 + $0x214] sm:$0xf] %v447
                %v449 = vld [vmem:[%s179 + $0x430] sm:$0xf]
                %450 = vst [vmem:[%s180 + $0x218] sm:$0xf] %v449
                %v451 = vld [vmem:[%s179 + $0x438] sm:$0xf]
                %452 = vst [vmem:[%s180 + $0x21c] sm:$0xf] %v451
                %v453 = vld [vmem:[%s179 + $0x440] sm:$0xf]
                %454 = vst [vmem:[%s180 + $0x220] sm:$0xf] %v453
                %v455 = vld [vmem:[%s179 + $0x448] sm:$0xf]
                %456 = vst [vmem:[%s180 + $0x224] sm:$0xf] %v455
                %v457 = vld [vmem:[%s179 + $0x450] sm:$0xf]
                %458 = vst [vmem:[%s180 + $0x228] sm:$0xf] %v457
                %v459 = vld [vmem:[%s179 + $0x458] sm:$0xf]
                %460 = vst [vmem:[%s180 + $0x22c] sm:$0xf] %v459
                %v461 = vld [vmem:[%s179 + $0x460] sm:$0xf]
                %462 = vst [vmem:[%s180 + $0x230] sm:$0xf] %v461
                %v463 = vld [vmem:[%s179 + $0x468] sm:$0xf]
                %464 = vst [vmem:[%s180 + $0x234] sm:$0xf] %v463
                %v465 = vld [vmem:[%s179 + $0x470] sm:$0xf]
                %466 = vst [vmem:[%s180 + $0x238] sm:$0xf] %v465
                %v467 = vld [vmem:[%s179 + $0x478] sm:$0xf]
                %468 = vst [vmem:[%s180 + $0x23c] sm:$0xf] %v467
                %v469 = vld [vmem:[%s179 + $0x480] sm:$0xf]
                %470 = vst [vmem:[%s180 + $0x240] sm:$0xf] %v469
                %v471 = vld [vmem:[%s179 + $0x488] sm:$0xf]
                %472 = vst [vmem:[%s180 + $0x244] sm:$0xf] %v471
                %v473 = vld [vmem:[%s179 + $0x490] sm:$0xf]
                %474 = vst [vmem:[%s180 + $0x248] sm:$0xf] %v473
                %v475 = vld [vmem:[%s179 + $0x498] sm:$0xf]
                %476 = vst [vmem:[%s180 + $0x24c] sm:$0xf] %v475
                %v477 = vld [vmem:[%s179 + $0x4a0] sm:$0xf]
                %478 = vst [vmem:[%s180 + $0x250] sm:$0xf] %v477
                %v479 = vld [vmem:[%s179 + $0x4a8] sm:$0xf]
                %480 = vst [vmem:[%s180 + $0x254] sm:$0xf] %v479
                %v481 = vld [vmem:[%s179 + $0x4b0] sm:$0xf]
                %482 = vst [vmem:[%s180 + $0x258] sm:$0xf] %v481
                %v483 = vld [vmem:[%s179 + $0x4b8] sm:$0xf]
                %484 = vst [vmem:[%s180 + $0x25c] sm:$0xf] %v483
                %v485 = vld [vmem:[%s179 + $0x4c0] sm:$0xf]
                %486 = vst [vmem:[%s180 + $0x260] sm:$0xf] %v485
                %v487 = vld [vmem:[%s179 + $0x4c8] sm:$0xf]
                %488 = vst [vmem:[%s180 + $0x264] sm:$0xf] %v487
                %v489 = vld [vmem:[%s179 + $0x4d0] sm:$0xf]
                %490 = vst [vmem:[%s180 + $0x268] sm:$0xf] %v489
                %v491 = vld [vmem:[%s179 + $0x4d8] sm:$0xf]
                %492 = vst [vmem:[%s180 + $0x26c] sm:$0xf] %v491
                %v493 = vld [vmem:[%s179 + $0x4e0] sm:$0xf]
                %494 = vst [vmem:[%s180 + $0x270] sm:$0xf] %v493
                %v495 = vld [vmem:[%s179 + $0x4e8] sm:$0xf]
                %496 = vst [vmem:[%s180 + $0x274] sm:$0xf] %v495
                %v497 = vld [vmem:[%s179 + $0x4f0] sm:$0xf]
                %498 = vst [vmem:[%s180 + $0x278] sm:$0xf] %v497
                %v499 = vld [vmem:[%s179 + $0x4f8] sm:$0xf]
                %500 = vst [vmem:[%s180 + $0x27c] sm:$0xf] %v499
                %v501 = vld [vmem:[%s179 + $0x500] sm:$0xf]
                %502 = vst [vmem:[%s180 + $0x280] sm:$0xf] %v501
                %v503 = vld [vmem:[%s179 + $0x508] sm:$0xf]
                %504 = vst [vmem:[%s180 + $0x284] sm:$0xf] %v503
                %v505 = vld [vmem:[%s179 + $0x510] sm:$0xf]
                %506 = vst [vmem:[%s180 + $0x288] sm:$0xf] %v505
                %v507 = vld [vmem:[%s179 + $0x518] sm:$0xf]
                %508 = vst [vmem:[%s180 + $0x28c] sm:$0xf] %v507
                %v509 = vld [vmem:[%s179 + $0x520] sm:$0xf]
                %510 = vst [vmem:[%s180 + $0x290] sm:$0xf] %v509
                %v511 = vld [vmem:[%s179 + $0x528] sm:$0xf]
                %512 = vst [vmem:[%s180 + $0x294] sm:$0xf] %v511
                %v513 = vld [vmem:[%s179 + $0x530] sm:$0xf]
                %514 = vst [vmem:[%s180 + $0x298] sm:$0xf] %v513
                %v515 = vld [vmem:[%s179 + $0x538] sm:$0xf]
                %516 = vst [vmem:[%s180 + $0x29c] sm:$0xf] %v515
                %v517 = vld [vmem:[%s179 + $0x540] sm:$0xf]
                %518 = vst [vmem:[%s180 + $0x2a0] sm:$0xf] %v517
                %v519 = vld [vmem:[%s179 + $0x548] sm:$0xf]
                %520 = vst [vmem:[%s180 + $0x2a4] sm:$0xf] %v519
                %v521 = vld [vmem:[%s179 + $0x550] sm:$0xf]
                %522 = vst [vmem:[%s180 + $0x2a8] sm:$0xf] %v521
                %v523 = vld [vmem:[%s179 + $0x558] sm:$0xf]
                %524 = vst [vmem:[%s180 + $0x2ac] sm:$0xf] %v523
                %v525 = vld [vmem:[%s179 + $0x560] sm:$0xf]
                %526 = vst [vmem:[%s180 + $0x2b0] sm:$0xf] %v525
                %v527 = vld [vmem:[%s179 + $0x568] sm:$0xf]
                %528 = vst [vmem:[%s180 + $0x2b4] sm:$0xf] %v527
                %v529 = vld [vmem:[%s179 + $0x570] sm:$0xf]
                %530 = vst [vmem:[%s180 + $0x2b8] sm:$0xf] %v529
                %v531 = vld [vmem:[%s179 + $0x578] sm:$0xf]
                %532 = vst [vmem:[%s180 + $0x2bc] sm:$0xf] %v531
                %v533 = vld [vmem:[%s179 + $0x580] sm:$0xf]
                %534 = vst [vmem:[%s180 + $0x2c0] sm:$0xf] %v533
                %v535 = vld [vmem:[%s179 + $0x588] sm:$0xf]
                %536 = vst [vmem:[%s180 + $0x2c4] sm:$0xf] %v535
                %v537 = vld [vmem:[%s179 + $0x590] sm:$0xf]
                %538 = vst [vmem:[%s180 + $0x2c8] sm:$0xf] %v537
                %v539 = vld [vmem:[%s179 + $0x598] sm:$0xf]
                %540 = vst [vmem:[%s180 + $0x2cc] sm:$0xf] %v539
                %v541 = vld [vmem:[%s179 + $0x5a0] sm:$0xf]
                %542 = vst [vmem:[%s180 + $0x2d0] sm:$0xf] %v541
                %v543 = vld [vmem:[%s179 + $0x5a8] sm:$0xf]
                %544 = vst [vmem:[%s180 + $0x2d4] sm:$0xf] %v543
                %v545 = vld [vmem:[%s179 + $0x5b0] sm:$0xf]
                %546 = vst [vmem:[%s180 + $0x2d8] sm:$0xf] %v545
                %v547 = vld [vmem:[%s179 + $0x5b8] sm:$0xf]
                %548 = vst [vmem:[%s180 + $0x2dc] sm:$0xf] %v547
                %v549 = vld [vmem:[%s179 + $0x5c0] sm:$0xf]
                %550 = vst [vmem:[%s180 + $0x2e0] sm:$0xf] %v549
                %v551 = vld [vmem:[%s179 + $0x5c8] sm:$0xf]
                %552 = vst [vmem:[%s180 + $0x2e4] sm:$0xf] %v551
                %v553 = vld [vmem:[%s179 + $0x5d0] sm:$0xf]
                %554 = vst [vmem:[%s180 + $0x2e8] sm:$0xf] %v553
                %v555 = vld [vmem:[%s179 + $0x5d8] sm:$0xf]
                %556 = vst [vmem:[%s180 + $0x2ec] sm:$0xf] %v555
                %v557 = vld [vmem:[%s179 + $0x5e0] sm:$0xf]
                %558 = vst [vmem:[%s180 + $0x2f0] sm:$0xf] %v557
                %v559 = vld [vmem:[%s179 + $0x5e8] sm:$0xf]
                %560 = vst [vmem:[%s180 + $0x2f4] sm:$0xf] %v559
                %v561 = vld [vmem:[%s179 + $0x5f0] sm:$0xf]
                %562 = vst [vmem:[%s180 + $0x2f8] sm:$0xf] %v561
                %v563 = vld [vmem:[%s179 + $0x5f8] sm:$0xf]
                %564 = vst [vmem:[%s180 + $0x2fc] sm:$0xf] %v563
                %v565 = vld [vmem:[%s179 + $0x600] sm:$0xf]
                %566 = vst [vmem:[%s180 + $0x300] sm:$0xf] %v565
                %v567 = vld [vmem:[%s179 + $0x608] sm:$0xf]
                %568 = vst [vmem:[%s180 + $0x304] sm:$0xf] %v567
                %v569 = vld [vmem:[%s179 + $0x610] sm:$0xf]
                %570 = vst [vmem:[%s180 + $0x308] sm:$0xf] %v569
                %v571 = vld [vmem:[%s179 + $0x618] sm:$0xf]
                %572 = vst [vmem:[%s180 + $0x30c] sm:$0xf] %v571
                %v573 = vld [vmem:[%s179 + $0x620] sm:$0xf]
                %574 = vst [vmem:[%s180 + $0x310] sm:$0xf] %v573
                %v575 = vld [vmem:[%s179 + $0x628] sm:$0xf]
                %576 = vst [vmem:[%s180 + $0x314] sm:$0xf] %v575
                %v577 = vld [vmem:[%s179 + $0x630] sm:$0xf]
                %578 = vst [vmem:[%s180 + $0x318] sm:$0xf] %v577
                %v579 = vld [vmem:[%s179 + $0x638] sm:$0xf]
                %580 = vst [vmem:[%s180 + $0x31c] sm:$0xf] %v579
                %v581 = vld [vmem:[%s179 + $0x640] sm:$0xf]
                %582 = vst [vmem:[%s180 + $0x320] sm:$0xf] %v581
                %v583 = vld [vmem:[%s179 + $0x648] sm:$0xf]
                %584 = vst [vmem:[%s180 + $0x324] sm:$0xf] %v583
                %v585 = vld [vmem:[%s179 + $0x650] sm:$0xf]
                %586 = vst [vmem:[%s180 + $0x328] sm:$0xf] %v585
                %v587 = vld [vmem:[%s179 + $0x658] sm:$0xf]
                %588 = vst [vmem:[%s180 + $0x32c] sm:$0xf] %v587
                %v589 = vld [vmem:[%s179 + $0x660] sm:$0xf]
                %590 = vst [vmem:[%s180 + $0x330] sm:$0xf] %v589
                %v591 = vld [vmem:[%s179 + $0x668] sm:$0xf]
                %592 = vst [vmem:[%s180 + $0x334] sm:$0xf] %v591
                %v593 = vld [vmem:[%s179 + $0x670] sm:$0xf]
                %594 = vst [vmem:[%s180 + $0x338] sm:$0xf] %v593
                %v595 = vld [vmem:[%s179 + $0x678] sm:$0xf]
                %596 = vst [vmem:[%s180 + $0x33c] sm:$0xf] %v595
                %v597 = vld [vmem:[%s179 + $0x680] sm:$0xf]
                %598 = vst [vmem:[%s180 + $0x340] sm:$0xf] %v597
                %v599 = vld [vmem:[%s179 + $0x688] sm:$0xf]
                %600 = vst [vmem:[%s180 + $0x344] sm:$0xf] %v599
                %v601 = vld [vmem:[%s179 + $0x690] sm:$0xf]
                %602 = vst [vmem:[%s180 + $0x348] sm:$0xf] %v601
                %v603 = vld [vmem:[%s179 + $0x698] sm:$0xf]
                %604 = vst [vmem:[%s180 + $0x34c] sm:$0xf] %v603
                %v605 = vld [vmem:[%s179 + $0x6a0] sm:$0xf]
                %606 = vst [vmem:[%s180 + $0x350] sm:$0xf] %v605
                %v607 = vld [vmem:[%s179 + $0x6a8] sm:$0xf]
                %608 = vst [vmem:[%s180 + $0x354] sm:$0xf] %v607
                %v609 = vld [vmem:[%s179 + $0x6b0] sm:$0xf]
                %610 = vst [vmem:[%s180 + $0x358] sm:$0xf] %v609
                %v611 = vld [vmem:[%s179 + $0x6b8] sm:$0xf]
                %612 = vst [vmem:[%s180 + $0x35c] sm:$0xf] %v611
                %v613 = vld [vmem:[%s179 + $0x6c0] sm:$0xf]
                %614 = vst [vmem:[%s180 + $0x360] sm:$0xf] %v613
                %v615 = vld [vmem:[%s179 + $0x6c8] sm:$0xf]
                %616 = vst [vmem:[%s180 + $0x364] sm:$0xf] %v615
                %v617 = vld [vmem:[%s179 + $0x6d0] sm:$0xf]
                %618 = vst [vmem:[%s180 + $0x368] sm:$0xf] %v617
                %v619 = vld [vmem:[%s179 + $0x6d8] sm:$0xf]
                %620 = vst [vmem:[%s180 + $0x36c] sm:$0xf] %v619
                %v621 = vld [vmem:[%s179 + $0x6e0] sm:$0xf]
                %622 = vst [vmem:[%s180 + $0x370] sm:$0xf] %v621
                %v623 = vld [vmem:[%s179 + $0x6e8] sm:$0xf]
                %624 = vst [vmem:[%s180 + $0x374] sm:$0xf] %v623
                %v625 = vld [vmem:[%s179 + $0x6f0] sm:$0xf]
                %626 = vst [vmem:[%s180 + $0x378] sm:$0xf] %v625
                %v627 = vld [vmem:[%s179 + $0x6f8] sm:$0xf]
                %628 = vst [vmem:[%s180 + $0x37c] sm:$0xf] %v627
                %v629 = vld [vmem:[%s179 + $0x700] sm:$0xf]
                %630 = vst [vmem:[%s180 + $0x380] sm:$0xf] %v629
                %v631 = vld [vmem:[%s179 + $0x708] sm:$0xf]
                %632 = vst [vmem:[%s180 + $0x384] sm:$0xf] %v631
                %v633 = vld [vmem:[%s179 + $0x710] sm:$0xf]
                %634 = vst [vmem:[%s180 + $0x388] sm:$0xf] %v633
                %v635 = vld [vmem:[%s179 + $0x718] sm:$0xf]
                %636 = vst [vmem:[%s180 + $0x38c] sm:$0xf] %v635
                %v637 = vld [vmem:[%s179 + $0x720] sm:$0xf]
                %638 = vst [vmem:[%s180 + $0x390] sm:$0xf] %v637
                %v639 = vld [vmem:[%s179 + $0x728] sm:$0xf]
                %640 = vst [vmem:[%s180 + $0x394] sm:$0xf] %v639
                %v641 = vld [vmem:[%s179 + $0x730] sm:$0xf]
                %642 = vst [vmem:[%s180 + $0x398] sm:$0xf] %v641
                %v643 = vld [vmem:[%s179 + $0x738] sm:$0xf]
                %644 = vst [vmem:[%s180 + $0x39c] sm:$0xf] %v643
                %v645 = vld [vmem:[%s179 + $0x740] sm:$0xf]
                %646 = vst [vmem:[%s180 + $0x3a0] sm:$0xf] %v645
                %v647 = vld [vmem:[%s179 + $0x748] sm:$0xf]
                %648 = vst [vmem:[%s180 + $0x3a4] sm:$0xf] %v647
                %v649 = vld [vmem:[%s179 + $0x750] sm:$0xf]
                %650 = vst [vmem:[%s180 + $0x3a8] sm:$0xf] %v649
                %v651 = vld [vmem:[%s179 + $0x758] sm:$0xf]
                %652 = vst [vmem:[%s180 + $0x3ac] sm:$0xf] %v651
                %v653 = vld [vmem:[%s179 + $0x760] sm:$0xf]
                %654 = vst [vmem:[%s180 + $0x3b0] sm:$0xf] %v653
                %v655 = vld [vmem:[%s179 + $0x768] sm:$0xf]
                %656 = vst [vmem:[%s180 + $0x3b4] sm:$0xf] %v655
                %v657 = vld [vmem:[%s179 + $0x770] sm:$0xf]
                %658 = vst [vmem:[%s180 + $0x3b8] sm:$0xf] %v657
                %v659 = vld [vmem:[%s179 + $0x778] sm:$0xf]
                %660 = vst [vmem:[%s180 + $0x3bc] sm:$0xf] %v659
                %v661 = vld [vmem:[%s179 + $0x780] sm:$0xf]
                %662 = vst [vmem:[%s180 + $0x3c0] sm:$0xf] %v661
                %v663 = vld [vmem:[%s179 + $0x788] sm:$0xf]
                %664 = vst [vmem:[%s180 + $0x3c4] sm:$0xf] %v663
                %v665 = vld [vmem:[%s179 + $0x790] sm:$0xf]
                %666 = vst [vmem:[%s180 + $0x3c8] sm:$0xf] %v665
                %v667 = vld [vmem:[%s179 + $0x798] sm:$0xf]
                %668 = vst [vmem:[%s180 + $0x3cc] sm:$0xf] %v667
                %v669 = vld [vmem:[%s179 + $0x7a0] sm:$0xf]
                %670 = vst [vmem:[%s180 + $0x3d0] sm:$0xf] %v669
                %v671 = vld [vmem:[%s179 + $0x7a8] sm:$0xf]
                %672 = vst [vmem:[%s180 + $0x3d4] sm:$0xf] %v671
                %v673 = vld [vmem:[%s179 + $0x7b0] sm:$0xf]
                %674 = vst [vmem:[%s180 + $0x3d8] sm:$0xf] %v673
                %v675 = vld [vmem:[%s179 + $0x7b8] sm:$0xf]
                %676 = vst [vmem:[%s180 + $0x3dc] sm:$0xf] %v675
                %v677 = vld [vmem:[%s179 + $0x7c0] sm:$0xf]
                %678 = vst [vmem:[%s180 + $0x3e0] sm:$0xf] %v677
                %v679 = vld [vmem:[%s179 + $0x7c8] sm:$0xf]
                %680 = vst [vmem:[%s180 + $0x3e4] sm:$0xf] %v679
                %v681 = vld [vmem:[%s179 + $0x7d0] sm:$0xf]
                %682 = vst [vmem:[%s180 + $0x3e8] sm:$0xf] %v681
                %v683 = vld [vmem:[%s179 + $0x7d8] sm:$0xf]
                %684 = vst [vmem:[%s180 + $0x3ec] sm:$0xf] %v683
                %v685 = vld [vmem:[%s179 + $0x7e0] sm:$0xf]
                %686 = vst [vmem:[%s180 + $0x3f0] sm:$0xf] %v685
                %v687 = vld [vmem:[%s179 + $0x7e8] sm:$0xf]
                %688 = vst [vmem:[%s180 + $0x3f4] sm:$0xf] %v687
                %v689 = vld [vmem:[%s179 + $0x7f0] sm:$0xf]
                %690 = vst [vmem:[%s180 + $0x3f8] sm:$0xf] %v689
                %v691 = vld [vmem:[%s179 + $0x7f8] sm:$0xf]
                %692 = vst [vmem:[%s180 + $0x3fc] sm:$0xf] %v691
              $region41: #{discriminator_wgan_forward.6} parent=35 // loop_footer
                %s178 = sadd.s32 1, %s174
              $region42: #{discriminator_wgan_forward.6} parent=35 // loop_footer_branch
                %173 = sbr.rel target = $region38
              $region43: #{discriminator_wgan_forward.6} parent=35 // loop_exit
                _
            $region36: #{discriminator_wgan_forward.6} parent=27 // pred_fallthru
              _
          $region28: #{discriminator_wgan_forward.6} parent=23 // pred_fallthru
            _
          %1224 = vnop
        $region24: #{discriminator_wgan_forward.6} parent=19 // pred_fallthru
          _
        // Predicated region
        $region62: #{discriminator_wgan_forward.6} parent=19 // pred_check
          %p1225 = pneg %p77
        $region63: #{discriminator_wgan_forward.6} parent=19 // pred_check_branch
          %1227 = sbr.rel (%p1225) target = $region65
        $region64: #{discriminator_wgan_forward.6} parent=19 // pred_region
          %p1228 = scmp.lt.s32.totalorder %s10, 1
          %s1229 = scalar_select %p1228, %s10, 1
          %s1230 = scalar_lea.vmem %s2, %s1229
        $region65: #{discriminator_wgan_forward.6} parent=19 // pred_fallthru
          _
        // Predicated region
        $region66: #{discriminator_wgan_forward.6} parent=19 // pred_check
          %p1231 = pneg %p103
        $region67: #{discriminator_wgan_forward.6} parent=19 // pred_check_branch
          %1233 = sbr.rel (%p1231) target = $region69
        $region68: #{discriminator_wgan_forward.6} parent=19 // pred_region
          %p1234 = scmp.lt.s32.totalorder %s10, 1
          %s1235 = scalar_select %p1234, %s10, 1
          %s1236 = scalar_lea.vmem %s3, %s1235
        $region69: #{discriminator_wgan_forward.6} parent=19 // pred_fallthru
          _
      $region20: #{discriminator_wgan_forward.6} parent=5 // pred_fallthru
        _
      %p1237 = scmp.le.s32.totalorder 1, %s10
      %p1238 = scmp.lt.s32.totalorder %s10, 3
      %p1239 = pnand %p1237, %p1238
      %p1240 = pneg %p1239
      // Predicated region
      $region70: #{discriminator_wgan_forward.6} parent=5 // pred_check
        _
      $region71: #{discriminator_wgan_forward.6} parent=5 // pred_check_branch
        %1242 = sbr.rel (%p1239) target = $region73
      $region72: #{discriminator_wgan_forward.6} parent=5 // pred_region
        %s1243 = ssub.s32 %s10, 1
        %s1244 = sand.u32 %s44, 1
        %s1245 = sand.u32 %s44, 1
        %s1246 = smul.addr %s1245, 1024
        %s1247 = scalar_lea.vmem [#allocation2], %s1246
        // Predicated region
        $region74: #{discriminator_wgan_forward.6} parent=72 // pred_check
          %p1248 = pneg %p57
        $region75: #{discriminator_wgan_forward.6} parent=72 // pred_check_branch
          %1250 = sbr.rel (%p1248) target = $region77
        $region76: #{discriminator_wgan_forward.6} parent=72 // pred_region
          _
        $region77: #{discriminator_wgan_forward.6} parent=72 // pred_fallthru
          _
        %p1251 = pneg %p31
        %p1252 = pneg %p28
        %s1253 = sand.u32 %s44, 1
        %s1254 = sand.u32 %s44, 1
        %s1255 = smul.addr %s1254, 1024
        %s1256 = scalar_lea.vmem [#allocation2], %s1255
        %p1257 = pneg %p57
        %p1258 = pneg %p54
        %p1259 = scmp.lt.s32.totalorder %s15, 1
        %s1260 = scalar_select %p1259, %s15, 1
        %s1261 = scalar_lea.vmem %s2, %s1260
        %p1262 = pneg %p83
        %p1263 = pneg %p80
        %p1264 = scmp.lt.s32.totalorder %s15, 1
        %s1265 = scalar_select %p1264, %s15, 1
        %s1266 = scalar_lea.vmem %s3, %s1265
        %p1267 = pneg %p109
        %p1268 = pneg %p106
        %p1269 = pneg %p135
        %p1270 = pneg %p132
        %s1271 = sand.u32 %s122, 1
        %s1272 = sand.u32 %s122, 1
        %s1273 = smul.addr %s1272, 8
        %s1274 = scalar_lea.vmem [#allocation3], %s1273
        %p1275 = scmp.lt.s32.totalorder %s15, 1
        %s1276 = scalar_select %p1275, %s15, 1
        %s1277 = scalar_lea.vmem %s2, %s1276
        %p1278 = scmp.lt.s32.totalorder %s15, 1
        %s1279 = scalar_select %p1278, %s15, 1
        %s1280 = scalar_lea.vmem %s3, %s1279
        %v1282 = vld [vmem:[%s0] sm:$0xff]
        %v1283 = vld [vmem:[%s0 + $0x8] sm:$0xff]
        %v1284 = vld [vmem:[%s0 + $0x10] sm:$0xff]
        %v1285 = vld [vmem:[%s0 + $0x18] sm:$0xff]
        %v1286 = vld [vmem:[%s0 + $0x20] sm:$0xff]
        %v1287 = vld [vmem:[%s0 + $0x28] sm:$0xff]
        %v1288 = vld [vmem:[%s0 + $0x30] sm:$0xff]
        %v1289 = vld [vmem:[%s0 + $0x38] sm:$0xff]
        %v1290 = vld [vmem:[%s0 + $0x40] sm:$0xff]
        %v1291 = vld [vmem:[%s0 + $0x48] sm:$0xff]
        %v1292 = vld [vmem:[%s0 + $0x50] sm:$0xff]
        %v1293 = vld [vmem:[%s0 + $0x58] sm:$0xff]
        %v1294 = vld [vmem:[%s0 + $0x60] sm:$0xff]
        %v1295 = vld [vmem:[%s0 + $0x68] sm:$0xff]
        %v1296 = vld [vmem:[%s0 + $0x70] sm:$0xff]
        %v1297 = vld [vmem:[%s0 + $0x78] sm:$0xff]
        %v1298 = vld [vmem:[%s1247] sm:$0xf]
        %v1299 = vld [vmem:[%s1247 + $0x4] sm:$0xf]
        %v1300 = vld [vmem:[%s1247 + $0x8] sm:$0xf]
        %v1301 = vld [vmem:[%s1247 + $0xc] sm:$0xf]
        %v1302 = vld [vmem:[%s1247 + $0x10] sm:$0xf]
        %v1303 = vld [vmem:[%s1247 + $0x14] sm:$0xf]
        %v1304 = vld [vmem:[%s1247 + $0x18] sm:$0xf]
        %v1305 = vld [vmem:[%s1247 + $0x1c] sm:$0xf]
        %v1306 = vld [vmem:[%s1247 + $0x20] sm:$0xf]
        %v1307 = vld [vmem:[%s1247 + $0x24] sm:$0xf]
        %v1308 = vld [vmem:[%s1247 + $0x28] sm:$0xf]
        %v1309 = vld [vmem:[%s1247 + $0x2c] sm:$0xf]
        %v1310 = vld [vmem:[%s1247 + $0x30] sm:$0xf]
        %v1311 = vld [vmem:[%s1247 + $0x34] sm:$0xf]
        %v1312 = vld [vmem:[%s1247 + $0x38] sm:$0xf]
        %v1313 = vld [vmem:[%s1247 + $0x3c] sm:$0xf]
        %v1314 = vld [vmem:[%s1247 + $0x40] sm:$0xf]
        %v1315 = vld [vmem:[%s1247 + $0x44] sm:$0xf]
        %v1316 = vld [vmem:[%s1247 + $0x48] sm:$0xf]
        %v1317 = vld [vmem:[%s1247 + $0x4c] sm:$0xf]
        %v1318 = vld [vmem:[%s1247 + $0x50] sm:$0xf]
        %v1319 = vld [vmem:[%s1247 + $0x54] sm:$0xf]
        %v1320 = vld [vmem:[%s1247 + $0x58] sm:$0xf]
        %v1321 = vld [vmem:[%s1247 + $0x5c] sm:$0xf]
        %v1322 = vld [vmem:[%s1247 + $0x60] sm:$0xf]
        %v1323 = vld [vmem:[%s1247 + $0x64] sm:$0xf]
        %v1324 = vld [vmem:[%s1247 + $0x68] sm:$0xf]
        %v1325 = vld [vmem:[%s1247 + $0x6c] sm:$0xf]
        %v1326 = vld [vmem:[%s1247 + $0x70] sm:$0xf]
        %v1327 = vld [vmem:[%s1247 + $0x74] sm:$0xf]
        %v1328 = vld [vmem:[%s1247 + $0x78] sm:$0xf]
        %v1329 = vld [vmem:[%s1247 + $0x7c] sm:$0xf]
        %v1330 = vld [vmem:[%s1247 + $0x80] sm:$0xf]
        %v1331 = vld [vmem:[%s1247 + $0x84] sm:$0xf]
        %v1332 = vld [vmem:[%s1247 + $0x88] sm:$0xf]
        %v1333 = vld [vmem:[%s1247 + $0x8c] sm:$0xf]
        %v1334 = vld [vmem:[%s1247 + $0x90] sm:$0xf]
        %v1335 = vld [vmem:[%s1247 + $0x94] sm:$0xf]
        %v1336 = vld [vmem:[%s1247 + $0x98] sm:$0xf]
        %v1337 = vld [vmem:[%s1247 + $0x9c] sm:$0xf]
        %v1338 = vld [vmem:[%s1247 + $0xa0] sm:$0xf]
        %v1339 = vld [vmem:[%s1247 + $0xa4] sm:$0xf]
        %v1340 = vld [vmem:[%s1247 + $0xa8] sm:$0xf]
        %v1341 = vld [vmem:[%s1247 + $0xac] sm:$0xf]
        %v1342 = vld [vmem:[%s1247 + $0xb0] sm:$0xf]
        %v1343 = vld [vmem:[%s1247 + $0xb4] sm:$0xf]
        %v1344 = vld [vmem:[%s1247 + $0xb8] sm:$0xf]
        %v1345 = vld [vmem:[%s1247 + $0xbc] sm:$0xf]
        %v1346 = vld [vmem:[%s1247 + $0xc0] sm:$0xf]
        %v1347 = vld [vmem:[%s1247 + $0xc4] sm:$0xf]
        %v1348 = vld [vmem:[%s1247 + $0xc8] sm:$0xf]
        %v1349 = vld [vmem:[%s1247 + $0xcc] sm:$0xf]
        %v1350 = vld [vmem:[%s1247 + $0xd0] sm:$0xf]
        %v1351 = vld [vmem:[%s1247 + $0xd4] sm:$0xf]
        %v1352 = vld [vmem:[%s1247 + $0xd8] sm:$0xf]
        %v1353 = vld [vmem:[%s1247 + $0xdc] sm:$0xf]
        %v1354 = vld [vmem:[%s1247 + $0xe0] sm:$0xf]
        %v1355 = vld [vmem:[%s1247 + $0xe4] sm:$0xf]
        %v1356 = vld [vmem:[%s1247 + $0xe8] sm:$0xf]
        %v1357 = vld [vmem:[%s1247 + $0xec] sm:$0xf]
        %v1358 = vld [vmem:[%s1247 + $0xf0] sm:$0xf]
        %v1359 = vld [vmem:[%s1247 + $0xf4] sm:$0xf]
        %v1360 = vld [vmem:[%s1247 + $0xf8] sm:$0xf]
        %v1361 = vld [vmem:[%s1247 + $0xfc] sm:$0xf]
        %v1362 = vld [vmem:[%s1247 + $0x100] sm:$0xf]
        %v1363 = vld [vmem:[%s1247 + $0x104] sm:$0xf]
        %v1364 = vld [vmem:[%s1247 + $0x108] sm:$0xf]
        %v1365 = vld [vmem:[%s1247 + $0x10c] sm:$0xf]
        %v1366 = vld [vmem:[%s1247 + $0x110] sm:$0xf]
        %v1367 = vld [vmem:[%s1247 + $0x114] sm:$0xf]
        %v1368 = vld [vmem:[%s1247 + $0x118] sm:$0xf]
        %v1369 = vld [vmem:[%s1247 + $0x11c] sm:$0xf]
        %v1370 = vld [vmem:[%s1247 + $0x120] sm:$0xf]
        %v1371 = vld [vmem:[%s1247 + $0x124] sm:$0xf]
        %v1372 = vld [vmem:[%s1247 + $0x128] sm:$0xf]
        %v1373 = vld [vmem:[%s1247 + $0x12c] sm:$0xf]
        %v1374 = vld [vmem:[%s1247 + $0x130] sm:$0xf]
        %v1375 = vld [vmem:[%s1247 + $0x134] sm:$0xf]
        %v1376 = vld [vmem:[%s1247 + $0x138] sm:$0xf]
        %v1377 = vld [vmem:[%s1247 + $0x13c] sm:$0xf]
        %v1378 = vld [vmem:[%s1247 + $0x140] sm:$0xf]
        %v1379 = vld [vmem:[%s1247 + $0x144] sm:$0xf]
        %v1380 = vld [vmem:[%s1247 + $0x148] sm:$0xf]
        %v1381 = vld [vmem:[%s1247 + $0x14c] sm:$0xf]
        %v1382 = vld [vmem:[%s1247 + $0x150] sm:$0xf]
        %v1383 = vld [vmem:[%s1247 + $0x154] sm:$0xf]
        %v1384 = vld [vmem:[%s1247 + $0x158] sm:$0xf]
        %v1385 = vld [vmem:[%s1247 + $0x15c] sm:$0xf]
        %v1386 = vld [vmem:[%s1247 + $0x160] sm:$0xf]
        %v1387 = vld [vmem:[%s1247 + $0x164] sm:$0xf]
        %v1388 = vld [vmem:[%s1247 + $0x168] sm:$0xf]
        %v1389 = vld [vmem:[%s1247 + $0x16c] sm:$0xf]
        %v1390 = vld [vmem:[%s1247 + $0x170] sm:$0xf]
        %v1391 = vld [vmem:[%s1247 + $0x174] sm:$0xf]
        %v1392 = vld [vmem:[%s1247 + $0x178] sm:$0xf]
        %v1393 = vld [vmem:[%s1247 + $0x17c] sm:$0xf]
        %v1394 = vld [vmem:[%s1247 + $0x180] sm:$0xf]
        %v1395 = vld [vmem:[%s1247 + $0x184] sm:$0xf]
        %v1396 = vld [vmem:[%s1247 + $0x188] sm:$0xf]
        %v1397 = vld [vmem:[%s1247 + $0x18c] sm:$0xf]
        %v1398 = vld [vmem:[%s1247 + $0x190] sm:$0xf]
        %v1399 = vld [vmem:[%s1247 + $0x194] sm:$0xf]
        %v1400 = vld [vmem:[%s1247 + $0x198] sm:$0xf]
        %v1401 = vld [vmem:[%s1247 + $0x19c] sm:$0xf]
        %v1402 = vld [vmem:[%s1247 + $0x1a0] sm:$0xf]
        %v1403 = vld [vmem:[%s1247 + $0x1a4] sm:$0xf]
        %v1404 = vld [vmem:[%s1247 + $0x1a8] sm:$0xf]
        %v1405 = vld [vmem:[%s1247 + $0x1ac] sm:$0xf]
        %v1406 = vld [vmem:[%s1247 + $0x1b0] sm:$0xf]
        %v1407 = vld [vmem:[%s1247 + $0x1b4] sm:$0xf]
        %v1408 = vld [vmem:[%s1247 + $0x1b8] sm:$0xf]
        %v1409 = vld [vmem:[%s1247 + $0x1bc] sm:$0xf]
        %v1410 = vld [vmem:[%s1247 + $0x1c0] sm:$0xf]
        %v1411 = vld [vmem:[%s1247 + $0x1c4] sm:$0xf]
        %v1412 = vld [vmem:[%s1247 + $0x1c8] sm:$0xf]
        %v1413 = vld [vmem:[%s1247 + $0x1cc] sm:$0xf]
        %v1414 = vld [vmem:[%s1247 + $0x1d0] sm:$0xf]
        %v1415 = vld [vmem:[%s1247 + $0x1d4] sm:$0xf]
        %v1416 = vld [vmem:[%s1247 + $0x1d8] sm:$0xf]
        %v1417 = vld [vmem:[%s1247 + $0x1dc] sm:$0xf]
        %v1418 = vld [vmem:[%s1247 + $0x1e0] sm:$0xf]
        %v1419 = vld [vmem:[%s1247 + $0x1e4] sm:$0xf]
        %v1420 = vld [vmem:[%s1247 + $0x1e8] sm:$0xf]
        %v1421 = vld [vmem:[%s1247 + $0x1ec] sm:$0xf]
        %v1422 = vld [vmem:[%s1247 + $0x1f0] sm:$0xf]
        %v1423 = vld [vmem:[%s1247 + $0x1f4] sm:$0xf]
        %v1424 = vld [vmem:[%s1247 + $0x1f8] sm:$0xf]
        %v1425 = vld [vmem:[%s1247 + $0x1fc] sm:$0xf]
        %v1426 = vld [vmem:[%s1247 + $0x200] sm:$0xf]
        %v1427 = vld [vmem:[%s1247 + $0x204] sm:$0xf]
        %v1428 = vld [vmem:[%s1247 + $0x208] sm:$0xf]
        %v1429 = vld [vmem:[%s1247 + $0x20c] sm:$0xf]
        %v1430 = vld [vmem:[%s1247 + $0x210] sm:$0xf]
        %v1431 = vld [vmem:[%s1247 + $0x214] sm:$0xf]
        %v1432 = vld [vmem:[%s1247 + $0x218] sm:$0xf]
        %v1433 = vld [vmem:[%s1247 + $0x21c] sm:$0xf]
        %v1434 = vld [vmem:[%s1247 + $0x220] sm:$0xf]
        %v1435 = vld [vmem:[%s1247 + $0x224] sm:$0xf]
        %v1436 = vld [vmem:[%s1247 + $0x228] sm:$0xf]
        %v1437 = vld [vmem:[%s1247 + $0x22c] sm:$0xf]
        %v1438 = vld [vmem:[%s1247 + $0x230] sm:$0xf]
        %v1439 = vld [vmem:[%s1247 + $0x234] sm:$0xf]
        %v1440 = vld [vmem:[%s1247 + $0x238] sm:$0xf]
        %v1441 = vld [vmem:[%s1247 + $0x23c] sm:$0xf]
        %v1442 = vld [vmem:[%s1247 + $0x240] sm:$0xf]
        %v1443 = vld [vmem:[%s1247 + $0x244] sm:$0xf]
        %v1444 = vld [vmem:[%s1247 + $0x248] sm:$0xf]
        %v1445 = vld [vmem:[%s1247 + $0x24c] sm:$0xf]
        %v1446 = vld [vmem:[%s1247 + $0x250] sm:$0xf]
        %v1447 = vld [vmem:[%s1247 + $0x254] sm:$0xf]
        %v1448 = vld [vmem:[%s1247 + $0x258] sm:$0xf]
        %v1449 = vld [vmem:[%s1247 + $0x25c] sm:$0xf]
        %v1450 = vld [vmem:[%s1247 + $0x260] sm:$0xf]
        %v1451 = vld [vmem:[%s1247 + $0x264] sm:$0xf]
        %v1452 = vld [vmem:[%s1247 + $0x268] sm:$0xf]
        %v1453 = vld [vmem:[%s1247 + $0x26c] sm:$0xf]
        %v1454 = vld [vmem:[%s1247 + $0x270] sm:$0xf]
        %v1455 = vld [vmem:[%s1247 + $0x274] sm:$0xf]
        %v1456 = vld [vmem:[%s1247 + $0x278] sm:$0xf]
        %v1457 = vld [vmem:[%s1247 + $0x27c] sm:$0xf]
        %v1458 = vld [vmem:[%s1247 + $0x280] sm:$0xf]
        %v1459 = vld [vmem:[%s1247 + $0x284] sm:$0xf]
        %v1460 = vld [vmem:[%s1247 + $0x288] sm:$0xf]
        %v1461 = vld [vmem:[%s1247 + $0x28c] sm:$0xf]
        %v1462 = vld [vmem:[%s1247 + $0x290] sm:$0xf]
        %v1463 = vld [vmem:[%s1247 + $0x294] sm:$0xf]
        %v1464 = vld [vmem:[%s1247 + $0x298] sm:$0xf]
        %v1465 = vld [vmem:[%s1247 + $0x29c] sm:$0xf]
        %v1466 = vld [vmem:[%s1247 + $0x2a0] sm:$0xf]
        %v1467 = vld [vmem:[%s1247 + $0x2a4] sm:$0xf]
        %v1468 = vld [vmem:[%s1247 + $0x2a8] sm:$0xf]
        %v1469 = vld [vmem:[%s1247 + $0x2ac] sm:$0xf]
        %v1470 = vld [vmem:[%s1247 + $0x2b0] sm:$0xf]
        %v1471 = vld [vmem:[%s1247 + $0x2b4] sm:$0xf]
        %v1472 = vld [vmem:[%s1247 + $0x2b8] sm:$0xf]
        %v1473 = vld [vmem:[%s1247 + $0x2bc] sm:$0xf]
        %v1474 = vld [vmem:[%s1247 + $0x2c0] sm:$0xf]
        %v1475 = vld [vmem:[%s1247 + $0x2c4] sm:$0xf]
        %v1476 = vld [vmem:[%s1247 + $0x2c8] sm:$0xf]
        %v1477 = vld [vmem:[%s1247 + $0x2cc] sm:$0xf]
        %v1478 = vld [vmem:[%s1247 + $0x2d0] sm:$0xf]
        %v1479 = vld [vmem:[%s1247 + $0x2d4] sm:$0xf]
        %v1480 = vld [vmem:[%s1247 + $0x2d8] sm:$0xf]
        %v1481 = vld [vmem:[%s1247 + $0x2dc] sm:$0xf]
        %v1482 = vld [vmem:[%s1247 + $0x2e0] sm:$0xf]
        %v1483 = vld [vmem:[%s1247 + $0x2e4] sm:$0xf]
        %v1484 = vld [vmem:[%s1247 + $0x2e8] sm:$0xf]
        %v1485 = vld [vmem:[%s1247 + $0x2ec] sm:$0xf]
        %v1486 = vld [vmem:[%s1247 + $0x2f0] sm:$0xf]
        %v1487 = vld [vmem:[%s1247 + $0x2f4] sm:$0xf]
        %v1488 = vld [vmem:[%s1247 + $0x2f8] sm:$0xf]
        %v1489 = vld [vmem:[%s1247 + $0x2fc] sm:$0xf]
        %v1490 = vld [vmem:[%s1247 + $0x300] sm:$0xf]
        %v1491 = vld [vmem:[%s1247 + $0x304] sm:$0xf]
        %v1492 = vld [vmem:[%s1247 + $0x308] sm:$0xf]
        %v1493 = vld [vmem:[%s1247 + $0x30c] sm:$0xf]
        %v1494 = vld [vmem:[%s1247 + $0x310] sm:$0xf]
        %v1495 = vld [vmem:[%s1247 + $0x314] sm:$0xf]
        %v1496 = vld [vmem:[%s1247 + $0x318] sm:$0xf]
        %v1497 = vld [vmem:[%s1247 + $0x31c] sm:$0xf]
        %v1498 = vld [vmem:[%s1247 + $0x320] sm:$0xf]
        %v1499 = vld [vmem:[%s1247 + $0x324] sm:$0xf]
        %v1500 = vld [vmem:[%s1247 + $0x328] sm:$0xf]
        %v1501 = vld [vmem:[%s1247 + $0x32c] sm:$0xf]
        %v1502 = vld [vmem:[%s1247 + $0x330] sm:$0xf]
        %v1503 = vld [vmem:[%s1247 + $0x334] sm:$0xf]
        %v1504 = vld [vmem:[%s1247 + $0x338] sm:$0xf]
        %v1505 = vld [vmem:[%s1247 + $0x33c] sm:$0xf]
        %v1506 = vld [vmem:[%s1247 + $0x340] sm:$0xf]
        %v1507 = vld [vmem:[%s1247 + $0x344] sm:$0xf]
        %v1508 = vld [vmem:[%s1247 + $0x348] sm:$0xf]
        %v1509 = vld [vmem:[%s1247 + $0x34c] sm:$0xf]
        %v1510 = vld [vmem:[%s1247 + $0x350] sm:$0xf]
        %v1511 = vld [vmem:[%s1247 + $0x354] sm:$0xf]
        %v1512 = vld [vmem:[%s1247 + $0x358] sm:$0xf]
        %v1513 = vld [vmem:[%s1247 + $0x35c] sm:$0xf]
        %v1514 = vld [vmem:[%s1247 + $0x360] sm:$0xf]
        %v1515 = vld [vmem:[%s1247 + $0x364] sm:$0xf]
        %v1516 = vld [vmem:[%s1247 + $0x368] sm:$0xf]
        %v1517 = vld [vmem:[%s1247 + $0x36c] sm:$0xf]
        %v1518 = vld [vmem:[%s1247 + $0x370] sm:$0xf]
        %v1519 = vld [vmem:[%s1247 + $0x374] sm:$0xf]
        %v1520 = vld [vmem:[%s1247 + $0x378] sm:$0xf]
        %v1521 = vld [vmem:[%s1247 + $0x37c] sm:$0xf]
        %v1522 = vld [vmem:[%s1247 + $0x380] sm:$0xf]
        %v1523 = vld [vmem:[%s1247 + $0x384] sm:$0xf]
        %v1524 = vld [vmem:[%s1247 + $0x388] sm:$0xf]
        %v1525 = vld [vmem:[%s1247 + $0x38c] sm:$0xf]
        %v1526 = vld [vmem:[%s1247 + $0x390] sm:$0xf]
        %v1527 = vld [vmem:[%s1247 + $0x394] sm:$0xf]
        %v1528 = vld [vmem:[%s1247 + $0x398] sm:$0xf]
        %v1529 = vld [vmem:[%s1247 + $0x39c] sm:$0xf]
        %v1530 = vld [vmem:[%s1247 + $0x3a0] sm:$0xf]
        %v1531 = vld [vmem:[%s1247 + $0x3a4] sm:$0xf]
        %v1532 = vld [vmem:[%s1247 + $0x3a8] sm:$0xf]
        %v1533 = vld [vmem:[%s1247 + $0x3ac] sm:$0xf]
        %v1534 = vld [vmem:[%s1247 + $0x3b0] sm:$0xf]
        %v1535 = vld [vmem:[%s1247 + $0x3b4] sm:$0xf]
        %v1536 = vld [vmem:[%s1247 + $0x3b8] sm:$0xf]
        %v1537 = vld [vmem:[%s1247 + $0x3bc] sm:$0xf]
        %v1538 = vld [vmem:[%s1247 + $0x3c0] sm:$0xf]
        %v1539 = vld [vmem:[%s1247 + $0x3c4] sm:$0xf]
        %v1540 = vld [vmem:[%s1247 + $0x3c8] sm:$0xf]
        %v1541 = vld [vmem:[%s1247 + $0x3cc] sm:$0xf]
        %v1542 = vld [vmem:[%s1247 + $0x3d0] sm:$0xf]
        %v1543 = vld [vmem:[%s1247 + $0x3d4] sm:$0xf]
        %v1544 = vld [vmem:[%s1247 + $0x3d8] sm:$0xf]
        %v1545 = vld [vmem:[%s1247 + $0x3dc] sm:$0xf]
        %v1546 = vld [vmem:[%s1247 + $0x3e0] sm:$0xf]
        %v1547 = vld [vmem:[%s1247 + $0x3e4] sm:$0xf]
        %v1548 = vld [vmem:[%s1247 + $0x3e8] sm:$0xf]
        %v1549 = vld [vmem:[%s1247 + $0x3ec] sm:$0xf]
        %v1550 = vld [vmem:[%s1247 + $0x3f0] sm:$0xf]
        %v1551 = vld [vmem:[%s1247 + $0x3f4] sm:$0xf]
        %v1552 = vld [vmem:[%s1247 + $0x3f8] sm:$0xf]
        %v1553 = vld [vmem:[%s1247 + $0x3fc] sm:$0xf]
        %v1570 = vunpack.c.l.b16 %v1282
        %v1571 = vunpack.c.h.b16 %v1282
        %v1572 = vunpack.c.l.b16 %v1283
        %v1573 = vunpack.c.h.b16 %v1283
        %v1574 = vunpack.c.l.b16 %v1284
        %v1575 = vunpack.c.h.b16 %v1284
        %v1576 = vunpack.c.l.b16 %v1285
        %v1577 = vunpack.c.h.b16 %v1285
        %v1578 = vunpack.c.l.b16 %v1286
        %v1579 = vunpack.c.h.b16 %v1286
        %v1580 = vunpack.c.l.b16 %v1287
        %v1581 = vunpack.c.h.b16 %v1287
        %v1582 = vunpack.c.l.b16 %v1288
        %v1583 = vunpack.c.h.b16 %v1288
        %v1584 = vunpack.c.l.b16 %v1289
        %v1585 = vunpack.c.h.b16 %v1289
        %v1586 = vunpack.c.l.b16 %v1290
        %v1587 = vunpack.c.h.b16 %v1290
        %v1588 = vunpack.c.l.b16 %v1291
        %v1589 = vunpack.c.h.b16 %v1291
        %v1590 = vunpack.c.l.b16 %v1292
        %v1591 = vunpack.c.h.b16 %v1292
        %v1592 = vunpack.c.l.b16 %v1293
        %v1593 = vunpack.c.h.b16 %v1293
        %v1594 = vunpack.c.l.b16 %v1294
        %v1595 = vunpack.c.h.b16 %v1294
        %v1596 = vunpack.c.l.b16 %v1295
        %v1597 = vunpack.c.h.b16 %v1295
        %v1598 = vunpack.c.l.b16 %v1296
        %v1599 = vunpack.c.h.b16 %v1296
        %v1600 = vunpack.c.l.b16 %v1297
        %v1601 = vunpack.c.h.b16 %v1297
        %v1602 = vpack.c.b16 %v1586, %v1570
        %v1603 = vpack.c.b16 %v1587, %v1571
        %v1604 = vpack.c.b16 %v1588, %v1572
        %v1605 = vpack.c.b16 %v1589, %v1573
        %v1606 = vpack.c.b16 %v1590, %v1574
        %v1607 = vpack.c.b16 %v1591, %v1575
        %v1608 = vpack.c.b16 %v1592, %v1576
        %v1609 = vpack.c.b16 %v1593, %v1577
        %v1610 = vpack.c.b16 %v1594, %v1578
        %v1611 = vpack.c.b16 %v1595, %v1579
        %v1612 = vpack.c.b16 %v1596, %v1580
        %v1613 = vpack.c.b16 %v1597, %v1581
        %v1614 = vpack.c.b16 %v1598, %v1582
        %v1615 = vpack.c.b16 %v1599, %v1583
        %v1616 = vpack.c.b16 %v1600, %v1584
        %v1617 = vpack.c.b16 %v1601, %v1585
        %v1890 = vunpack.c.l.b16 %v1298
        %v1891 = vunpack.c.l.b16 %v1299
        %v1892 = vunpack.c.l.b16 %v1300
        %v1893 = vunpack.c.l.b16 %v1301
        %v1894 = vunpack.c.l.b16 %v1302
        %v1895 = vunpack.c.l.b16 %v1303
        %v1896 = vunpack.c.l.b16 %v1304
        %v1897 = vunpack.c.l.b16 %v1305
        %v1898 = vunpack.c.l.b16 %v1306
        %v1899 = vunpack.c.l.b16 %v1307
        %v1900 = vunpack.c.l.b16 %v1308
        %v1901 = vunpack.c.l.b16 %v1309
        %v1902 = vunpack.c.l.b16 %v1310
        %v1903 = vunpack.c.l.b16 %v1311
        %v1904 = vunpack.c.l.b16 %v1312
        %v1905 = vunpack.c.l.b16 %v1313
        %v1906 = vunpack.c.l.b16 %v1314
        %v1907 = vunpack.c.l.b16 %v1315
        %v1908 = vunpack.c.l.b16 %v1316
        %v1909 = vunpack.c.l.b16 %v1317
        %v1910 = vunpack.c.l.b16 %v1318
        %v1911 = vunpack.c.l.b16 %v1319
        %v1912 = vunpack.c.l.b16 %v1320
        %v1913 = vunpack.c.l.b16 %v1321
        %v1914 = vunpack.c.l.b16 %v1322
        %v1915 = vunpack.c.l.b16 %v1323
        %v1916 = vunpack.c.l.b16 %v1324
        %v1917 = vunpack.c.l.b16 %v1325
        %v1918 = vunpack.c.l.b16 %v1326
        %v1919 = vunpack.c.l.b16 %v1327
        %v1920 = vunpack.c.l.b16 %v1328
        %v1921 = vunpack.c.l.b16 %v1329
        %v1922 = vunpack.c.l.b16 %v1330
        %v1923 = vunpack.c.l.b16 %v1331
        %v1924 = vunpack.c.l.b16 %v1332
        %v1925 = vunpack.c.l.b16 %v1333
        %v1926 = vunpack.c.l.b16 %v1334
        %v1927 = vunpack.c.l.b16 %v1335
        %v1928 = vunpack.c.l.b16 %v1336
        %v1929 = vunpack.c.l.b16 %v1337
        %v1930 = vunpack.c.l.b16 %v1338
        %v1931 = vunpack.c.l.b16 %v1339
        %v1932 = vunpack.c.l.b16 %v1340
        %v1933 = vunpack.c.l.b16 %v1341
        %v1934 = vunpack.c.l.b16 %v1342
        %v1935 = vunpack.c.l.b16 %v1343
        %v1936 = vunpack.c.l.b16 %v1344
        %v1937 = vunpack.c.l.b16 %v1345
        %v1938 = vunpack.c.l.b16 %v1346
        %v1939 = vunpack.c.l.b16 %v1347
        %v1940 = vunpack.c.l.b16 %v1348
        %v1941 = vunpack.c.l.b16 %v1349
        %v1942 = vunpack.c.l.b16 %v1350
        %v1943 = vunpack.c.l.b16 %v1351
        %v1944 = vunpack.c.l.b16 %v1352
        %v1945 = vunpack.c.l.b16 %v1353
        %v1946 = vunpack.c.l.b16 %v1354
        %v1947 = vunpack.c.l.b16 %v1355
        %v1948 = vunpack.c.l.b16 %v1356
        %v1949 = vunpack.c.l.b16 %v1357
        %v1950 = vunpack.c.l.b16 %v1358
        %v1951 = vunpack.c.l.b16 %v1359
        %v1952 = vunpack.c.l.b16 %v1360
        %v1953 = vunpack.c.l.b16 %v1361
        %v1954 = vunpack.c.l.b16 %v1362
        %v1955 = vunpack.c.l.b16 %v1363
        %v1956 = vunpack.c.l.b16 %v1364
        %v1957 = vunpack.c.l.b16 %v1365
        %v1958 = vunpack.c.l.b16 %v1366
        %v1959 = vunpack.c.l.b16 %v1367
        %v1960 = vunpack.c.l.b16 %v1368
        %v1961 = vunpack.c.l.b16 %v1369
        %v1962 = vunpack.c.l.b16 %v1370
        %v1963 = vunpack.c.l.b16 %v1371
        %v1964 = vunpack.c.l.b16 %v1372
        %v1965 = vunpack.c.l.b16 %v1373
        %v1966 = vunpack.c.l.b16 %v1374
        %v1967 = vunpack.c.l.b16 %v1375
        %v1968 = vunpack.c.l.b16 %v1376
        %v1969 = vunpack.c.l.b16 %v1377
        %v1970 = vunpack.c.l.b16 %v1378
        %v1971 = vunpack.c.l.b16 %v1379
        %v1972 = vunpack.c.l.b16 %v1380
        %v1973 = vunpack.c.l.b16 %v1381
        %v1974 = vunpack.c.l.b16 %v1382
        %v1975 = vunpack.c.l.b16 %v1383
        %v1976 = vunpack.c.l.b16 %v1384
        %v1977 = vunpack.c.l.b16 %v1385
        %v1978 = vunpack.c.l.b16 %v1386
        %v1979 = vunpack.c.l.b16 %v1387
        %v1980 = vunpack.c.l.b16 %v1388
        %v1981 = vunpack.c.l.b16 %v1389
        %v1982 = vunpack.c.l.b16 %v1390
        %v1983 = vunpack.c.l.b16 %v1391
        %v1984 = vunpack.c.l.b16 %v1392
        %v1985 = vunpack.c.l.b16 %v1393
        %v1986 = vunpack.c.l.b16 %v1394
        %v1987 = vunpack.c.l.b16 %v1395
        %v1988 = vunpack.c.l.b16 %v1396
        %v1989 = vunpack.c.l.b16 %v1397
        %v1990 = vunpack.c.l.b16 %v1398
        %v1991 = vunpack.c.l.b16 %v1399
        %v1992 = vunpack.c.l.b16 %v1400
        %v1993 = vunpack.c.l.b16 %v1401
        %v1994 = vunpack.c.l.b16 %v1402
        %v1995 = vunpack.c.l.b16 %v1403
        %v1996 = vunpack.c.l.b16 %v1404
        %v1997 = vunpack.c.l.b16 %v1405
        %v1998 = vunpack.c.l.b16 %v1406
        %v1999 = vunpack.c.l.b16 %v1407
        %v2000 = vunpack.c.l.b16 %v1408
        %v2001 = vunpack.c.l.b16 %v1409
        %v2002 = vunpack.c.l.b16 %v1410
        %v2003 = vunpack.c.l.b16 %v1411
        %v2004 = vunpack.c.l.b16 %v1412
        %v2005 = vunpack.c.l.b16 %v1413
        %v2006 = vunpack.c.l.b16 %v1414
        %v2007 = vunpack.c.l.b16 %v1415
        %v2008 = vunpack.c.l.b16 %v1416
        %v2009 = vunpack.c.l.b16 %v1417
        %v2010 = vunpack.c.l.b16 %v1418
        %v2011 = vunpack.c.l.b16 %v1419
        %v2012 = vunpack.c.l.b16 %v1420
        %v2013 = vunpack.c.l.b16 %v1421
        %v2014 = vunpack.c.l.b16 %v1422
        %v2015 = vunpack.c.l.b16 %v1423
        %v2016 = vunpack.c.l.b16 %v1424
        %v2017 = vunpack.c.l.b16 %v1425
        %v2018 = vunpack.c.l.b16 %v1426
        %v2019 = vunpack.c.l.b16 %v1427
        %v2020 = vunpack.c.l.b16 %v1428
        %v2021 = vunpack.c.l.b16 %v1429
        %v2022 = vunpack.c.l.b16 %v1430
        %v2023 = vunpack.c.l.b16 %v1431
        %v2024 = vunpack.c.l.b16 %v1432
        %v2025 = vunpack.c.l.b16 %v1433
        %v2026 = vunpack.c.l.b16 %v1434
        %v2027 = vunpack.c.l.b16 %v1435
        %v2028 = vunpack.c.l.b16 %v1436
        %v2029 = vunpack.c.l.b16 %v1437
        %v2030 = vunpack.c.l.b16 %v1438
        %v2031 = vunpack.c.l.b16 %v1439
        %v2032 = vunpack.c.l.b16 %v1440
        %v2033 = vunpack.c.l.b16 %v1441
        %v2034 = vunpack.c.l.b16 %v1442
        %v2035 = vunpack.c.l.b16 %v1443
        %v2036 = vunpack.c.l.b16 %v1444
        %v2037 = vunpack.c.l.b16 %v1445
        %v2038 = vunpack.c.l.b16 %v1446
        %v2039 = vunpack.c.l.b16 %v1447
        %v2040 = vunpack.c.l.b16 %v1448
        %v2041 = vunpack.c.l.b16 %v1449
        %v2042 = vunpack.c.l.b16 %v1450
        %v2043 = vunpack.c.l.b16 %v1451
        %v2044 = vunpack.c.l.b16 %v1452
        %v2045 = vunpack.c.l.b16 %v1453
        %v2046 = vunpack.c.l.b16 %v1454
        %v2047 = vunpack.c.l.b16 %v1455
        %v2048 = vunpack.c.l.b16 %v1456
        %v2049 = vunpack.c.l.b16 %v1457
        %v2050 = vunpack.c.l.b16 %v1458
        %v2051 = vunpack.c.l.b16 %v1459
        %v2052 = vunpack.c.l.b16 %v1460
        %v2053 = vunpack.c.l.b16 %v1461
        %v2054 = vunpack.c.l.b16 %v1462
        %v2055 = vunpack.c.l.b16 %v1463
        %v2056 = vunpack.c.l.b16 %v1464
        %v2057 = vunpack.c.l.b16 %v1465
        %v2058 = vunpack.c.l.b16 %v1466
        %v2059 = vunpack.c.l.b16 %v1467
        %v2060 = vunpack.c.l.b16 %v1468
        %v2061 = vunpack.c.l.b16 %v1469
        %v2062 = vunpack.c.l.b16 %v1470
        %v2063 = vunpack.c.l.b16 %v1471
        %v2064 = vunpack.c.l.b16 %v1472
        %v2065 = vunpack.c.l.b16 %v1473
        %v2066 = vunpack.c.l.b16 %v1474
        %v2067 = vunpack.c.l.b16 %v1475
        %v2068 = vunpack.c.l.b16 %v1476
        %v2069 = vunpack.c.l.b16 %v1477
        %v2070 = vunpack.c.l.b16 %v1478
        %v2071 = vunpack.c.l.b16 %v1479
        %v2072 = vunpack.c.l.b16 %v1480
        %v2073 = vunpack.c.l.b16 %v1481
        %v2074 = vunpack.c.l.b16 %v1482
        %v2075 = vunpack.c.l.b16 %v1483
        %v2076 = vunpack.c.l.b16 %v1484
        %v2077 = vunpack.c.l.b16 %v1485
        %v2078 = vunpack.c.l.b16 %v1486
        %v2079 = vunpack.c.l.b16 %v1487
        %v2080 = vunpack.c.l.b16 %v1488
        %v2081 = vunpack.c.l.b16 %v1489
        %v2082 = vunpack.c.l.b16 %v1490
        %v2083 = vunpack.c.l.b16 %v1491
        %v2084 = vunpack.c.l.b16 %v1492
        %v2085 = vunpack.c.l.b16 %v1493
        %v2086 = vunpack.c.l.b16 %v1494
        %v2087 = vunpack.c.l.b16 %v1495
        %v2088 = vunpack.c.l.b16 %v1496
        %v2089 = vunpack.c.l.b16 %v1497
        %v2090 = vunpack.c.l.b16 %v1498
        %v2091 = vunpack.c.l.b16 %v1499
        %v2092 = vunpack.c.l.b16 %v1500
        %v2093 = vunpack.c.l.b16 %v1501
        %v2094 = vunpack.c.l.b16 %v1502
        %v2095 = vunpack.c.l.b16 %v1503
        %v2096 = vunpack.c.l.b16 %v1504
        %v2097 = vunpack.c.l.b16 %v1505
        %v2098 = vunpack.c.l.b16 %v1506
        %v2099 = vunpack.c.l.b16 %v1507
        %v2100 = vunpack.c.l.b16 %v1508
        %v2101 = vunpack.c.l.b16 %v1509
        %v2102 = vunpack.c.l.b16 %v1510
        %v2103 = vunpack.c.l.b16 %v1511
        %v2104 = vunpack.c.l.b16 %v1512
        %v2105 = vunpack.c.l.b16 %v1513
        %v2106 = vunpack.c.l.b16 %v1514
        %v2107 = vunpack.c.l.b16 %v1515
        %v2108 = vunpack.c.l.b16 %v1516
        %v2109 = vunpack.c.l.b16 %v1517
        %v2110 = vunpack.c.l.b16 %v1518
        %v2111 = vunpack.c.l.b16 %v1519
        %v2112 = vunpack.c.l.b16 %v1520
        %v2113 = vunpack.c.l.b16 %v1521
        %v2114 = vunpack.c.l.b16 %v1522
        %v2115 = vunpack.c.l.b16 %v1523
        %v2116 = vunpack.c.l.b16 %v1524
        %v2117 = vunpack.c.l.b16 %v1525
        %v2118 = vunpack.c.l.b16 %v1526
        %v2119 = vunpack.c.l.b16 %v1527
        %v2120 = vunpack.c.l.b16 %v1528
        %v2121 = vunpack.c.l.b16 %v1529
        %v2122 = vunpack.c.l.b16 %v1530
        %v2123 = vunpack.c.l.b16 %v1531
        %v2124 = vunpack.c.l.b16 %v1532
        %v2125 = vunpack.c.l.b16 %v1533
        %v2126 = vunpack.c.l.b16 %v1534
        %v2127 = vunpack.c.l.b16 %v1535
        %v2128 = vunpack.c.l.b16 %v1536
        %v2129 = vunpack.c.l.b16 %v1537
        %v2130 = vunpack.c.l.b16 %v1538
        %v2131 = vunpack.c.l.b16 %v1539
        %v2132 = vunpack.c.l.b16 %v1540
        %v2133 = vunpack.c.l.b16 %v1541
        %v2134 = vunpack.c.l.b16 %v1542
        %v2135 = vunpack.c.l.b16 %v1543
        %v2136 = vunpack.c.l.b16 %v1544
        %v2137 = vunpack.c.l.b16 %v1545
        %v2138 = vunpack.c.l.b16 %v1546
        %v2139 = vunpack.c.l.b16 %v1547
        %v2140 = vunpack.c.l.b16 %v1548
        %v2141 = vunpack.c.l.b16 %v1549
        %v2142 = vunpack.c.l.b16 %v1550
        %v2143 = vunpack.c.l.b16 %v1551
        %v2144 = vunpack.c.l.b16 %v1552
        %v2145 = vunpack.c.l.b16 %v1553
        %v2146 = vpack.c.b16 %v1891, %v1890
        %v2147 = vpack.c.b16 %v1893, %v1892
        %v2148 = vpack.c.b16 %v1895, %v1894
        %v2149 = vpack.c.b16 %v1897, %v1896
        %v2150 = vpack.c.b16 %v1899, %v1898
        %v2151 = vpack.c.b16 %v1901, %v1900
        %v2152 = vpack.c.b16 %v1903, %v1902
        %v2153 = vpack.c.b16 %v1905, %v1904
        %v2154 = vpack.c.b16 %v1907, %v1906
        %v2155 = vpack.c.b16 %v1909, %v1908
        %v2156 = vpack.c.b16 %v1911, %v1910
        %v2157 = vpack.c.b16 %v1913, %v1912
        %v2158 = vpack.c.b16 %v1915, %v1914
        %v2159 = vpack.c.b16 %v1917, %v1916
        %v2160 = vpack.c.b16 %v1919, %v1918
        %v2161 = vpack.c.b16 %v1921, %v1920
        %v2162 = vpack.c.b16 %v1923, %v1922
        %v2163 = vpack.c.b16 %v1925, %v1924
        %v2164 = vpack.c.b16 %v1927, %v1926
        %v2165 = vpack.c.b16 %v1929, %v1928
        %v2166 = vpack.c.b16 %v1931, %v1930
        %v2167 = vpack.c.b16 %v1933, %v1932
        %v2168 = vpack.c.b16 %v1935, %v1934
        %v2169 = vpack.c.b16 %v1937, %v1936
        %v2170 = vpack.c.b16 %v1939, %v1938
        %v2171 = vpack.c.b16 %v1941, %v1940
        %v2172 = vpack.c.b16 %v1943, %v1942
        %v2173 = vpack.c.b16 %v1945, %v1944
        %v2174 = vpack.c.b16 %v1947, %v1946
        %v2175 = vpack.c.b16 %v1949, %v1948
        %v2176 = vpack.c.b16 %v1951, %v1950
        %v2177 = vpack.c.b16 %v1953, %v1952
        %v2178 = vpack.c.b16 %v1955, %v1954
        %v2179 = vpack.c.b16 %v1957, %v1956
        %v2180 = vpack.c.b16 %v1959, %v1958
        %v2181 = vpack.c.b16 %v1961, %v1960
        %v2182 = vpack.c.b16 %v1963, %v1962
        %v2183 = vpack.c.b16 %v1965, %v1964
        %v2184 = vpack.c.b16 %v1967, %v1966
        %v2185 = vpack.c.b16 %v1969, %v1968
        %v2186 = vpack.c.b16 %v1971, %v1970
        %v2187 = vpack.c.b16 %v1973, %v1972
        %v2188 = vpack.c.b16 %v1975, %v1974
        %v2189 = vpack.c.b16 %v1977, %v1976
        %v2190 = vpack.c.b16 %v1979, %v1978
        %v2191 = vpack.c.b16 %v1981, %v1980
        %v2192 = vpack.c.b16 %v1983, %v1982
        %v2193 = vpack.c.b16 %v1985, %v1984
        %v2194 = vpack.c.b16 %v1987, %v1986
        %v2195 = vpack.c.b16 %v1989, %v1988
        %v2196 = vpack.c.b16 %v1991, %v1990
        %v2197 = vpack.c.b16 %v1993, %v1992
        %v2198 = vpack.c.b16 %v1995, %v1994
        %v2199 = vpack.c.b16 %v1997, %v1996
        %v2200 = vpack.c.b16 %v1999, %v1998
        %v2201 = vpack.c.b16 %v2001, %v2000
        %v2202 = vpack.c.b16 %v2003, %v2002
        %v2203 = vpack.c.b16 %v2005, %v2004
        %v2204 = vpack.c.b16 %v2007, %v2006
        %v2205 = vpack.c.b16 %v2009, %v2008
        %v2206 = vpack.c.b16 %v2011, %v2010
        %v2207 = vpack.c.b16 %v2013, %v2012
        %v2208 = vpack.c.b16 %v2015, %v2014
        %v2209 = vpack.c.b16 %v2017, %v2016
        %v2210 = vpack.c.b16 %v2019, %v2018
        %v2211 = vpack.c.b16 %v2021, %v2020
        %v2212 = vpack.c.b16 %v2023, %v2022
        %v2213 = vpack.c.b16 %v2025, %v2024
        %v2214 = vpack.c.b16 %v2027, %v2026
        %v2215 = vpack.c.b16 %v2029, %v2028
        %v2216 = vpack.c.b16 %v2031, %v2030
        %v2217 = vpack.c.b16 %v2033, %v2032
        %v2218 = vpack.c.b16 %v2035, %v2034
        %v2219 = vpack.c.b16 %v2037, %v2036
        %v2220 = vpack.c.b16 %v2039, %v2038
        %v2221 = vpack.c.b16 %v2041, %v2040
        %v2222 = vpack.c.b16 %v2043, %v2042
        %v2223 = vpack.c.b16 %v2045, %v2044
        %v2224 = vpack.c.b16 %v2047, %v2046
        %v2225 = vpack.c.b16 %v2049, %v2048
        %v2226 = vpack.c.b16 %v2051, %v2050
        %v2227 = vpack.c.b16 %v2053, %v2052
        %v2228 = vpack.c.b16 %v2055, %v2054
        %v2229 = vpack.c.b16 %v2057, %v2056
        %v2230 = vpack.c.b16 %v2059, %v2058
        %v2231 = vpack.c.b16 %v2061, %v2060
        %v2232 = vpack.c.b16 %v2063, %v2062
        %v2233 = vpack.c.b16 %v2065, %v2064
        %v2234 = vpack.c.b16 %v2067, %v2066
        %v2235 = vpack.c.b16 %v2069, %v2068
        %v2236 = vpack.c.b16 %v2071, %v2070
        %v2237 = vpack.c.b16 %v2073, %v2072
        %v2238 = vpack.c.b16 %v2075, %v2074
        %v2239 = vpack.c.b16 %v2077, %v2076
        %v2240 = vpack.c.b16 %v2079, %v2078
        %v2241 = vpack.c.b16 %v2081, %v2080
        %v2242 = vpack.c.b16 %v2083, %v2082
        %v2243 = vpack.c.b16 %v2085, %v2084
        %v2244 = vpack.c.b16 %v2087, %v2086
        %v2245 = vpack.c.b16 %v2089, %v2088
        %v2246 = vpack.c.b16 %v2091, %v2090
        %v2247 = vpack.c.b16 %v2093, %v2092
        %v2248 = vpack.c.b16 %v2095, %v2094
        %v2249 = vpack.c.b16 %v2097, %v2096
        %v2250 = vpack.c.b16 %v2099, %v2098
        %v2251 = vpack.c.b16 %v2101, %v2100
        %v2252 = vpack.c.b16 %v2103, %v2102
        %v2253 = vpack.c.b16 %v2105, %v2104
        %v2254 = vpack.c.b16 %v2107, %v2106
        %v2255 = vpack.c.b16 %v2109, %v2108
        %v2256 = vpack.c.b16 %v2111, %v2110
        %v2257 = vpack.c.b16 %v2113, %v2112
        %v2258 = vpack.c.b16 %v2115, %v2114
        %v2259 = vpack.c.b16 %v2117, %v2116
        %v2260 = vpack.c.b16 %v2119, %v2118
        %v2261 = vpack.c.b16 %v2121, %v2120
        %v2262 = vpack.c.b16 %v2123, %v2122
        %v2263 = vpack.c.b16 %v2125, %v2124
        %v2264 = vpack.c.b16 %v2127, %v2126
        %v2265 = vpack.c.b16 %v2129, %v2128
        %v2266 = vpack.c.b16 %v2131, %v2130
        %v2267 = vpack.c.b16 %v2133, %v2132
        %v2268 = vpack.c.b16 %v2135, %v2134
        %v2269 = vpack.c.b16 %v2137, %v2136
        %v2270 = vpack.c.b16 %v2139, %v2138
        %v2271 = vpack.c.b16 %v2141, %v2140
        %v2272 = vpack.c.b16 %v2143, %v2142
        %v2273 = vpack.c.b16 %v2145, %v2144
        %2402 = vmatprep.subr.bf16.mxu0 0
        %2403 = vmatpush1.bf16.msra.mxu0 %v2146
        %2404 = vmatprep.subr.bf16.mxu0 0
        %2405 = vmatpush1.bf16.msra.mxu0 %v2147
        %2406 = vmatprep.subr.bf16.mxu0 0
        %2407 = vmatpush1.bf16.msra.mxu0 %v2148
        %2408 = vmatprep.subr.bf16.mxu0 0
        %2409 = vmatpush1.bf16.msra.mxu0 %v2149
        %2410 = vmatprep.subr.bf16.mxu0 0
        %2411 = vmatpush1.bf16.msra.mxu0 %v2150
        %2412 = vmatprep.subr.bf16.mxu0 0
        %2413 = vmatpush1.bf16.msra.mxu0 %v2151
        %2414 = vmatprep.subr.bf16.mxu0 0
        %2415 = vmatpush1.bf16.msra.mxu0 %v2152
        %2416 = vmatprep.subr.bf16.mxu0 0
        %2417 = vmatpush1.bf16.msra.mxu0 %v2153
        %2418 = vmatprep.subr.bf16.mxu0 0
        %2419 = vmatpush1.bf16.msra.mxu0 %v2154
        %2420 = vmatprep.subr.bf16.mxu0 0
        %2421 = vmatpush1.bf16.msra.mxu0 %v2155
        %2422 = vmatprep.subr.bf16.mxu0 0
        %2423 = vmatpush1.bf16.msra.mxu0 %v2156
        %2424 = vmatprep.subr.bf16.mxu0 0
        %2425 = vmatpush1.bf16.msra.mxu0 %v2157
        %2426 = vmatprep.subr.bf16.mxu0 0
        %2427 = vmatpush1.bf16.msra.mxu0 %v2158
        %2428 = vmatprep.subr.bf16.mxu0 0
        %2429 = vmatpush1.bf16.msra.mxu0 %v2159
        %2430 = vmatprep.subr.bf16.mxu0 0
        %2431 = vmatpush1.bf16.msra.mxu0 %v2160
        %2432 = vmatprep.subr.bf16.mxu0 0
        %2433 = vmatpush1.bf16.msra.mxu0 %v2161
        %2434 = vmatprep.mubr.bf16.mxu0 %v1603
        %2435 = vmatmul.mubr.bf16.gmra.mrb[0].mxu0 %v1602
        %v2436 = vpop.f32.mrb[0].mxu0
        %v2437 = vadd.f32 0.0, %v2436
        %v2438 = vpop.f32.mrb[0].mxu0
        %v2439 = vpop.f32.mrb[0].mxu0
        %v2440 = vadd.f32 0.0, %v2439
        %v2441 = vpop.f32.mrb[0].mxu0
        %2442 = vdwg.mxu0
        %2443 = vmatprep.subr.bf16.mxu0 0
        %2444 = vmatpush1.bf16.msra.mxu0 %v2162
        %2445 = vmatprep.subr.bf16.mxu0 0
        %2446 = vmatpush1.bf16.msra.mxu0 %v2163
        %2447 = vmatprep.subr.bf16.mxu0 0
        %2448 = vmatpush1.bf16.msra.mxu0 %v2164
        %2449 = vmatprep.subr.bf16.mxu0 0
        %2450 = vmatpush1.bf16.msra.mxu0 %v2165
        %2451 = vmatprep.subr.bf16.mxu0 0
        %2452 = vmatpush1.bf16.msra.mxu0 %v2166
        %2453 = vmatprep.subr.bf16.mxu0 0
        %2454 = vmatpush1.bf16.msra.mxu0 %v2167
        %2455 = vmatprep.subr.bf16.mxu0 0
        %2456 = vmatpush1.bf16.msra.mxu0 %v2168
        %2457 = vmatprep.subr.bf16.mxu0 0
        %2458 = vmatpush1.bf16.msra.mxu0 %v2169
        %2459 = vmatprep.subr.bf16.mxu0 0
        %2460 = vmatpush1.bf16.msra.mxu0 %v2170
        %2461 = vmatprep.subr.bf16.mxu0 0
        %2462 = vmatpush1.bf16.msra.mxu0 %v2171
        %2463 = vmatprep.subr.bf16.mxu0 0
        %2464 = vmatpush1.bf16.msra.mxu0 %v2172
        %2465 = vmatprep.subr.bf16.mxu0 0
        %2466 = vmatpush1.bf16.msra.mxu0 %v2173
        %2467 = vmatprep.subr.bf16.mxu0 0
        %2468 = vmatpush1.bf16.msra.mxu0 %v2174
        %2469 = vmatprep.subr.bf16.mxu0 0
        %2470 = vmatpush1.bf16.msra.mxu0 %v2175
        %2471 = vmatprep.subr.bf16.mxu0 0
        %2472 = vmatpush1.bf16.msra.mxu0 %v2176
        %2473 = vmatprep.subr.bf16.mxu0 0
        %2474 = vmatpush1.bf16.msra.mxu0 %v2177
        %2475 = vmatprep.mubr.bf16.mxu0 %v1605
        %2476 = vmatmul.mubr.bf16.gmra.mrb[0].mxu0 %v1604
        %v2477 = vpop.f32.mrb[0].mxu0
        %v2478 = vadd.f32 %v2437, %v2477
        %v2479 = vpop.f32.mrb[0].mxu0
        %v2480 = vpop.f32.mrb[0].mxu0
        %v2481 = vadd.f32 %v2440, %v2480
        %v2482 = vpop.f32.mrb[0].mxu0
        %2483 = vdwg.mxu0
        %2484 = vmatprep.subr.bf16.mxu0 0
        %2485 = vmatpush1.bf16.msra.mxu0 %v2178
        %2486 = vmatprep.subr.bf16.mxu0 0
        %2487 = vmatpush1.bf16.msra.mxu0 %v2179
        %2488 = vmatprep.subr.bf16.mxu0 0
        %2489 = vmatpush1.bf16.msra.mxu0 %v2180
        %2490 = vmatprep.subr.bf16.mxu0 0
        %2491 = vmatpush1.bf16.msra.mxu0 %v2181
        %2492 = vmatprep.subr.bf16.mxu0 0
        %2493 = vmatpush1.bf16.msra.mxu0 %v2182
        %2494 = vmatprep.subr.bf16.mxu0 0
        %2495 = vmatpush1.bf16.msra.mxu0 %v2183
        %2496 = vmatprep.subr.bf16.mxu0 0
        %2497 = vmatpush1.bf16.msra.mxu0 %v2184
        %2498 = vmatprep.subr.bf16.mxu0 0
        %2499 = vmatpush1.bf16.msra.mxu0 %v2185
        %2500 = vmatprep.subr.bf16.mxu0 0
        %2501 = vmatpush1.bf16.msra.mxu0 %v2186
        %2502 = vmatprep.subr.bf16.mxu0 0
        %2503 = vmatpush1.bf16.msra.mxu0 %v2187
        %2504 = vmatprep.subr.bf16.mxu0 0
        %2505 = vmatpush1.bf16.msra.mxu0 %v2188
        %2506 = vmatprep.subr.bf16.mxu0 0
        %2507 = vmatpush1.bf16.msra.mxu0 %v2189
        %2508 = vmatprep.subr.bf16.mxu0 0
        %2509 = vmatpush1.bf16.msra.mxu0 %v2190
        %2510 = vmatprep.subr.bf16.mxu0 0
        %2511 = vmatpush1.bf16.msra.mxu0 %v2191
        %2512 = vmatprep.subr.bf16.mxu0 0
        %2513 = vmatpush1.bf16.msra.mxu0 %v2192
        %2514 = vmatprep.subr.bf16.mxu0 0
        %2515 = vmatpush1.bf16.msra.mxu0 %v2193
        %2516 = vmatprep.mubr.bf16.mxu0 %v1607
        %2517 = vmatmul.mubr.bf16.gmra.mrb[0].mxu0 %v1606
        %v2518 = vpop.f32.mrb[0].mxu0
        %v2519 = vadd.f32 %v2478, %v2518
        %v2520 = vpop.f32.mrb[0].mxu0
        %v2521 = vpop.f32.mrb[0].mxu0
        %v2522 = vadd.f32 %v2481, %v2521
        %v2523 = vpop.f32.mrb[0].mxu0
        %2524 = vdwg.mxu0
        %2525 = vmatprep.subr.bf16.mxu0 0
        %2526 = vmatpush1.bf16.msra.mxu0 %v2194
        %2527 = vmatprep.subr.bf16.mxu0 0
        %2528 = vmatpush1.bf16.msra.mxu0 %v2195
        %2529 = vmatprep.subr.bf16.mxu0 0
        %2530 = vmatpush1.bf16.msra.mxu0 %v2196
        %2531 = vmatprep.subr.bf16.mxu0 0
        %2532 = vmatpush1.bf16.msra.mxu0 %v2197
        %2533 = vmatprep.subr.bf16.mxu0 0
        %2534 = vmatpush1.bf16.msra.mxu0 %v2198
        %2535 = vmatprep.subr.bf16.mxu0 0
        %2536 = vmatpush1.bf16.msra.mxu0 %v2199
        %2537 = vmatprep.subr.bf16.mxu0 0
        %2538 = vmatpush1.bf16.msra.mxu0 %v2200
        %2539 = vmatprep.subr.bf16.mxu0 0
        %2540 = vmatpush1.bf16.msra.mxu0 %v2201
        %2541 = vmatprep.subr.bf16.mxu0 0
        %2542 = vmatpush1.bf16.msra.mxu0 %v2202
        %2543 = vmatprep.subr.bf16.mxu0 0
        %2544 = vmatpush1.bf16.msra.mxu0 %v2203
        %2545 = vmatprep.subr.bf16.mxu0 0
        %2546 = vmatpush1.bf16.msra.mxu0 %v2204
        %2547 = vmatprep.subr.bf16.mxu0 0
        %2548 = vmatpush1.bf16.msra.mxu0 %v2205
        %2549 = vmatprep.subr.bf16.mxu0 0
        %2550 = vmatpush1.bf16.msra.mxu0 %v2206
        %2551 = vmatprep.subr.bf16.mxu0 0
        %2552 = vmatpush1.bf16.msra.mxu0 %v2207
        %2553 = vmatprep.subr.bf16.mxu0 0
        %2554 = vmatpush1.bf16.msra.mxu0 %v2208
        %2555 = vmatprep.subr.bf16.mxu0 0
        %2556 = vmatpush1.bf16.msra.mxu0 %v2209
        %2557 = vmatprep.mubr.bf16.mxu0 %v1609
        %2558 = vmatmul.mubr.bf16.gmra.mrb[0].mxu0 %v1608
        %v2559 = vpop.f32.mrb[0].mxu0
        %v2560 = vadd.f32 %v2519, %v2559
        %v2561 = vpop.f32.mrb[0].mxu0
        %v2562 = vpop.f32.mrb[0].mxu0
        %v2563 = vadd.f32 %v2522, %v2562
        %v2564 = vpop.f32.mrb[0].mxu0
        %2565 = vdwg.mxu0
        %2566 = vmatprep.subr.bf16.mxu0 0
        %2567 = vmatpush1.bf16.msra.mxu0 %v2210
        %2568 = vmatprep.subr.bf16.mxu0 0
        %2569 = vmatpush1.bf16.msra.mxu0 %v2211
        %2570 = vmatprep.subr.bf16.mxu0 0
        %2571 = vmatpush1.bf16.msra.mxu0 %v2212
        %2572 = vmatprep.subr.bf16.mxu0 0
        %2573 = vmatpush1.bf16.msra.mxu0 %v2213
        %2574 = vmatprep.subr.bf16.mxu0 0
        %2575 = vmatpush1.bf16.msra.mxu0 %v2214
        %2576 = vmatprep.subr.bf16.mxu0 0
        %2577 = vmatpush1.bf16.msra.mxu0 %v2215
        %2578 = vmatprep.subr.bf16.mxu0 0
        %2579 = vmatpush1.bf16.msra.mxu0 %v2216
        %2580 = vmatprep.subr.bf16.mxu0 0
        %2581 = vmatpush1.bf16.msra.mxu0 %v2217
        %2582 = vmatprep.subr.bf16.mxu0 0
        %2583 = vmatpush1.bf16.msra.mxu0 %v2218
        %2584 = vmatprep.subr.bf16.mxu0 0
        %2585 = vmatpush1.bf16.msra.mxu0 %v2219
        %2586 = vmatprep.subr.bf16.mxu0 0
        %2587 = vmatpush1.bf16.msra.mxu0 %v2220
        %2588 = vmatprep.subr.bf16.mxu0 0
        %2589 = vmatpush1.bf16.msra.mxu0 %v2221
        %2590 = vmatprep.subr.bf16.mxu0 0
        %2591 = vmatpush1.bf16.msra.mxu0 %v2222
        %2592 = vmatprep.subr.bf16.mxu0 0
        %2593 = vmatpush1.bf16.msra.mxu0 %v2223
        %2594 = vmatprep.subr.bf16.mxu0 0
        %2595 = vmatpush1.bf16.msra.mxu0 %v2224
        %2596 = vmatprep.subr.bf16.mxu0 0
        %2597 = vmatpush1.bf16.msra.mxu0 %v2225
        %2598 = vmatprep.mubr.bf16.mxu0 %v1611
        %2599 = vmatmul.mubr.bf16.gmra.mrb[0].mxu0 %v1610
        %v2600 = vpop.f32.mrb[0].mxu0
        %v2601 = vadd.f32 %v2560, %v2600
        %v2602 = vpop.f32.mrb[0].mxu0
        %v2603 = vpop.f32.mrb[0].mxu0
        %v2604 = vadd.f32 %v2563, %v2603
        %v2605 = vpop.f32.mrb[0].mxu0
        %2606 = vdwg.mxu0
        %2607 = vmatprep.subr.bf16.mxu0 0
        %2608 = vmatpush1.bf16.msra.mxu0 %v2226
        %2609 = vmatprep.subr.bf16.mxu0 0
        %2610 = vmatpush1.bf16.msra.mxu0 %v2227
        %2611 = vmatprep.subr.bf16.mxu0 0
        %2612 = vmatpush1.bf16.msra.mxu0 %v2228
        %2613 = vmatprep.subr.bf16.mxu0 0
        %2614 = vmatpush1.bf16.msra.mxu0 %v2229
        %2615 = vmatprep.subr.bf16.mxu0 0
        %2616 = vmatpush1.bf16.msra.mxu0 %v2230
        %2617 = vmatprep.subr.bf16.mxu0 0
        %2618 = vmatpush1.bf16.msra.mxu0 %v2231
        %2619 = vmatprep.subr.bf16.mxu0 0
        %2620 = vmatpush1.bf16.msra.mxu0 %v2232
        %2621 = vmatprep.subr.bf16.mxu0 0
        %2622 = vmatpush1.bf16.msra.mxu0 %v2233
        %2623 = vmatprep.subr.bf16.mxu0 0
        %2624 = vmatpush1.bf16.msra.mxu0 %v2234
        %2625 = vmatprep.subr.bf16.mxu0 0
        %2626 = vmatpush1.bf16.msra.mxu0 %v2235
        %2627 = vmatprep.subr.bf16.mxu0 0
        %2628 = vmatpush1.bf16.msra.mxu0 %v2236
        %2629 = vmatprep.subr.bf16.mxu0 0
        %2630 = vmatpush1.bf16.msra.mxu0 %v2237
        %2631 = vmatprep.subr.bf16.mxu0 0
        %2632 = vmatpush1.bf16.msra.mxu0 %v2238
        %2633 = vmatprep.subr.bf16.mxu0 0
        %2634 = vmatpush1.bf16.msra.mxu0 %v2239
        %2635 = vmatprep.subr.bf16.mxu0 0
        %2636 = vmatpush1.bf16.msra.mxu0 %v2240
        %2637 = vmatprep.subr.bf16.mxu0 0
        %2638 = vmatpush1.bf16.msra.mxu0 %v2241
        %2639 = vmatprep.mubr.bf16.mxu0 %v1613
        %2640 = vmatmul.mubr.bf16.gmra.mrb[0].mxu0 %v1612
        %v2641 = vpop.f32.mrb[0].mxu0
        %v2642 = vadd.f32 %v2601, %v2641
        %v2643 = vpop.f32.mrb[0].mxu0
        %v2644 = vpop.f32.mrb[0].mxu0
        %v2645 = vadd.f32 %v2604, %v2644
        %v2646 = vpop.f32.mrb[0].mxu0
        %2647 = vdwg.mxu0
        %2648 = vmatprep.subr.bf16.mxu0 0
        %2649 = vmatpush1.bf16.msra.mxu0 %v2242
        %2650 = vmatprep.subr.bf16.mxu0 0
        %2651 = vmatpush1.bf16.msra.mxu0 %v2243
        %2652 = vmatprep.subr.bf16.mxu0 0
        %2653 = vmatpush1.bf16.msra.mxu0 %v2244
        %2654 = vmatprep.subr.bf16.mxu0 0
        %2655 = vmatpush1.bf16.msra.mxu0 %v2245
        %2656 = vmatprep.subr.bf16.mxu0 0
        %2657 = vmatpush1.bf16.msra.mxu0 %v2246
        %2658 = vmatprep.subr.bf16.mxu0 0
        %2659 = vmatpush1.bf16.msra.mxu0 %v2247
        %2660 = vmatprep.subr.bf16.mxu0 0
        %2661 = vmatpush1.bf16.msra.mxu0 %v2248
        %2662 = vmatprep.subr.bf16.mxu0 0
        %2663 = vmatpush1.bf16.msra.mxu0 %v2249
        %2664 = vmatprep.subr.bf16.mxu0 0
        %2665 = vmatpush1.bf16.msra.mxu0 %v2250
        %2666 = vmatprep.subr.bf16.mxu0 0
        %2667 = vmatpush1.bf16.msra.mxu0 %v2251
        %2668 = vmatprep.subr.bf16.mxu0 0
        %2669 = vmatpush1.bf16.msra.mxu0 %v2252
        %2670 = vmatprep.subr.bf16.mxu0 0
        %2671 = vmatpush1.bf16.msra.mxu0 %v2253
        %2672 = vmatprep.subr.bf16.mxu0 0
        %2673 = vmatpush1.bf16.msra.mxu0 %v2254
        %2674 = vmatprep.subr.bf16.mxu0 0
        %2675 = vmatpush1.bf16.msra.mxu0 %v2255
        %2676 = vmatprep.subr.bf16.mxu0 0
        %2677 = vmatpush1.bf16.msra.mxu0 %v2256
        %2678 = vmatprep.subr.bf16.mxu0 0
        %2679 = vmatpush1.bf16.msra.mxu0 %v2257
        %2680 = vmatprep.mubr.bf16.mxu0 %v1615
        %2681 = vmatmul.mubr.bf16.gmra.mrb[0].mxu0 %v1614
        %v2682 = vpop.f32.mrb[0].mxu0
        %v2683 = vadd.f32 %v2642, %v2682
        %v2684 = vpop.f32.mrb[0].mxu0
        %v2685 = vpop.f32.mrb[0].mxu0
        %v2686 = vadd.f32 %v2645, %v2685
        %v2687 = vpop.f32.mrb[0].mxu0
        %2688 = vdwg.mxu0
        %2689 = vmatprep.subr.bf16.mxu0 0
        %2690 = vmatpush1.bf16.msra.mxu0 %v2258
        %2691 = vmatprep.subr.bf16.mxu0 0
        %2692 = vmatpush1.bf16.msra.mxu0 %v2259
        %2693 = vmatprep.subr.bf16.mxu0 0
        %2694 = vmatpush1.bf16.msra.mxu0 %v2260
        %2695 = vmatprep.subr.bf16.mxu0 0
        %2696 = vmatpush1.bf16.msra.mxu0 %v2261
        %2697 = vmatprep.subr.bf16.mxu0 0
        %2698 = vmatpush1.bf16.msra.mxu0 %v2262
        %2699 = vmatprep.subr.bf16.mxu0 0
        %2700 = vmatpush1.bf16.msra.mxu0 %v2263
        %2701 = vmatprep.subr.bf16.mxu0 0
        %2702 = vmatpush1.bf16.msra.mxu0 %v2264
        %2703 = vmatprep.subr.bf16.mxu0 0
        %2704 = vmatpush1.bf16.msra.mxu0 %v2265
        %2705 = vmatprep.subr.bf16.mxu0 0
        %2706 = vmatpush1.bf16.msra.mxu0 %v2266
        %2707 = vmatprep.subr.bf16.mxu0 0
        %2708 = vmatpush1.bf16.msra.mxu0 %v2267
        %2709 = vmatprep.subr.bf16.mxu0 0
        %2710 = vmatpush1.bf16.msra.mxu0 %v2268
        %2711 = vmatprep.subr.bf16.mxu0 0
        %2712 = vmatpush1.bf16.msra.mxu0 %v2269
        %2713 = vmatprep.subr.bf16.mxu0 0
        %2714 = vmatpush1.bf16.msra.mxu0 %v2270
        %2715 = vmatprep.subr.bf16.mxu0 0
        %2716 = vmatpush1.bf16.msra.mxu0 %v2271
        %2717 = vmatprep.subr.bf16.mxu0 0
        %2718 = vmatpush1.bf16.msra.mxu0 %v2272
        %2719 = vmatprep.subr.bf16.mxu0 0
        %2720 = vmatpush1.bf16.msra.mxu0 %v2273
        %2721 = vmatprep.mubr.bf16.mxu0 %v1617
        %2722 = vmatmul.mubr.bf16.gmra.mrb[0].mxu0 %v1616
        %v2723 = vpop.f32.mrb[0].mxu0
        %v2724 = vadd.f32 %v2683, %v2723
        %v2725 = vpop.f32.mrb[0].mxu0
        %v2726 = vpop.f32.mrb[0].mxu0
        %v2727 = vadd.f32 %v2686, %v2726
        %v2728 = vpop.f32.mrb[0].mxu0
        %2729 = vdwg.mxu0
        %v2730 = vlaneseq
        %v2731 = vshrl.u32 %v2730, 7
        %v2732 = vadd.s32 %v2731, 8
        %vm2733 = vcmp.lt.s32.totalorder %v2731, 8
        %vm2734 = vcmp.lt.s32.totalorder %v2732, 8
        %v2735 = vsel %vm2733, %v2724, 0.0
        %v2736 = vsel %vm2734, %v2727, 0.0
        %v2737 = vadd.f32 %v2735, %v2736
        %v2738 = vrot.slane %v2737, 4
        %v2739 = vadd.f32 %v2737, %v2738
        %v2740 = vrot.slane %v2739, 2
        %v2741 = vadd.f32 %v2739, %v2740
        %v2742 = vrot.slane %v2741, 1
        %v2743 = vadd.f32 %v2741, %v2742
        %v2744 = vmul.f32 %v2743, 0.125
        %v2745 = vmul.f32 %v2735, %v2735
        %v2746 = vmul.f32 %v2736, %v2736
        %v2747 = vadd.f32 %v2745, %v2746
        %v2748 = vrot.slane %v2747, 4
        %v2749 = vadd.f32 %v2747, %v2748
        %v2750 = vrot.slane %v2749, 2
        %v2751 = vadd.f32 %v2749, %v2750
        %v2752 = vrot.slane %v2751, 1
        %v2753 = vadd.f32 %v2751, %v2752
        %v2754 = vmul.f32 %v2753, 0.125
        %v2755 = vmul.f32 %v2744, %v2744
        %v2756 = vsub.f32 %v2754, %v2755
        %v2757 = vmax.f32 %v2756, 0.0
        %v2758 = vadd.f32 %v2757, 1e-05
        %v2759 = vrsqrt.pop %v2758
        %v2760 = vld [vmem:[%s1277] sm:$0x1]
        %v2761 = vmul.f32 %v2760, %v2759
        %v2762 = vld [vmem:[%s1280] sm:$0x1]
        %v2763 = vmul.f32 %v2744, %v2761
        %v2764 = vsub.f32 %v2762, %v2763
        %v2766 = vlaneseq
        %v2767 = vshrl.u32 %v2766, 7
        %v2768 = vsub.s32 0, %v2767
        %v2769 = vrot.slane %v2761, %v2768
        %v2771 = vmul.f32 %v2724, %v2769
        %v2772 = vmul.f32 %v2727, %v2769
        %v2774 = vlaneseq
        %v2775 = vshrl.u32 %v2774, 7
        %v2776 = vsub.s32 0, %v2775
        %v2777 = vrot.slane %v2764, %v2776
        %v2779 = vadd.f32 %v2771, %v2777
        %v2780 = vadd.f32 %v2772, %v2777
        %vm2781 = vcmp.gt.f32.partialorder %v2779, 0.0
        %vm2782 = vcmp.gt.f32.partialorder %v2780, 0.0
        %v2783 = vmul.f32 %v2779, 0.2
        %v2784 = vmul.f32 %v2780, 0.2
        %v2785 = vsel %vm2781, %v2779, %v2783
        %v2786 = vsel %vm2782, %v2780, %v2784
        %v2787 = vpack.c.bf16 %v2786, %v2785
        %v2789 = vunpack.c.l.b16 %v2787
        %v2790 = vunpack.c.h.b16 %v2787
        %v2791 = vpack.c.b16 %v2789, %v2789
        %v2792 = vpack.c.b16 %v2790, %v2790
        %2795 = vst [vmem:[%s1274] sm:$0xf] %v2791
        %2796 = vst [vmem:[%s1274 + $0x4] sm:$0xf] %v2792
        %s2797 = sand.u32 %s122, 1
        %s2798 = sand.u32 %s122, 1
        %s2799 = smul.addr %s2798, 8
        %s2800 = scalar_lea.vmem [#allocation3], %s2799
        // Predicated region
        $region78: #{discriminator_wgan_forward.6} parent=72 // pred_check
          %p2801 = pneg %p132
        $region79: #{discriminator_wgan_forward.6} parent=72 // pred_check_branch
          %2803 = sbr.rel (%p2801) target = $region81
        $region80: #{discriminator_wgan_forward.6} parent=72 // pred_region
          %s2804 = smul.addr %s15, 4
          %s2805 = scalar_lea.vmem %s4, %s2804
          // Predicated region
          $region82: #{discriminator_wgan_forward.6} parent=80 // pred_check
            _
          $region83: #{discriminator_wgan_forward.6} parent=80 // pred_check_branch
            %2807 = sbr.rel (0) target = $region85
          $region84: #{discriminator_wgan_forward.6} parent=80 // pred_region
            // Predicated region
            $region86: #{discriminator_wgan_forward.6} parent=84 // pred_check
              _
            $region87: #{discriminator_wgan_forward.6} parent=84 // pred_check_branch
              %2809 = sbr.rel target = $region89
            $region88: #{discriminator_wgan_forward.6} parent=84 // pred_region
              // Predicated region
              $region101: #{discriminator_wgan_forward.6} parent=88 // pred_check
                _
              $region102: #{discriminator_wgan_forward.6} parent=88 // pred_check_branch
                %2826 = sbr.rel (0) target = $region104
              $region103: #{discriminator_wgan_forward.6} parent=88 // pred_region
                loop: start=0, step=1, limit=1
                $region105: #{discriminator_wgan_forward.6} parent=103 // loop_pre_header
                  _
                $region106: #{discriminator_wgan_forward.6} parent=103 // loop_header
                  %s2828 = sphi 0, %s2832
                  %p2829 = scmp.ge.s32.totalorder %s2828, 1
                  %s2833 = sphi %s2800, %s2800
                  %s2834 = sphi %s2805, %s2805
                $region107: #{discriminator_wgan_forward.6} parent=103 // loop_header_branch
                  %2831 = sbr.rel (%p2829) target = $region111
                $region108: #{discriminator_wgan_forward.6} parent=103 // loop_body
                  _
                $region109: #{discriminator_wgan_forward.6} parent=103 // loop_footer
                  %s2832 = sadd.s32 1, %s2828
                $region110: #{discriminator_wgan_forward.6} parent=103 // loop_footer_branch
                  %2827 = sbr.rel target = $region106
                $region111: #{discriminator_wgan_forward.6} parent=103 // loop_exit
                  _
                loop: start=0, step=1, limit=1
                $region112: #{discriminator_wgan_forward.6} parent=103 // loop_pre_header
                  _
                $region113: #{discriminator_wgan_forward.6} parent=103 // loop_header
                  %s2837 = sphi 0, %s2841
                  %p2838 = scmp.ge.s32.totalorder %s2837, 1
                  %s2842 = sphi %s2800, %s2800
                  %s2843 = sphi %s2805, %s2805
                $region114: #{discriminator_wgan_forward.6} parent=103 // loop_header_branch
                  %2840 = sbr.rel (%p2838) target = $region118
                $region115: #{discriminator_wgan_forward.6} parent=103 // loop_body
                  %v2844 = vld [vmem:[%s2842] sm:$0xf]
                  %2845 = vst [vmem:[%s2843] sm:$0xf] %v2844
                  %v2846 = vld [vmem:[%s2842 + $0x4] sm:$0xf]
                  %2847 = vst [vmem:[%s2843 + $0x8] sm:$0xf] %v2846
                $region116: #{discriminator_wgan_forward.6} parent=103 // loop_footer
                  %s2841 = sadd.s32 1, %s2837
                $region117: #{discriminator_wgan_forward.6} parent=103 // loop_footer_branch
                  %2836 = sbr.rel target = $region113
                $region118: #{discriminator_wgan_forward.6} parent=103 // loop_exit
                  _
              $region104: #{discriminator_wgan_forward.6} parent=88 // pred_fallthru
                _
            $region89: #{discriminator_wgan_forward.6} parent=84 // pred_fallthru
              _
            // Predicated region
            $region90: #{discriminator_wgan_forward.6} parent=84 // pred_check
              _
            $region91: #{discriminator_wgan_forward.6} parent=84 // pred_check_branch
              %2811 = sbr.rel (0) target = $region93
            $region92: #{discriminator_wgan_forward.6} parent=84 // pred_region
              loop: start=0, step=1, limit=1
              $region94: #{discriminator_wgan_forward.6} parent=92 // loop_pre_header
                _
              $region95: #{discriminator_wgan_forward.6} parent=92 // loop_header
                %s2814 = sphi 0, %s2818
                %p2815 = scmp.ge.s32.totalorder %s2814, 1
                %s2819 = sphi %s2800, %s2800
                %s2820 = sphi %s2805, %s2805
              $region96: #{discriminator_wgan_forward.6} parent=92 // loop_header_branch
                %2817 = sbr.rel (%p2815) target = $region100
              $region97: #{discriminator_wgan_forward.6} parent=92 // loop_body
                %v2821 = vld [vmem:[%s2819] sm:$0xf]
                %2822 = vst [vmem:[%s2820] sm:$0xf] %v2821
                %v2823 = vld [vmem:[%s2819 + $0x4] sm:$0xf]
                %2824 = vst [vmem:[%s2820 + $0x8] sm:$0xf] %v2823
              $region98: #{discriminator_wgan_forward.6} parent=92 // loop_footer
                %s2818 = sadd.s32 1, %s2814
              $region99: #{discriminator_wgan_forward.6} parent=92 // loop_footer_branch
                %2813 = sbr.rel target = $region95
              $region100: #{discriminator_wgan_forward.6} parent=92 // loop_exit
                _
            $region93: #{discriminator_wgan_forward.6} parent=84 // pred_fallthru
              _
          $region85: #{discriminator_wgan_forward.6} parent=80 // pred_fallthru
            _
          %2848 = vnop
        $region81: #{discriminator_wgan_forward.6} parent=72 // pred_fallthru
          _
      $region73: #{discriminator_wgan_forward.6} parent=5 // pred_fallthru
        _
      %p2849 = scmp.le.s32.totalorder 2, %s10
      // Predicated region
      $region119: #{discriminator_wgan_forward.6} parent=5 // pred_check
        %p2850 = pneg %p2849
      $region120: #{discriminator_wgan_forward.6} parent=5 // pred_check_branch
        %2852 = sbr.rel (%p2850) target = $region122
      $region121: #{discriminator_wgan_forward.6} parent=5 // pred_region
        %s2853 = ssub.s32 %s10, 2
        // Predicated region
        $region123: #{discriminator_wgan_forward.6} parent=121 // pred_check
          %p2854 = pneg %p138
        $region124: #{discriminator_wgan_forward.6} parent=121 // pred_check_branch
          %2856 = sbr.rel (%p2854) target = $region126
        $region125: #{discriminator_wgan_forward.6} parent=121 // pred_region
          %s2857 = sand.u32 %s123, 1
          %s2858 = sand.u32 %s123, 1
          %s2859 = smul.addr %s2858, 8
          %s2860 = scalar_lea.vmem [#allocation3], %s2859
        $region126: #{discriminator_wgan_forward.6} parent=121 // pred_fallthru
          _
      $region122: #{discriminator_wgan_forward.6} parent=5 // pred_fallthru
        _
    $region6: #{discriminator_wgan_forward.6} parent=1 // loop_footer
      %s14 = sadd.s32 1, %s10
    $region7: #{discriminator_wgan_forward.6} parent=1 // loop_footer_branch
      %9 = sbr.rel target = $region3
    $region8: #{discriminator_wgan_forward.6} parent=1 // loop_exit
      _

// kernel: discriminator_wgan_forward.7
$region0: #{discriminator_wgan_forward.7}
  #allocation0 [shape = 'u32[]', space=smem, size = 0x4, offset = 0x4, fixed_abs, tag = 'smem constant byte address 0x4 - core index']
  #allocation1 [shape = 'u32[144,128]{1,0:T(1,128)}', space=vmem, size = 0x12000, scoped, tag = 'internal scratch']
  #allocation2 [shape = 'f32[1,1]{1,0:T(1,128)S(1)}', space=vmem, size = 0x200, scoped, tag = 'scoped memory for discriminator_wgan_forward.7']
  %s0 = inlined_call_operand.vmem [shape: bf16[8,1024], index: 0, kind: input, shape index: {}]
  %s1 = inlined_call_operand.vmem [shape: f32[1,1024], index: 1, kind: input, shape index: {}]
  %s2 = inlined_call_operand.<no memory space> [shape: f32[1,1], index: 2, kind: input, shape index: {}]
  %s3 = inlined_call_operand.vmem [shape: f32[8,1], index: 3, kind: output, shape index: {}]
  %s4 = sld [smem:[#allocation0]]
  $region22: #{discriminator_wgan_forward.7} parent=0
    _
  %s6 = ssub.s32 1, %s4
  %s7 = scalar_select 0, %s6, %s4
  %v8 = vstv %s2
  %9 = vst [vmem:[#allocation2] sm:$0x1] %v8
  // Predicated region
  $region2: #{discriminator_wgan_forward.7} parent=0 // pred_check
    _
  $region3: #{discriminator_wgan_forward.7} parent=0 // pred_check_branch
    %11 = sbr.rel (0) target = $region5
  $region4: #{discriminator_wgan_forward.7} parent=0 // pred_region
    _
  $region5: #{discriminator_wgan_forward.7} parent=0 // pred_fallthru
    _
  // Predicated region
  $region6: #{discriminator_wgan_forward.7} parent=0 // pred_check
    _
  $region7: #{discriminator_wgan_forward.7} parent=0 // pred_check_branch
    %13 = sbr.rel (0) target = $region9
  $region8: #{discriminator_wgan_forward.7} parent=0 // pred_region
    _
  $region9: #{discriminator_wgan_forward.7} parent=0 // pred_fallthru
    _
  // Predicated region
  $region10: #{discriminator_wgan_forward.7} parent=0 // pred_check
    _
  $region11: #{discriminator_wgan_forward.7} parent=0 // pred_check_branch
    %15 = sbr.rel (0) target = $region13
  $region12: #{discriminator_wgan_forward.7} parent=0 // pred_region
    _
  $region13: #{discriminator_wgan_forward.7} parent=0 // pred_fallthru
    _
  %v16 = vld [vmem:[%s0] sm:$0xff]
  %v17 = vld [vmem:[%s0 + $0x8] sm:$0xff]
  %v18 = vld [vmem:[%s0 + $0x10] sm:$0xff]
  %v19 = vld [vmem:[%s0 + $0x18] sm:$0xff]
  %v20 = vunpack.c.l.bf16 %v16
  %v21 = vunpack.c.h.bf16 %v16
  %v22 = vunpack.c.l.bf16 %v17
  %v23 = vunpack.c.h.bf16 %v17
  %v24 = vunpack.c.l.bf16 %v18
  %v25 = vunpack.c.h.bf16 %v18
  %v26 = vunpack.c.l.bf16 %v19
  %v27 = vunpack.c.h.bf16 %v19
  %v28 = vld [vmem:[%s1] sm:$0xff]
  %v30 = vlaneseq
  %v31 = vshrl.u32 %v30, 7
  %v32 = vsub.s32 0, %v31
  %v33 = vrot.slane %v28, %v32
  %v34 = vlaneseq
  %v35 = vshrl.u32 %v34, 7
  %v36 = vsub.s32 1, %v35
  %v37 = vrot.slane %v28, %v36
  %v38 = vlaneseq
  %v39 = vshrl.u32 %v38, 7
  %v40 = vsub.s32 2, %v39
  %v41 = vrot.slane %v28, %v40
  %v42 = vlaneseq
  %v43 = vshrl.u32 %v42, 7
  %v44 = vsub.s32 3, %v43
  %v45 = vrot.slane %v28, %v44
  %v46 = vlaneseq
  %v47 = vshrl.u32 %v46, 7
  %v48 = vsub.s32 4, %v47
  %v49 = vrot.slane %v28, %v48
  %v50 = vlaneseq
  %v51 = vshrl.u32 %v50, 7
  %v52 = vsub.s32 5, %v51
  %v53 = vrot.slane %v28, %v52
  %v54 = vlaneseq
  %v55 = vshrl.u32 %v54, 7
  %v56 = vsub.s32 6, %v55
  %v57 = vrot.slane %v28, %v56
  %v58 = vlaneseq
  %v59 = vshrl.u32 %v58, 7
  %v60 = vsub.s32 7, %v59
  %v61 = vrot.slane %v28, %v60
  %v70 = vmul.f32 %v20, %v33
  %v71 = vmul.f32 %v21, %v37
  %v72 = vmul.f32 %v22, %v41
  %v73 = vmul.f32 %v23, %v45
  %v74 = vmul.f32 %v24, %v49
  %v75 = vmul.f32 %v25, %v53
  %v76 = vmul.f32 %v26, %v57
  %v77 = vmul.f32 %v27, %v61
  %v78 = vadd.f32 %v70, %v71
  %v79 = vadd.f32 %v78, %v72
  %v80 = vadd.f32 %v79, %v73
  %v81 = vadd.f32 %v80, %v74
  %v82 = vadd.f32 %v81, %v75
  %v83 = vadd.f32 %v82, %v76
  %v84 = vadd.f32 %v83, %v77
  %85 = vadd.xlane.f32.xlu0 %v84
  %v86 = vpop.xlane.xlu0 %85
  %v87 = vld [vmem:[#allocation2] sm:$0x1]
  %v89 = vlaneseq
  %v90 = vshrl.u32 %v89, 7
  %v91 = vsub.s32 0, %v90
  %v92 = vrot.slane %v87, %v91
  %v94 = vadd.f32 %v86, %v92
  %vm95 = vcmask 7168
  %96 = vst.msk [vmem:[%s3] sm:$0xff] %vm95, %v94
  // Predicated region
  $region14: #{discriminator_wgan_forward.7} parent=0 // pred_check
    _
  $region15: #{discriminator_wgan_forward.7} parent=0 // pred_check_branch
    %98 = sbr.rel (0) target = $region17
  $region16: #{discriminator_wgan_forward.7} parent=0 // pred_region
    _
  $region17: #{discriminator_wgan_forward.7} parent=0 // pred_fallthru
    _
  // Predicated region
  $region18: #{discriminator_wgan_forward.7} parent=0 // pred_check
    _
  $region19: #{discriminator_wgan_forward.7} parent=0 // pred_check_branch
    %100 = sbr.rel (0) target = $region21
  $region20: #{discriminator_wgan_forward.7} parent=0 // pred_region
    _
  $region21: #{discriminator_wgan_forward.7} parent=0 // pred_fallthru
    _

</llo_original>
